<compile_context>
chip_gen: v7x
topology: tpu7x:2x2x1
jax: 0.10.0
libtpu: 0.0.40
codegen_flags: <defaults>
</compile_context>

<pallas_src>
import functools

import jax
import jax.numpy as jnp
from jax.experimental import pallas as pl
from jax.experimental.pallas import tpu as pltpu

# Module-consistent sizes.
STATE_DIM = 32          # state_dim
HIDDEN = 32             # hidden_size
LAYERS = 2              # recurrent_layers (kernel is specialized to the 2-layer fusion)
SEQ = 8                 # sequence length
ACTIONS = 40            # action_num
ACT_PAD = 128           # lane-dense padded action width (sliced back to 40 outside)
H1 = 256                # HIDDEN_SIZE_1
H2 = 256                # HIDDEN_SIZE_2

# Fused gate layout: 4 groups of 128 lanes; each group holds [layer0 | layer1] (32+32).
#   R  : reset-gate pre-activation contributions
#   Z  : update-gate pre-activation contributions
#   NH : hidden-side candidate contribution (the part scaled by r)
#   NI : input-side candidate contribution (NOT scaled by r)
FUSED = 512
GRP_R, GRP_Z, GRP_NH, GRP_NI = 0, 128, 256, 384
NEG_BIG = -1e30         # bias for padded action lanes -> exp underflows to exactly 0


def _elu(v):
    # ELU(alpha=1): x for x > 0 else exp(x) - 1 (clamp so exp never sees large +x).
    return jnp.where(v > 0, v, jnp.exp(jnp.minimum(v, 0.0)) - 1.0)


def recurrent_actor_kernel(
    x_ref, h_ref,
    wi0_ref, bfus_ref, wrec_ref,
    w1_ref, b1_ref, w2_ref, b2_ref, wa_ref, ba_ref,
    probs_ref, hout_ref,
    seq_ref,
):
    """Skewed fused 2-layer GRU recurrence + MLP head + softmax for TILE_B sequences."""
    S, TB, D = x_ref.shape          # seq-major block: (S, TILE_B, D)
    H = HIDDEN

    # Layer-0 input projections for every (timestep, batch row) in ONE matmul.
    # bfus already holds ALL GRU biases (both layers, input+hidden sides).
    x2d = x_ref[...].reshape(S * TB, D).astype(jnp.bfloat16)
    gi0 = (jnp.dot(x2d, wi0_ref[...], preferred_element_type=jnp.float32)
           + bfus_ref[...]).reshape(S, TB, FUSED)                 # (S, TB, FUSED)

    # bf16 fused recurrent weight, loaded/converted once (hoisted out of the loop).
    wrec = wrec_ref[...]                                          # (2H, FUSED) bf16

    # Fused hidden state [h0 | h1], carried in vregs for the whole recurrence.
    hcat = h_ref[...]                                             # (TB, 2H) f32
    lane = jax.lax.broadcasted_iota(jnp.int32, (TB, 2 * H), 1)
    layer0_lanes = lane < H

    # Skewed, fully-unrolled recurrence: iteration i = layer-0 step i + layer-1 step i-1.
    for i in range(S + 1):
        # At i == S the layer-0 lanes are masked out below; gi0's layer-1 lanes are
        # timestep-independent (wi0 is zero there -> biases only), so clamping t is safe.
        t = min(i, S - 1)
        g = (jnp.dot(hcat.astype(jnp.bfloat16), wrec,
                     preferred_element_type=jnp.float32) + gi0[t])    # (TB, FUSED)
        # 128-aligned, lane-offset-0 gate extractions (no rotates on the serial chain).
        r = jax.nn.sigmoid(g[:, GRP_R:GRP_R + 2 * H])
        z = jax.nn.sigmoid(g[:, GRP_Z:GRP_Z + 2 * H])
        n = jnp.tanh(g[:, GRP_NI:GRP_NI + 2 * H] + r * g[:, GRP_NH:GRP_NH + 2 * H])
        h_new = n + z * (hcat - n)                                    # (1-z)*n + z*h
        if i == 0:
            hcat = jnp.where(layer0_lanes, h_new, hcat)   # layer-1 has not started yet
        elif i == S:
            hcat = jnp.where(layer0_lanes, hcat, h_new)   # layer-0 already finished
        else:
            hcat = h_new
        if i >= 1:
            seq_ref[i - 1] = hcat     # full (TB, 2H) tile store; lanes H:2H = layer-1 out

    # Final fused hidden state in a single store (reshaped to (LAYERS, H) outside).
    hout_ref[...] = hcat

    # MLP head: fc1 -> ELU -> fc2 -> ELU -> action_layer -> softmax(dim=1).
    # fc1's weight is zero over the layer-0 half of the fused rows, so no extraction.
    rnn = seq_ref[...].reshape(S * TB, 2 * H).astype(jnp.bfloat16)
    h1 = _elu(jnp.dot(rnn, w1_ref[...], preferred_element_type=jnp.float32)
              + b1_ref[...])
    h2 = _elu(jnp.dot(h1.astype(jnp.bfloat16), w2_ref[...],
                      preferred_element_type=jnp.float32) + b2_ref[...])
    logits = (jnp.dot(h2.astype(jnp.bfloat16), wa_ref[...],
                      preferred_element_type=jnp.float32) + ba_ref[...])  # (S*TB, 128)
    m = jnp.max(logits, axis=-1, keepdims=True)      # pad lanes are -1e30, never the max
    e = jnp.exp(logits - m)                          # pad lanes underflow to exactly 0
    s = jnp.sum(e, axis=-1, keepdims=True)
    probs_ref[...] = (e / s).reshape(S, TB, ACT_PAD)  # exact div (epilogue, off chain)


def _wspec(shape):
    # Whole-array weight block, identical for every grid step.
    return pl.BlockSpec(shape, lambda b: (0, 0))


@functools.partial(jax.jit, static_argnames=("tile_b",))
def recurrent_actor_forward(state, hidden_cell, prep, terminal=None, *, tile_b=8):
    """state: (B, S, D) independent sequences; hidden_cell: (B, LAYERS, H).

    tile_b: sequences per grid step.  For real RL batches use 128 (v5e) or up to 256
    (v6e/v7x), a multiple of 8, with B/tile_b >= 2 so both v7x TensorCores get work.
    """
    if terminal is not None:
        # Mirrors the module's `hidden_cell * (1 - terminal)` reset.
        hidden_cell = hidden_cell * (1.0 - terminal)
    wi0, bfus, wrec, w1p, b1r, w2t, b2r, wat, bar = prep
    B, S, D = state.shape
    assert B % tile_b == 0 and (tile_b == B or tile_b % 8 == 0)

    state_sm = jnp.transpose(state, (1, 0, 2))              # (S, B, D) seq-major
    h2d = hidden_cell.reshape(B, LAYERS * HIDDEN)           # fused [h0 | h1] lanes

    probs_pad, h2d_out = pl.pallas_call(
        recurrent_actor_kernel,
        grid=(B // tile_b,),
        out_shape=(
            jax.ShapeDtypeStruct((S, B, ACT_PAD), jnp.float32),
            jax.ShapeDtypeStruct((B, LAYERS * HIDDEN), jnp.float32),
        ),
        in_specs=[
            pl.BlockSpec((S, tile_b, D), lambda b: (0, b, 0)),
            pl.BlockSpec((tile_b, LAYERS * HIDDEN), lambda b: (b, 0)),
            _wspec((STATE_DIM, FUSED)),          # wi0  (bf16)
            _wspec((1, FUSED)),                  # bfus (f32)
            _wspec((2 * HIDDEN, FUSED)),         # wrec (bf16)
            _wspec((2 * HIDDEN, H1)),            # w1p  (bf16)
            _wspec((1, H1)),                     # b1
            _wspec((H1, H2)),                    # w2.T (bf16)
            _wspec((1, H2)),                     # b2
            _wspec((H2, ACT_PAD)),               # wa.T padded (bf16)
            _wspec((1, ACT_PAD)),                # ba padded (-1e30 in pad lanes)
        ],
        out_specs=(
            pl.BlockSpec((S, tile_b, ACT_PAD), lambda b: (0, b, 0)),
            pl.BlockSpec((tile_b, LAYERS * HIDDEN), lambda b: (b, 0)),
        ),
        scratch_shapes=[pltpu.VMEM((S, tile_b, 2 * HIDDEN), jnp.float32)],
        compiler_params=pltpu.CompilerParams(dimension_semantics=("parallel",)),
    )(state_sm, h2d, wi0, bfus, wrec, w1p, b1r, w2t, b2r, wat, bar)

    probs = jnp.transpose(probs_pad[:, :, :ACTIONS], (1, 0, 2))   # (B, S, ACTIONS)
    h_out = h2d_out.reshape(B, LAYERS, HIDDEN)
    return probs, h_out


def prepare_params(params):
    """One-time host-side parameter fusion into the kernel's fused layout (not per-call)."""
    (wih0, whh0, bih0, bhh0, wih1, whh1, bih1, bhh1,
     w1, b1, w2, b2, wa, ba) = [jnp.asarray(p, jnp.float32) for p in params]
    H = HIDDEN

    def gate(p, g):                        # torch GRU packs gates [r | z | n] along dim 0
        return p[g * H:(g + 1) * H]

    # Layer-0 input projection scattered into the fused 512-wide gate layout.
    wi0 = jnp.zeros((STATE_DIM, FUSED), jnp.float32)
    wi0 = wi0.at[:, GRP_R:GRP_R + H].set(gate(wih0, 0).T)
    wi0 = wi0.at[:, GRP_Z:GRP_Z + H].set(gate(wih0, 1).T)
    wi0 = wi0.at[:, GRP_NI:GRP_NI + H].set(gate(wih0, 2).T)

    # INVARIANT required by the kernel's i == S clamp (t = min(i, S-1)): the layer-1
    # lanes of wi0 must stay all-zero so gi0's layer-1 lanes are timestep independent.
    layer1_cols = jnp.concatenate(
        [wi0[:, g + H:g + 2 * H] for g in (GRP_R, GRP_Z, GRP_NH, GRP_NI)], axis=1)
    assert float(jnp.max(jnp.abs(layer1_cols))) == 0.0

    # All GRU biases (both layers, input + hidden sides), added once via gi0.
    bfus = jnp.zeros((1, FUSED), jnp.float32)
    bfus = bfus.at[0, GRP_R:GRP_R + H].set(gate(bih0, 0) + gate(bhh0, 0))
    bfus = bfus.at[0, GRP_R + H:GRP_R + 2 * H].set(gate(bih1, 0) + gate(bhh1, 0))
    bfus = bfus.at[0, GRP_Z:GRP_Z + H].set(gate(bih0, 1) + gate(bhh0, 1))
    bfus = bfus.at[0, GRP_Z + H:GRP_Z + 2 * H].set(gate(bih1, 1) + gate(bhh1, 1))
    bfus = bfus.at[0, GRP_NH:GRP_NH + H].set(gate(bhh0, 2))
    bfus = bfus.at[0, GRP_NH + H:GRP_NH + 2 * H].set(gate(bhh1, 2))
    bfus = bfus.at[0, GRP_NI:GRP_NI + H].set(gate(bih0, 2))
    bfus = bfus.at[0, GRP_NI + H:GRP_NI + 2 * H].set(gate(bih1, 2))

    # Fused recurrent weight: rows 0:H multiply h0 (also layer-1's input in the skewed
    # schedule), rows H:2H multiply h1.
    wrec = jnp.zeros((2 * H, FUSED), jnp.float32)
    wrec = wrec.at[0:H, GRP_R:GRP_R + H].set(gate(whh0, 0).T)            # W_hr0
    wrec = wrec.at[0:H, GRP_R + H:GRP_R + 2 * H].set(gate(wih1, 0).T)    # W_ir1
    wrec = wrec.at[H:, GRP_R + H:GRP_R + 2 * H].set(gate(whh1, 0).T)     # W_hr1
    wrec = wrec.at[0:H, GRP_Z:GRP_Z + H].set(gate(whh0, 1).T)            # W_hz0
    wrec = wrec.at[0:H, GRP_Z + H:GRP_Z + 2 * H].set(gate(wih1, 1).T)    # W_iz1
    wrec = wrec.at[H:, GRP_Z + H:GRP_Z + 2 * H].set(gate(whh1, 1).T)     # W_hz1
    wrec = wrec.at[0:H, GRP_NH:GRP_NH + H].set(gate(whh0, 2).T)          # W_hn0
    wrec = wrec.at[H:, GRP_NH + H:GRP_NH + 2 * H].set(gate(whh1, 2).T)   # W_hn1
    wrec = wrec.at[0:H, GRP_NI + H:GRP_NI + 2 * H].set(gate(wih1, 2).T)  # W_in1

    # MLP head, feature-last.  fc1 zero-padded over the layer-0 half of the fused rows.
    w1p = jnp.zeros((2 * H, H1), jnp.float32).at[H:, :].set(w1.T)

    # Action head padded to 128 lanes: zero weight columns, -1e30 bias in pad lanes.
    wa_pad = jnp.zeros((H2, ACT_PAD), jnp.float32).at[:, :ACTIONS].set(wa.T)
    ba_pad = jnp.full((1, ACT_PAD), NEG_BIG, jnp.float32).at[0, :ACTIONS].set(ba)

    bf = jnp.bfloat16   # MXU truncates to bf16 at default precision anyway
    return (wi0.astype(bf), bfus, wrec.astype(bf),
            w1p.astype(bf), b1.reshape(1, H1), w2.T.astype(bf), b2.reshape(1, H2),
            wa_pad.astype(bf), ba_pad)


def init_params(key):
    """PyTorch-style uniform(-1/sqrt(fan), 1/sqrt(fan)) init (raw nn.GRU / nn.Linear layout)."""
    ks = jax.random.split(key, 16)

    def u(k, shape, fan):
        b = 1.0 / (fan ** 0.5)
        return jax.random.uniform(k, shape, jnp.float32, -b, b)

    wih0 = u(ks[0], (3 * HIDDEN, STATE_DIM), HIDDEN)
    whh0 = u(ks[1], (3 * HIDDEN, HIDDEN), HIDDEN)
    bih0 = u(ks[2], (3 * HIDDEN,), HIDDEN)
    bhh0 = u(ks[3], (3 * HIDDEN,), HIDDEN)
    wih1 = u(ks[4], (3 * HIDDEN, HIDDEN), HIDDEN)
    whh1 = u(ks[5], (3 * HIDDEN, HIDDEN), HIDDEN)
    bih1 = u(ks[6], (3 * HIDDEN,), HIDDEN)
    bhh1 = u(ks[7], (3 * HIDDEN,), HIDDEN)
    w1 = u(ks[8], (H1, HIDDEN), HIDDEN)
    b1 = u(ks[9], (H1,), HIDDEN)
    w2 = u(ks[10], (H2, H1), H1)
    b2 = u(ks[11], (H2,), H1)
    wa = u(ks[12], (ACTIONS, H2), H2)
    ba = u(ks[13], (ACTIONS,), H2)
    return (wih0, whh0, bih0, bhh0, wih1, whh1, bih1, bhh1,
            w1, b1, w2, b2, wa, ba)


def ref_forward(state, hidden_cell, params):
    """Pure-JAX reference matching torch.nn.GRU (unbatched) + MLP head semantics."""
    (wih0, whh0, bih0, bhh0, wih1, whh1, bih1, bhh1,
     w1, b1, w2, b2, wa, ba) = params
    H = HIDDEN

    def gru_layer(inp, h_init, wih, whh, bih, bhh):
        def step(h, x_t):
            gi = wih @ x_t + bih
            gh = whh @ h + bhh
            r = jax.nn.sigmoid(gi[:H] + gh[:H])
            z = jax.nn.sigmoid(gi[H:2 * H] + gh[H:2 * H])
            n = jnp.tanh(gi[2 * H:] + r * gh[2 * H:])
            h_new = (1.0 - z) * n + z * h
            return h_new, h_new
        h_last, outs = jax.lax.scan(step, h_init, inp)
        return outs, h_last

    out0, hl0 = gru_layer(state, hidden_cell[0], wih0, whh0, bih0, bhh0)
    out1, hl1 = gru_layer(out0, hidden_cell[1], wih1, whh1, bih1, bhh1)
    h1 = jax.nn.elu(out1 @ w1.T + b1)
    h2 = jax.nn.elu(h1 @ w2.T + b2)
    logits = h2 @ wa.T + ba
    probs = jax.nn.softmax(logits, axis=1)
    return probs, jnp.stack([hl0, hl1])


if __name__ == "__main__":
    key = jax.random.PRNGKey(0)
    k_params, k_state, k_state2 = jax.random.split(key, 3)

    params = init_params(k_params)
    prep = prepare_params(params)        # one-time layout plumbing, outside the jitted forward

    B = 16                               # independent environments
    TILE_B = 8                           # -> grid=(2,), both blocks "parallel" (v7x: 2 TCs)
    state = jax.random.normal(k_state, (B, SEQ, STATE_DIM), jnp.float32)
    hidden_cell = jnp.zeros((B, LAYERS, HIDDEN), jnp.float32)   # get_init_state: zeros

    probs, h_out = recurrent_actor_forward(state, hidden_cell, prep, tile_b=TILE_B)
    jax.block_until_ready((probs, h_out))

    # Second step with a nonzero carried hidden state (exercises the skew boundary masks).
    state2 = jax.random.normal(k_state2, (B, SEQ, STATE_DIM), jnp.float32)
    probs2, h_out2 = recurrent_actor_forward(state2, h_out, prep, tile_b=TILE_B)
    jax.block_until_ready((probs2, h_out2))

    # Pure-JAX reference at 'highest' matmul precision (kernel runs bf16-truncated matmuls).
    ref_batched = jax.vmap(ref_forward, in_axes=(0, 0, None))
    with jax.default_matmul_precision("highest"):
        ref_probs, ref_h = ref_batched(state, hidden_cell, params)
        ref_probs2, ref_h2 = ref_batched(state2, h_out, params)

    assert probs.shape == (B, SEQ, ACTIONS) and h_out.shape == (B, LAYERS, HIDDEN)
    assert bool(jnp.all(jnp.isfinite(probs))) and bool(jnp.all(jnp.isfinite(h_out)))
    assert jnp.allclose(probs, ref_probs, atol=5e-3, rtol=5e-2), \
        float(jnp.max(jnp.abs(probs - ref_probs)))
    assert jnp.allclose(h_out, ref_h, atol=3e-2, rtol=3e-2), \
        float(jnp.max(jnp.abs(h_out - ref_h)))
    assert jnp.allclose(probs2, ref_probs2, atol=5e-3, rtol=5e-2), \
        float(jnp.max(jnp.abs(probs2 - ref_probs2)))
    assert jnp.allclose(h_out2, ref_h2, atol=3e-2, rtol=3e-2), \
        float(jnp.max(jnp.abs(h_out2 - ref_h2)))
    assert jnp.allclose(jnp.sum(probs, axis=-1), 1.0, atol=1e-3)
    assert jnp.allclose(jnp.sum(probs2, axis=-1), 1.0, atol=1e-3)
    print("KERNEL_OK")
</pallas_src>

<mosaic_0001>
module attributes {stable_mosaic.version = 11 : i64} {
  func.func @recurrent_actor_kernel(%arg0: i32, %arg1: memref<8x8x32xf32, #tpu.memory_space<vmem>>, %arg2: memref<8x64xf32, #tpu.memory_space<vmem>>, %arg3: memref<32x512xbf16, #tpu.memory_space<vmem>>, %arg4: memref<1x512xf32, #tpu.memory_space<vmem>>, %arg5: memref<64x512xbf16, #tpu.memory_space<vmem>>, %arg6: memref<64x256xbf16, #tpu.memory_space<vmem>>, %arg7: memref<1x256xf32, #tpu.memory_space<vmem>>, %arg8: memref<256x256xbf16, #tpu.memory_space<vmem>>, %arg9: memref<1x256xf32, #tpu.memory_space<vmem>>, %arg10: memref<256x128xbf16, #tpu.memory_space<vmem>>, %arg11: memref<1x128xf32, #tpu.memory_space<vmem>>, %arg12: memref<8x8x128xf32, #tpu.memory_space<vmem>>, %arg13: memref<8x64xf32, #tpu.memory_space<vmem>>, %arg14: memref<8x8x64xf32, #tpu.memory_space<vmem>>) attributes {dimension_semantics = [#tpu.dimension_semantics<parallel>], iteration_bounds = array<i64: 2>, scalar_prefetch = 0 : i64, scratch_operands = 1 : i64, tpu.core_type = #tpu.core_type<tc>, window_params = [{transform_indices = @transform_0, window_bounds = array<i64: 8, 8, 32>}, {transform_indices = @transform_1, window_bounds = array<i64: 8, 64>}, {pipeline_mode = #tpu.pipeline_mode<synchronous>, transform_indices = @transform_2, window_bounds = array<i64: 32, 512>}, {pipeline_mode = #tpu.pipeline_mode<synchronous>, transform_indices = @transform_3, window_bounds = array<i64: 1, 512>}, {pipeline_mode = #tpu.pipeline_mode<synchronous>, transform_indices = @transform_4, window_bounds = array<i64: 64, 512>}, {pipeline_mode = #tpu.pipeline_mode<synchronous>, transform_indices = @transform_5, window_bounds = array<i64: 64, 256>}, {pipeline_mode = #tpu.pipeline_mode<synchronous>, transform_indices = @transform_6, window_bounds = array<i64: 1, 256>}, {pipeline_mode = #tpu.pipeline_mode<synchronous>, transform_indices = @transform_7, window_bounds = array<i64: 256, 256>}, {pipeline_mode = #tpu.pipeline_mode<synchronous>, transform_indices = @transform_8, window_bounds = array<i64: 1, 256>}, {pipeline_mode = #tpu.pipeline_mode<synchronous>, transform_indices = @transform_9, window_bounds = array<i64: 256, 128>}, {pipeline_mode = #tpu.pipeline_mode<synchronous>, transform_indices = @transform_10, window_bounds = array<i64: 1, 128>}, {transform_indices = @transform_11, window_bounds = array<i64: 8, 8, 128>}, {transform_indices = @transform_12, window_bounds = array<i64: 8, 64>}]} {
    %c0 = arith.constant 0 : index
    %c0_0 = arith.constant 0 : index
    %c0_1 = arith.constant 0 : index
    %0 = vector.load %arg1[%c0, %c0_0, %c0_1] : memref<8x8x32xf32, #tpu.memory_space<vmem>>, vector<8x8x32xf32>
    %1 = vector.shape_cast %0 : vector<8x8x32xf32> to vector<64x32xf32>
    %2 = arith.truncf %1 : vector<64x32xf32> to vector<64x32xbf16>
    %c0_2 = arith.constant 0 : index
    %c0_3 = arith.constant 0 : index
    %3 = vector.load %arg3[%c0_2, %c0_3] : memref<32x512xbf16, #tpu.memory_space<vmem>>, vector<32x512xbf16>
    %cst = arith.constant dense<0.000000e+00> : vector<64x512xf32>
    %4 = tpu.matmul %2, %3, %cst {dimension_numbers = #tpu.dot_dimension_numbers<[1], [0], [0], [1], [0, 0, 1, 1], [], []>} : vector<64x32xbf16>, vector<32x512xbf16>, vector<64x512xf32> -> vector<64x512xf32>
    %c0_4 = arith.constant 0 : index
    %c0_5 = arith.constant 0 : index
    %5 = vector.load %arg4[%c0_4, %c0_5] : memref<1x512xf32, #tpu.memory_space<vmem>>, vector<1x512xf32>
    %6 = vector.broadcast %5 : vector<1x512xf32> to vector<64x512xf32>
    %7 = arith.addf %4, %6 : vector<64x512xf32>
    %8 = vector.shape_cast %7 : vector<64x512xf32> to vector<8x8x512xf32>
    %c0_6 = arith.constant 0 : index
    %c0_7 = arith.constant 0 : index
    %9 = vector.load %arg5[%c0_6, %c0_7] : memref<64x512xbf16, #tpu.memory_space<vmem>>, vector<64x512xbf16>
    %c0_8 = arith.constant 0 : index
    %c0_9 = arith.constant 0 : index
    %10 = vector.load %arg2[%c0_8, %c0_9] : memref<8x64xf32, #tpu.memory_space<vmem>>, vector<8x64xf32>
    %11 = tpu.iota {dimensions = array<i32: 1>} : vector<8x64xi32>
    %c32_i32 = arith.constant 32 : i32
    %12 = vector.broadcast %c32_i32 : i32 to vector<8x64xi32>
    %13 = arith.cmpi slt, %11, %12 : vector<8x64xi32>
    %14 = arith.truncf %10 : vector<8x64xf32> to vector<8x64xbf16>
    %cst_10 = arith.constant dense<0.000000e+00> : vector<8x512xf32>
    %15 = tpu.matmul %14, %9, %cst_10 {dimension_numbers = #tpu.dot_dimension_numbers<[1], [0], [0], [1], [0, 0, 1, 1], [], []>} : vector<8x64xbf16>, vector<64x512xbf16>, vector<8x512xf32> -> vector<8x512xf32>
    %16 = vector.extract_strided_slice %8 {offsets = [0, 0, 0], sizes = [1, 8, 512], strides = [1, 1, 1]} : vector<8x8x512xf32> to vector<1x8x512xf32>
    %17 = vector.shape_cast %16 : vector<1x8x512xf32> to vector<8x512xf32>
    %18 = arith.addf %15, %17 : vector<8x512xf32>
    %19 = vector.extract_strided_slice %18 {offsets = [0, 0], sizes = [8, 64], strides = [1, 1]} : vector<8x512xf32> to vector<8x64xf32>
    %20 = arith.negf %19 : vector<8x64xf32>
    %21 = math.exp %20 : vector<8x64xf32>
    %cst_11 = arith.constant 1.000000e+00 : f32
    %22 = vector.broadcast %cst_11 : f32 to vector<8x64xf32>
    %23 = arith.addf %22, %21 : vector<8x64xf32>
    %24 = arith.divf %22, %23 : vector<8x64xf32>
    %25 = vector.extract_strided_slice %18 {offsets = [0, 128], sizes = [8, 64], strides = [1, 1]} : vector<8x512xf32> to vector<8x64xf32>
    %26 = arith.negf %25 : vector<8x64xf32>
    %27 = math.exp %26 : vector<8x64xf32>
    %cst_12 = arith.constant 1.000000e+00 : f32
    %28 = vector.broadcast %cst_12 : f32 to vector<8x64xf32>
    %29 = arith.addf %28, %27 : vector<8x64xf32>
    %30 = arith.divf %28, %29 : vector<8x64xf32>
    %31 = vector.extract_strided_slice %18 {offsets = [0, 384], sizes = [8, 64], strides = [1, 1]} : vector<8x512xf32> to vector<8x64xf32>
    %32 = vector.extract_strided_slice %18 {offsets = [0, 256], sizes = [8, 64], strides = [1, 1]} : vector<8x512xf32> to vector<8x64xf32>
    %33 = arith.mulf %24, %32 : vector<8x64xf32>
    %34 = arith.addf %31, %33 : vector<8x64xf32>
    %35 = math.tanh %34 : vector<8x64xf32>
    %36 = arith.subf %10, %35 : vector<8x64xf32>
    %37 = arith.mulf %30, %36 : vector<8x64xf32>
    %38 = arith.addf %35, %37 : vector<8x64xf32>
    %39 = arith.select %13, %38, %10 : vector<8x64xi1>, vector<8x64xf32>
    %40 = arith.truncf %39 : vector<8x64xf32> to vector<8x64xbf16>
    %cst_13 = arith.constant dense<0.000000e+00> : vector<8x512xf32>
    %41 = tpu.matmul %40, %9, %cst_13 {dimension_numbers = #tpu.dot_dimension_numbers<[1], [0], [0], [1], [0, 0, 1, 1], [], []>} : vector<8x64xbf16>, vector<64x512xbf16>, vector<8x512xf32> -> vector<8x512xf32>
    %42 = vector.extract_strided_slice %8 {offsets = [1, 0, 0], sizes = [1, 8, 512], strides = [1, 1, 1]} : vector<8x8x512xf32> to vector<1x8x512xf32>
    %43 = vector.shape_cast %42 : vector<1x8x512xf32> to vector<8x512xf32>
    %44 = arith.addf %41, %43 : vector<8x512xf32>
    %45 = vector.extract_strided_slice %44 {offsets = [0, 0], sizes = [8, 64], strides = [1, 1]} : vector<8x512xf32> to vector<8x64xf32>
    %46 = arith.negf %45 : vector<8x64xf32>
    %47 = math.exp %46 : vector<8x64xf32>
    %cst_14 = arith.constant 1.000000e+00 : f32
    %48 = vector.broadcast %cst_14 : f32 to vector<8x64xf32>
    %49 = arith.addf %48, %47 : vector<8x64xf32>
    %50 = arith.divf %48, %49 : vector<8x64xf32>
    %51 = vector.extract_strided_slice %44 {offsets = [0, 128], sizes = [8, 64], strides = [1, 1]} : vector<8x512xf32> to vector<8x64xf32>
    %52 = arith.negf %51 : vector<8x64xf32>
    %53 = math.exp %52 : vector<8x64xf32>
    %cst_15 = arith.constant 1.000000e+00 : f32
    %54 = vector.broadcast %cst_15 : f32 to vector<8x64xf32>
    %55 = arith.addf %54, %53 : vector<8x64xf32>
    %56 = arith.divf %54, %55 : vector<8x64xf32>
    %57 = vector.extract_strided_slice %44 {offsets = [0, 384], sizes = [8, 64], strides = [1, 1]} : vector<8x512xf32> to vector<8x64xf32>
    %58 = vector.extract_strided_slice %44 {offsets = [0, 256], sizes = [8, 64], strides = [1, 1]} : vector<8x512xf32> to vector<8x64xf32>
    %59 = arith.mulf %50, %58 : vector<8x64xf32>
    %60 = arith.addf %57, %59 : vector<8x64xf32>
    %61 = math.tanh %60 : vector<8x64xf32>
    %62 = arith.subf %39, %61 : vector<8x64xf32>
    %63 = arith.mulf %56, %62 : vector<8x64xf32>
    %64 = arith.addf %61, %63 : vector<8x64xf32>
    %c0_16 = arith.constant 0 : index
    %c0_17 = arith.constant 0 : index
    %c0_18 = arith.constant 0 : index
    %65 = vector.load %arg14[%c0_16, %c0_17, %c0_18] : memref<8x8x64xf32, #tpu.memory_space<vmem>>, vector<1x8x64xf32>
    %66 = vector.shape_cast %65 : vector<1x8x64xf32> to vector<8x64xf32>
    %67 = vector.shape_cast %64 : vector<8x64xf32> to vector<1x8x64xf32>
    tpu.vector_store %arg14[%c0_16, %c0_17, %c0_18], %67 {strides = array<i32>} : memref<8x8x64xf32, #tpu.memory_space<vmem>>, vector<1x8x64xf32>,
    %68 = arith.truncf %64 : vector<8x64xf32> to vector<8x64xbf16>
    %cst_19 = arith.constant dense<0.000000e+00> : vector<8x512xf32>
    %69 = tpu.matmul %68, %9, %cst_19 {dimension_numbers = #tpu.dot_dimension_numbers<[1], [0], [0], [1], [0, 0, 1, 1], [], []>} : vector<8x64xbf16>, vector<64x512xbf16>, vector<8x512xf32> -> vector<8x512xf32>
    %70 = vector.extract_strided_slice %8 {offsets = [2, 0, 0], sizes = [1, 8, 512], strides = [1, 1, 1]} : vector<8x8x512xf32> to vector<1x8x512xf32>
    %71 = vector.shape_cast %70 : vector<1x8x512xf32> to vector<8x512xf32>
    %72 = arith.addf %69, %71 : vector<8x512xf32>
    %73 = vector.extract_strided_slice %72 {offsets = [0, 0], sizes = [8, 64], strides = [1, 1]} : vector<8x512xf32> to vector<8x64xf32>
    %74 = arith.negf %73 : vector<8x64xf32>
    %75 = math.exp %74 : vector<8x64xf32>
    %cst_20 = arith.constant 1.000000e+00 : f32
    %76 = vector.broadcast %cst_20 : f32 to vector<8x64xf32>
    %77 = arith.addf %76, %75 : vector<8x64xf32>
    %78 = arith.divf %76, %77 : vector<8x64xf32>
    %79 = vector.extract_strided_slice %72 {offsets = [0, 128], sizes = [8, 64], strides = [1, 1]} : vector<8x512xf32> to vector<8x64xf32>
    %80 = arith.negf %79 : vector<8x64xf32>
    %81 = math.exp %80 : vector<8x64xf32>
    %cst_21 = arith.constant 1.000000e+00 : f32
    %82 = vector.broadcast %cst_21 : f32 to vector<8x64xf32>
    %83 = arith.addf %82, %81 : vector<8x64xf32>
    %84 = arith.divf %82, %83 : vector<8x64xf32>
    %85 = vector.extract_strided_slice %72 {offsets = [0, 384], sizes = [8, 64], strides = [1, 1]} : vector<8x512xf32> to vector<8x64xf32>
    %86 = vector.extract_strided_slice %72 {offsets = [0, 256], sizes = [8, 64], strides = [1, 1]} : vector<8x512xf32> to vector<8x64xf32>
    %87 = arith.mulf %78, %86 : vector<8x64xf32>
    %88 = arith.addf %85, %87 : vector<8x64xf32>
    %89 = math.tanh %88 : vector<8x64xf32>
    %90 = arith.subf %64, %89 : vector<8x64xf32>
    %91 = arith.mulf %84, %90 : vector<8x64xf32>
    %92 = arith.addf %89, %91 : vector<8x64xf32>
    %c1 = arith.constant 1 : index
    %c0_22 = arith.constant 0 : index
    %c0_23 = arith.constant 0 : index
    %93 = vector.load %arg14[%c1, %c0_22, %c0_23] : memref<8x8x64xf32, #tpu.memory_space<vmem>>, vector<1x8x64xf32>
    %94 = vector.shape_cast %93 : vector<1x8x64xf32> to vector<8x64xf32>
    %95 = vector.shape_cast %92 : vector<8x64xf32> to vector<1x8x64xf32>
    tpu.vector_store %arg14[%c1, %c0_22, %c0_23], %95 {strides = array<i32>} : memref<8x8x64xf32, #tpu.memory_space<vmem>>, vector<1x8x64xf32>,
    %96 = arith.truncf %92 : vector<8x64xf32> to vector<8x64xbf16>
    %cst_24 = arith.constant dense<0.000000e+00> : vector<8x512xf32>
    %97 = tpu.matmul %96, %9, %cst_24 {dimension_numbers = #tpu.dot_dimension_numbers<[1], [0], [0], [1], [0, 0, 1, 1], [], []>} : vector<8x64xbf16>, vector<64x512xbf16>, vector<8x512xf32> -> vector<8x512xf32>
    %98 = vector.extract_strided_slice %8 {offsets = [3, 0, 0], sizes = [1, 8, 512], strides = [1, 1, 1]} : vector<8x8x512xf32> to vector<1x8x512xf32>
    %99 = vector.shape_cast %98 : vector<1x8x512xf32> to vector<8x512xf32>
    %100 = arith.addf %97, %99 : vector<8x512xf32>
    %101 = vector.extract_strided_slice %100 {offsets = [0, 0], sizes = [8, 64], strides = [1, 1]} : vector<8x512xf32> to vector<8x64xf32>
    %102 = arith.negf %101 : vector<8x64xf32>
    %103 = math.exp %102 : vector<8x64xf32>
    %cst_25 = arith.constant 1.000000e+00 : f32
    %104 = vector.broadcast %cst_25 : f32 to vector<8x64xf32>
    %105 = arith.addf %104, %103 : vector<8x64xf32>
    %106 = arith.divf %104, %105 : vector<8x64xf32>
    %107 = vector.extract_strided_slice %100 {offsets = [0, 128], sizes = [8, 64], strides = [1, 1]} : vector<8x512xf32> to vector<8x64xf32>
    %108 = arith.negf %107 : vector<8x64xf32>
    %109 = math.exp %108 : vector<8x64xf32>
    %cst_26 = arith.constant 1.000000e+00 : f32
    %110 = vector.broadcast %cst_26 : f32 to vector<8x64xf32>
    %111 = arith.addf %110, %109 : vector<8x64xf32>
    %112 = arith.divf %110, %111 : vector<8x64xf32>
    %113 = vector.extract_strided_slice %100 {offsets = [0, 384], sizes = [8, 64], strides = [1, 1]} : vector<8x512xf32> to vector<8x64xf32>
    %114 = vector.extract_strided_slice %100 {offsets = [0, 256], sizes = [8, 64], strides = [1, 1]} : vector<8x512xf32> to vector<8x64xf32>
    %115 = arith.mulf %106, %114 : vector<8x64xf32>
    %116 = arith.addf %113, %115 : vector<8x64xf32>
    %117 = math.tanh %116 : vector<8x64xf32>
    %118 = arith.subf %92, %117 : vector<8x64xf32>
    %119 = arith.mulf %112, %118 : vector<8x64xf32>
    %120 = arith.addf %117, %119 : vector<8x64xf32>
    %c2 = arith.constant 2 : index
    %c0_27 = arith.constant 0 : index
    %c0_28 = arith.constant 0 : index
    %121 = vector.load %arg14[%c2, %c0_27, %c0_28] : memref<8x8x64xf32, #tpu.memory_space<vmem>>, vector<1x8x64xf32>
    %122 = vector.shape_cast %121 : vector<1x8x64xf32> to vector<8x64xf32>
    %123 = vector.shape_cast %120 : vector<8x64xf32> to vector<1x8x64xf32>
    tpu.vector_store %arg14[%c2, %c0_27, %c0_28], %123 {strides = array<i32>} : memref<8x8x64xf32, #tpu.memory_space<vmem>>, vector<1x8x64xf32>,
    %124 = arith.truncf %120 : vector<8x64xf32> to vector<8x64xbf16>
    %cst_29 = arith.constant dense<0.000000e+00> : vector<8x512xf32>
    %125 = tpu.matmul %124, %9, %cst_29 {dimension_numbers = #tpu.dot_dimension_numbers<[1], [0], [0], [1], [0, 0, 1, 1], [], []>} : vector<8x64xbf16>, vector<64x512xbf16>, vector<8x512xf32> -> vector<8x512xf32>
    %126 = vector.extract_strided_slice %8 {offsets = [4, 0, 0], sizes = [1, 8, 512], strides = [1, 1, 1]} : vector<8x8x512xf32> to vector<1x8x512xf32>
    %127 = vector.shape_cast %126 : vector<1x8x512xf32> to vector<8x512xf32>
    %128 = arith.addf %125, %127 : vector<8x512xf32>
    %129 = vector.extract_strided_slice %128 {offsets = [0, 0], sizes = [8, 64], strides = [1, 1]} : vector<8x512xf32> to vector<8x64xf32>
    %130 = arith.negf %129 : vector<8x64xf32>
    %131 = math.exp %130 : vector<8x64xf32>
    %cst_30 = arith.constant 1.000000e+00 : f32
    %132 = vector.broadcast %cst_30 : f32 to vector<8x64xf32>
    %133 = arith.addf %132, %131 : vector<8x64xf32>
    %134 = arith.divf %132, %133 : vector<8x64xf32>
    %135 = vector.extract_strided_slice %128 {offsets = [0, 128], sizes = [8, 64], strides = [1, 1]} : vector<8x512xf32> to vector<8x64xf32>
    %136 = arith.negf %135 : vector<8x64xf32>
    %137 = math.exp %136 : vector<8x64xf32>
    %cst_31 = arith.constant 1.000000e+00 : f32
    %138 = vector.broadcast %cst_31 : f32 to vector<8x64xf32>
    %139 = arith.addf %138, %137 : vector<8x64xf32>
    %140 = arith.divf %138, %139 : vector<8x64xf32>
    %141 = vector.extract_strided_slice %128 {offsets = [0, 384], sizes = [8, 64], strides = [1, 1]} : vector<8x512xf32> to vector<8x64xf32>
    %142 = vector.extract_strided_slice %128 {offsets = [0, 256], sizes = [8, 64], strides = [1, 1]} : vector<8x512xf32> to vector<8x64xf32>
    %143 = arith.mulf %134, %142 : vector<8x64xf32>
    %144 = arith.addf %141, %143 : vector<8x64xf32>
    %145 = math.tanh %144 : vector<8x64xf32>
    %146 = arith.subf %120, %145 : vector<8x64xf32>
    %147 = arith.mulf %140, %146 : vector<8x64xf32>
    %148 = arith.addf %145, %147 : vector<8x64xf32>
    %c3 = arith.constant 3 : index
    %c0_32 = arith.constant 0 : index
    %c0_33 = arith.constant 0 : index
    %149 = vector.load %arg14[%c3, %c0_32, %c0_33] : memref<8x8x64xf32, #tpu.memory_space<vmem>>, vector<1x8x64xf32>
    %150 = vector.shape_cast %149 : vector<1x8x64xf32> to vector<8x64xf32>
    %151 = vector.shape_cast %148 : vector<8x64xf32> to vector<1x8x64xf32>
    tpu.vector_store %arg14[%c3, %c0_32, %c0_33], %151 {strides = array<i32>} : memref<8x8x64xf32, #tpu.memory_space<vmem>>, vector<1x8x64xf32>,
    %152 = arith.truncf %148 : vector<8x64xf32> to vector<8x64xbf16>
    %cst_34 = arith.constant dense<0.000000e+00> : vector<8x512xf32>
    %153 = tpu.matmul %152, %9, %cst_34 {dimension_numbers = #tpu.dot_dimension_numbers<[1], [0], [0], [1], [0, 0, 1, 1], [], []>} : vector<8x64xbf16>, vector<64x512xbf16>, vector<8x512xf32> -> vector<8x512xf32>
    %154 = vector.extract_strided_slice %8 {offsets = [5, 0, 0], sizes = [1, 8, 512], strides = [1, 1, 1]} : vector<8x8x512xf32> to vector<1x8x512xf32>
    %155 = vector.shape_cast %154 : vector<1x8x512xf32> to vector<8x512xf32>
    %156 = arith.addf %153, %155 : vector<8x512xf32>
    %157 = vector.extract_strided_slice %156 {offsets = [0, 0], sizes = [8, 64], strides = [1, 1]} : vector<8x512xf32> to vector<8x64xf32>
    %158 = arith.negf %157 : vector<8x64xf32>
    %159 = math.exp %158 : vector<8x64xf32>
    %cst_35 = arith.constant 1.000000e+00 : f32
    %160 = vector.broadcast %cst_35 : f32 to vector<8x64xf32>
    %161 = arith.addf %160, %159 : vector<8x64xf32>
    %162 = arith.divf %160, %161 : vector<8x64xf32>
    %163 = vector.extract_strided_slice %156 {offsets = [0, 128], sizes = [8, 64], strides = [1, 1]} : vector<8x512xf32> to vector<8x64xf32>
    %164 = arith.negf %163 : vector<8x64xf32>
    %165 = math.exp %164 : vector<8x64xf32>
    %cst_36 = arith.constant 1.000000e+00 : f32
    %166 = vector.broadcast %cst_36 : f32 to vector<8x64xf32>
    %167 = arith.addf %166, %165 : vector<8x64xf32>
    %168 = arith.divf %166, %167 : vector<8x64xf32>
    %169 = vector.extract_strided_slice %156 {offsets = [0, 384], sizes = [8, 64], strides = [1, 1]} : vector<8x512xf32> to vector<8x64xf32>
    %170 = vector.extract_strided_slice %156 {offsets = [0, 256], sizes = [8, 64], strides = [1, 1]} : vector<8x512xf32> to vector<8x64xf32>
    %171 = arith.mulf %162, %170 : vector<8x64xf32>
    %172 = arith.addf %169, %171 : vector<8x64xf32>
    %173 = math.tanh %172 : vector<8x64xf32>
    %174 = arith.subf %148, %173 : vector<8x64xf32>
    %175 = arith.mulf %168, %174 : vector<8x64xf32>
    %176 = arith.addf %173, %175 : vector<8x64xf32>
    %c4 = arith.constant 4 : index
    %c0_37 = arith.constant 0 : index
    %c0_38 = arith.constant 0 : index
    %177 = vector.load %arg14[%c4, %c0_37, %c0_38] : memref<8x8x64xf32, #tpu.memory_space<vmem>>, vector<1x8x64xf32>
    %178 = vector.shape_cast %177 : vector<1x8x64xf32> to vector<8x64xf32>
    %179 = vector.shape_cast %176 : vector<8x64xf32> to vector<1x8x64xf32>
    tpu.vector_store %arg14[%c4, %c0_37, %c0_38], %179 {strides = array<i32>} : memref<8x8x64xf32, #tpu.memory_space<vmem>>, vector<1x8x64xf32>,
    %180 = arith.truncf %176 : vector<8x64xf32> to vector<8x64xbf16>
    %cst_39 = arith.constant dense<0.000000e+00> : vector<8x512xf32>
    %181 = tpu.matmul %180, %9, %cst_39 {dimension_numbers = #tpu.dot_dimension_numbers<[1], [0], [0], [1], [0, 0, 1, 1], [], []>} : vector<8x64xbf16>, vector<64x512xbf16>, vector<8x512xf32> -> vector<8x512xf32>
    %182 = vector.extract_strided_slice %8 {offsets = [6, 0, 0], sizes = [1, 8, 512], strides = [1, 1, 1]} : vector<8x8x512xf32> to vector<1x8x512xf32>
    %183 = vector.shape_cast %182 : vector<1x8x512xf32> to vector<8x512xf32>
    %184 = arith.addf %181, %183 : vector<8x512xf32>
    %185 = vector.extract_strided_slice %184 {offsets = [0, 0], sizes = [8, 64], strides = [1, 1]} : vector<8x512xf32> to vector<8x64xf32>
    %186 = arith.negf %185 : vector<8x64xf32>
    %187 = math.exp %186 : vector<8x64xf32>
    %cst_40 = arith.constant 1.000000e+00 : f32
    %188 = vector.broadcast %cst_40 : f32 to vector<8x64xf32>
    %189 = arith.addf %188, %187 : vector<8x64xf32>
    %190 = arith.divf %188, %189 : vector<8x64xf32>
    %191 = vector.extract_strided_slice %184 {offsets = [0, 128], sizes = [8, 64], strides = [1, 1]} : vector<8x512xf32> to vector<8x64xf32>
    %192 = arith.negf %191 : vector<8x64xf32>
    %193 = math.exp %192 : vector<8x64xf32>
    %cst_41 = arith.constant 1.000000e+00 : f32
    %194 = vector.broadcast %cst_41 : f32 to vector<8x64xf32>
    %195 = arith.addf %194, %193 : vector<8x64xf32>
    %196 = arith.divf %194, %195 : vector<8x64xf32>
    %197 = vector.extract_strided_slice %184 {offsets = [0, 384], sizes = [8, 64], strides = [1, 1]} : vector<8x512xf32> to vector<8x64xf32>
    %198 = vector.extract_strided_slice %184 {offsets = [0, 256], sizes = [8, 64], strides = [1, 1]} : vector<8x512xf32> to vector<8x64xf32>
    %199 = arith.mulf %190, %198 : vector<8x64xf32>
    %200 = arith.addf %197, %199 : vector<8x64xf32>
    %201 = math.tanh %200 : vector<8x64xf32>
    %202 = arith.subf %176, %201 : vector<8x64xf32>
    %203 = arith.mulf %196, %202 : vector<8x64xf32>
    %204 = arith.addf %201, %203 : vector<8x64xf32>
    %c5 = arith.constant 5 : index
    %c0_42 = arith.constant 0 : index
    %c0_43 = arith.constant 0 : index
    %205 = vector.load %arg14[%c5, %c0_42, %c0_43] : memref<8x8x64xf32, #tpu.memory_space<vmem>>, vector<1x8x64xf32>
    %206 = vector.shape_cast %205 : vector<1x8x64xf32> to vector<8x64xf32>
    %207 = vector.shape_cast %204 : vector<8x64xf32> to vector<1x8x64xf32>
    tpu.vector_store %arg14[%c5, %c0_42, %c0_43], %207 {strides = array<i32>} : memref<8x8x64xf32, #tpu.memory_space<vmem>>, vector<1x8x64xf32>,
    %208 = arith.truncf %204 : vector<8x64xf32> to vector<8x64xbf16>
    %cst_44 = arith.constant dense<0.000000e+00> : vector<8x512xf32>
    %209 = tpu.matmul %208, %9, %cst_44 {dimension_numbers = #tpu.dot_dimension_numbers<[1], [0], [0], [1], [0, 0, 1, 1], [], []>} : vector<8x64xbf16>, vector<64x512xbf16>, vector<8x512xf32> -> vector<8x512xf32>
    %210 = vector.extract_strided_slice %8 {offsets = [7, 0, 0], sizes = [1, 8, 512], strides = [1, 1, 1]} : vector<8x8x512xf32> to vector<1x8x512xf32>
    %211 = vector.shape_cast %210 : vector<1x8x512xf32> to vector<8x512xf32>
    %212 = arith.addf %209, %211 : vector<8x512xf32>
    %213 = vector.extract_strided_slice %212 {offsets = [0, 0], sizes = [8, 64], strides = [1, 1]} : vector<8x512xf32> to vector<8x64xf32>
    %214 = arith.negf %213 : vector<8x64xf32>
    %215 = math.exp %214 : vector<8x64xf32>
    %cst_45 = arith.constant 1.000000e+00 : f32
    %216 = vector.broadcast %cst_45 : f32 to vector<8x64xf32>
    %217 = arith.addf %216, %215 : vector<8x64xf32>
    %218 = arith.divf %216, %217 : vector<8x64xf32>
    %219 = vector.extract_strided_slice %212 {offsets = [0, 128], sizes = [8, 64], strides = [1, 1]} : vector<8x512xf32> to vector<8x64xf32>
    %220 = arith.negf %219 : vector<8x64xf32>
    %221 = math.exp %220 : vector<8x64xf32>
    %cst_46 = arith.constant 1.000000e+00 : f32
    %222 = vector.broadcast %cst_46 : f32 to vector<8x64xf32>
    %223 = arith.addf %222, %221 : vector<8x64xf32>
    %224 = arith.divf %222, %223 : vector<8x64xf32>
    %225 = vector.extract_strided_slice %212 {offsets = [0, 384], sizes = [8, 64], strides = [1, 1]} : vector<8x512xf32> to vector<8x64xf32>
    %226 = vector.extract_strided_slice %212 {offsets = [0, 256], sizes = [8, 64], strides = [1, 1]} : vector<8x512xf32> to vector<8x64xf32>
    %227 = arith.mulf %218, %226 : vector<8x64xf32>
    %228 = arith.addf %225, %227 : vector<8x64xf32>
    %229 = math.tanh %228 : vector<8x64xf32>
    %230 = arith.subf %204, %229 : vector<8x64xf32>
    %231 = arith.mulf %224, %230 : vector<8x64xf32>
    %232 = arith.addf %229, %231 : vector<8x64xf32>
    %c6 = arith.constant 6 : index
    %c0_47 = arith.constant 0 : index
    %c0_48 = arith.constant 0 : index
    %233 = vector.load %arg14[%c6, %c0_47, %c0_48] : memref<8x8x64xf32, #tpu.memory_space<vmem>>, vector<1x8x64xf32>
    %234 = vector.shape_cast %233 : vector<1x8x64xf32> to vector<8x64xf32>
    %235 = vector.shape_cast %232 : vector<8x64xf32> to vector<1x8x64xf32>
    tpu.vector_store %arg14[%c6, %c0_47, %c0_48], %235 {strides = array<i32>} : memref<8x8x64xf32, #tpu.memory_space<vmem>>, vector<1x8x64xf32>,
    %236 = arith.truncf %232 : vector<8x64xf32> to vector<8x64xbf16>
    %cst_49 = arith.constant dense<0.000000e+00> : vector<8x512xf32>
    %237 = tpu.matmul %236, %9, %cst_49 {dimension_numbers = #tpu.dot_dimension_numbers<[1], [0], [0], [1], [0, 0, 1, 1], [], []>} : vector<8x64xbf16>, vector<64x512xbf16>, vector<8x512xf32> -> vector<8x512xf32>
    %238 = vector.extract_strided_slice %8 {offsets = [7, 0, 0], sizes = [1, 8, 512], strides = [1, 1, 1]} : vector<8x8x512xf32> to vector<1x8x512xf32>
    %239 = vector.shape_cast %238 : vector<1x8x512xf32> to vector<8x512xf32>
    %240 = arith.addf %237, %239 : vector<8x512xf32>
    %241 = vector.extract_strided_slice %240 {offsets = [0, 0], sizes = [8, 64], strides = [1, 1]} : vector<8x512xf32> to vector<8x64xf32>
    %242 = arith.negf %241 : vector<8x64xf32>
    %243 = math.exp %242 : vector<8x64xf32>
    %cst_50 = arith.constant 1.000000e+00 : f32
    %244 = vector.broadcast %cst_50 : f32 to vector<8x64xf32>
    %245 = arith.addf %244, %243 : vector<8x64xf32>
    %246 = arith.divf %244, %245 : vector<8x64xf32>
    %247 = vector.extract_strided_slice %240 {offsets = [0, 128], sizes = [8, 64], strides = [1, 1]} : vector<8x512xf32> to vector<8x64xf32>
    %248 = arith.negf %247 : vector<8x64xf32>
    %249 = math.exp %248 : vector<8x64xf32>
    %cst_51 = arith.constant 1.000000e+00 : f32
    %250 = vector.broadcast %cst_51 : f32 to vector<8x64xf32>
    %251 = arith.addf %250, %249 : vector<8x64xf32>
    %252 = arith.divf %250, %251 : vector<8x64xf32>
    %253 = vector.extract_strided_slice %240 {offsets = [0, 384], sizes = [8, 64], strides = [1, 1]} : vector<8x512xf32> to vector<8x64xf32>
    %254 = vector.extract_strided_slice %240 {offsets = [0, 256], sizes = [8, 64], strides = [1, 1]} : vector<8x512xf32> to vector<8x64xf32>
    %255 = arith.mulf %246, %254 : vector<8x64xf32>
    %256 = arith.addf %253, %255 : vector<8x64xf32>
    %257 = math.tanh %256 : vector<8x64xf32>
    %258 = arith.subf %232, %257 : vector<8x64xf32>
    %259 = arith.mulf %252, %258 : vector<8x64xf32>
    %260 = arith.addf %257, %259 : vector<8x64xf32>
    %261 = arith.select %13, %232, %260 : vector<8x64xi1>, vector<8x64xf32>
    %c7 = arith.constant 7 : index
    %c0_52 = arith.constant 0 : index
    %c0_53 = arith.constant 0 : index
    %262 = vector.load %arg14[%c7, %c0_52, %c0_53] : memref<8x8x64xf32, #tpu.memory_space<vmem>>, vector<1x8x64xf32>
    %263 = vector.shape_cast %262 : vector<1x8x64xf32> to vector<8x64xf32>
    %264 = vector.shape_cast %261 : vector<8x64xf32> to vector<1x8x64xf32>
    tpu.vector_store %arg14[%c7, %c0_52, %c0_53], %264 {strides = array<i32>} : memref<8x8x64xf32, #tpu.memory_space<vmem>>, vector<1x8x64xf32>,
    %c0_54 = arith.constant 0 : index
    %c0_55 = arith.constant 0 : index
    %265 = vector.load %arg13[%c0_54, %c0_55] : memref<8x64xf32, #tpu.memory_space<vmem>>, vector<8x64xf32>
    tpu.vector_store %arg13[%c0_54, %c0_55], %261 {strides = array<i32>} : memref<8x64xf32, #tpu.memory_space<vmem>>, vector<8x64xf32>,
    %c0_56 = arith.constant 0 : index
    %c0_57 = arith.constant 0 : index
    %c0_58 = arith.constant 0 : index
    %266 = vector.load %arg14[%c0_56, %c0_57, %c0_58] : memref<8x8x64xf32, #tpu.memory_space<vmem>>, vector<8x8x64xf32>
    %267 = vector.shape_cast %266 : vector<8x8x64xf32> to vector<64x64xf32>
    %268 = arith.truncf %267 : vector<64x64xf32> to vector<64x64xbf16>
    %c0_59 = arith.constant 0 : index
    %c0_60 = arith.constant 0 : index
    %269 = vector.load %arg6[%c0_59, %c0_60] : memref<64x256xbf16, #tpu.memory_space<vmem>>, vector<64x256xbf16>
    %cst_61 = arith.constant dense<0.000000e+00> : vector<64x256xf32>
    %270 = tpu.matmul %268, %269, %cst_61 {dimension_numbers = #tpu.dot_dimension_numbers<[1], [0], [0], [1], [0, 0, 1, 1], [], []>} : vector<64x64xbf16>, vector<64x256xbf16>, vector<64x256xf32> -> vector<64x256xf32>
    %c0_62 = arith.constant 0 : index
    %c0_63 = arith.constant 0 : index
    %271 = vector.load %arg7[%c0_62, %c0_63] : memref<1x256xf32, #tpu.memory_space<vmem>>, vector<1x256xf32>
    %272 = vector.broadcast %271 : vector<1x256xf32> to vector<64x256xf32>
    %273 = arith.addf %270, %272 : vector<64x256xf32>
    %cst_64 = arith.constant 0.000000e+00 : f32
    %274 = vector.broadcast %cst_64 : f32 to vector<64x256xf32>
    %275 = arith.cmpf ogt, %273, %274 : vector<64x256xf32>
    %cst_65 = arith.constant 0.000000e+00 : f32
    %276 = vector.broadcast %cst_65 : f32 to vector<64x256xf32>
    %277 = arith.minimumf %273, %276 : vector<64x256xf32>
    %278 = math.exp %277 : vector<64x256xf32>
    %cst_66 = arith.constant 1.000000e+00 : f32
    %279 = vector.broadcast %cst_66 : f32 to vector<64x256xf32>
    %280 = arith.subf %278, %279 : vector<64x256xf32>
    %281 = arith.select %275, %273, %280 : vector<64x256xi1>, vector<64x256xf32>
    %282 = arith.truncf %281 : vector<64x256xf32> to vector<64x256xbf16>
    %c0_67 = arith.constant 0 : index
    %c0_68 = arith.constant 0 : index
    %283 = vector.load %arg8[%c0_67, %c0_68] : memref<256x256xbf16, #tpu.memory_space<vmem>>, vector<256x256xbf16>
    %cst_69 = arith.constant dense<0.000000e+00> : vector<64x256xf32>
    %284 = tpu.matmul %282, %283, %cst_69 {dimension_numbers = #tpu.dot_dimension_numbers<[1], [0], [0], [1], [0, 0, 1, 1], [], []>} : vector<64x256xbf16>, vector<256x256xbf16>, vector<64x256xf32> -> vector<64x256xf32>
    %c0_70 = arith.constant 0 : index
    %c0_71 = arith.constant 0 : index
    %285 = vector.load %arg9[%c0_70, %c0_71] : memref<1x256xf32, #tpu.memory_space<vmem>>, vector<1x256xf32>
    %286 = vector.broadcast %285 : vector<1x256xf32> to vector<64x256xf32>
    %287 = arith.addf %284, %286 : vector<64x256xf32>
    %cst_72 = arith.constant 0.000000e+00 : f32
    %288 = vector.broadcast %cst_72 : f32 to vector<64x256xf32>
    %289 = arith.cmpf ogt, %287, %288 : vector<64x256xf32>
    %cst_73 = arith.constant 0.000000e+00 : f32
    %290 = vector.broadcast %cst_73 : f32 to vector<64x256xf32>
    %291 = arith.minimumf %287, %290 : vector<64x256xf32>
    %292 = math.exp %291 : vector<64x256xf32>
    %cst_74 = arith.constant 1.000000e+00 : f32
    %293 = vector.broadcast %cst_74 : f32 to vector<64x256xf32>
    %294 = arith.subf %292, %293 : vector<64x256xf32>
    %295 = arith.select %289, %287, %294 : vector<64x256xi1>, vector<64x256xf32>
    %296 = arith.truncf %295 : vector<64x256xf32> to vector<64x256xbf16>
    %c0_75 = arith.constant 0 : index
    %c0_76 = arith.constant 0 : index
    %297 = vector.load %arg10[%c0_75, %c0_76] : memref<256x128xbf16, #tpu.memory_space<vmem>>, vector<256x128xbf16>
    %cst_77 = arith.constant dense<0.000000e+00> : vector<64x128xf32>
    %298 = tpu.matmul %296, %297, %cst_77 {dimension_numbers = #tpu.dot_dimension_numbers<[1], [0], [0], [1], [0, 0, 1, 1], [], []>} : vector<64x256xbf16>, vector<256x128xbf16>, vector<64x128xf32> -> vector<64x128xf32>
    %c0_78 = arith.constant 0 : index
    %c0_79 = arith.constant 0 : index
    %299 = vector.load %arg11[%c0_78, %c0_79] : memref<1x128xf32, #tpu.memory_space<vmem>>, vector<1x128xf32>
    %300 = vector.broadcast %299 : vector<1x128xf32> to vector<64x128xf32>
    %301 = arith.addf %298, %300 : vector<64x128xf32>
    %cst_80 = arith.constant dense<0xFF800000> : vector<64xf32>
    %302 = vector.multi_reduction <maximumf>, %301, %cst_80 [1] : vector<64x128xf32> to vector<64xf32>
    %303 = vector.shape_cast %302 : vector<64xf32> to vector<64x1xf32>
    %304 = vector.broadcast %303 : vector<64x1xf32> to vector<64x128xf32>
    %305 = arith.subf %301, %304 : vector<64x128xf32>
    %306 = math.exp %305 : vector<64x128xf32>
    %cst_81 = arith.constant dense<0.000000e+00> : vector<64xf32>
    %307 = vector.multi_reduction <add>, %306, %cst_81 [1] : vector<64x128xf32> to vector<64xf32>
    %308 = vector.shape_cast %307 : vector<64xf32> to vector<64x1xf32>
    %309 = vector.broadcast %308 : vector<64x1xf32> to vector<64x128xf32>
    %310 = arith.divf %306, %309 : vector<64x128xf32>
    %311 = vector.shape_cast %310 : vector<64x128xf32> to vector<8x8x128xf32>
    %c0_82 = arith.constant 0 : index
    %c0_83 = arith.constant 0 : index
    %c0_84 = arith.constant 0 : index
    %312 = vector.load %arg12[%c0_82, %c0_83, %c0_84] : memref<8x8x128xf32, #tpu.memory_space<vmem>>, vector<8x8x128xf32>
    tpu.vector_store %arg12[%c0_82, %c0_83, %c0_84], %311 {strides = array<i32>} : memref<8x8x128xf32, #tpu.memory_space<vmem>>, vector<8x8x128xf32>,
    return
  }
  func.func @transform_0(%arg0: i32) -> (i32, i32, i32) {
    %c0_i32 = arith.constant 0 : i32
    %c0_i32_0 = arith.constant 0 : i32
    %c0_i32_1 = arith.constant 0 : i32
    return %c0_i32, %arg0, %c0_i32_0 : i32, i32, i32
  }
  func.func @transform_1(%arg0: i32) -> (i32, i32) {
    %c0_i32 = arith.constant 0 : i32
    %c0_i32_0 = arith.constant 0 : i32
    return %arg0, %c0_i32 : i32, i32
  }
  func.func @transform_2(%arg0: i32) -> (i32, i32) {
    %c0_i32 = arith.constant 0 : i32
    %c0_i32_0 = arith.constant 0 : i32
    %c0_i32_1 = arith.constant 0 : i32
    return %c0_i32, %c0_i32_0 : i32, i32
  }
  func.func @transform_3(%arg0: i32) -> (i32, i32) {
    %c0_i32 = arith.constant 0 : i32
    %c0_i32_0 = arith.constant 0 : i32
    %c0_i32_1 = arith.constant 0 : i32
    return %c0_i32, %c0_i32_0 : i32, i32
  }
  func.func @transform_4(%arg0: i32) -> (i32, i32) {
    %c0_i32 = arith.constant 0 : i32
    %c0_i32_0 = arith.constant 0 : i32
    %c0_i32_1 = arith.constant 0 : i32
    return %c0_i32, %c0_i32_0 : i32, i32
  }
  func.func @transform_5(%arg0: i32) -> (i32, i32) {
    %c0_i32 = arith.constant 0 : i32
    %c0_i32_0 = arith.constant 0 : i32
    %c0_i32_1 = arith.constant 0 : i32
    return %c0_i32, %c0_i32_0 : i32, i32
  }
  func.func @transform_6(%arg0: i32) -> (i32, i32) {
    %c0_i32 = arith.constant 0 : i32
    %c0_i32_0 = arith.constant 0 : i32
    %c0_i32_1 = arith.constant 0 : i32
    return %c0_i32, %c0_i32_0 : i32, i32
  }
  func.func @transform_7(%arg0: i32) -> (i32, i32) {
    %c0_i32 = arith.constant 0 : i32
    %c0_i32_0 = arith.constant 0 : i32
    %c0_i32_1 = arith.constant 0 : i32
    return %c0_i32, %c0_i32_0 : i32, i32
  }
  func.func @transform_8(%arg0: i32) -> (i32, i32) {
    %c0_i32 = arith.constant 0 : i32
    %c0_i32_0 = arith.constant 0 : i32
    %c0_i32_1 = arith.constant 0 : i32
    return %c0_i32, %c0_i32_0 : i32, i32
  }
  func.func @transform_9(%arg0: i32) -> (i32, i32) {
    %c0_i32 = arith.constant 0 : i32
    %c0_i32_0 = arith.constant 0 : i32
    %c0_i32_1 = arith.constant 0 : i32
    return %c0_i32, %c0_i32_0 : i32, i32
  }
  func.func @transform_10(%arg0: i32) -> (i32, i32) {
    %c0_i32 = arith.constant 0 : i32
    %c0_i32_0 = arith.constant 0 : i32
    %c0_i32_1 = arith.constant 0 : i32
    return %c0_i32, %c0_i32_0 : i32, i32
  }
  func.func @transform_11(%arg0: i32) -> (i32, i32, i32) {
    %c0_i32 = arith.constant 0 : i32
    %c0_i32_0 = arith.constant 0 : i32
    %c0_i32_1 = arith.constant 0 : i32
    return %c0_i32, %arg0, %c0_i32_0 : i32, i32, i32
  }
  func.func @transform_12(%arg0: i32) -> (i32, i32) {
    %c0_i32 = arith.constant 0 : i32
    %c0_i32_0 = arith.constant 0 : i32
    return %arg0, %c0_i32 : i32, i32
  }
}

</mosaic_0001>

<llo_original>
// kernel: recurrent_actor_forward.1
$region0: #{recurrent_actor_forward.1}
  #allocation0 [shape = 'u32[]', space=smem, size = 0x4, offset = 0x4, fixed_abs, tag = 'smem constant byte address 0x4 - core index']
  #allocation1 [shape = 'u32[144,128]{1,0:T(1,128)}', space=vmem, size = 0x12000, scoped, tag = 'internal scratch']
  #allocation2 [shape = 'f32[8,8,64]{2,1,0:T(8,128)}', space=vmem, size = 0x8000, scoped, tag = 'scratch operand']
  %s0 = inlined_call_operand.vmem [shape: f32[8,16,32], index: 0, kind: input, shape index: {}]
  %s1 = inlined_call_operand.vmem [shape: f32[16,64], index: 1, kind: input, shape index: {}]
  %s2 = inlined_call_operand.vmem [shape: bf16[32,512], index: 2, kind: input, shape index: {}]
  %s3 = inlined_call_operand.vmem [shape: f32[1,512], index: 3, kind: input, shape index: {}]
  %s4 = inlined_call_operand.hbm [shape: bf16[64,512], index: 4, kind: input, shape index: {}]
  %s5 = inlined_call_operand.hbm [shape: bf16[64,256], index: 5, kind: input, shape index: {}]
  %s6 = inlined_call_operand.vmem [shape: f32[1,256], index: 6, kind: input, shape index: {}]
  %s7 = inlined_call_operand.vmem [shape: bf16[256,256], index: 7, kind: input, shape index: {}]
  %s8 = inlined_call_operand.vmem [shape: f32[1,256], index: 8, kind: input, shape index: {}]
  %s9 = inlined_call_operand.hbm [shape: bf16[256,128], index: 9, kind: input, shape index: {}]
  %s10 = inlined_call_operand.vmem [shape: f32[1,128], index: 10, kind: input, shape index: {}]
  %s11 = inlined_call_operand.vmem [shape: f32[8,16,128], index: 11, kind: output, shape index: {0}]
  %s12 = inlined_call_operand.vmem [shape: f32[16,64], index: 12, kind: output, shape index: {1}]
  %13 = xla_tuple %s11, %s12
  %s14 = sld [smem:[#allocation0]]
  $region169: #{recurrent_actor_forward.1} parent=0
    _
  %s16 = ssub.s32 1, %s14
  %s17 = scalar_select 0, %s16, %s14
  $region1: #{recurrent_actor_forward.1} parent=0
    #allocation3 [shape = 'u8[65536]{0}', space=vmem, size = 0x10000, scoped, tag = 'input window, operand 0']
    #allocation4 [shape = 'u8[65536]{0}', space=vmem, size = 0x10000, scoped, tag = 'input window, operand 4, single buffered']
    #allocation5 [shape = 's32[2]{0}', space=sflag, size = 0x8, scoped, tag = 'scoped memory for recurrent_actor_forward.1']
    #allocation6 [shape = 'u8[32768]{0}', space=vmem, size = 0x8000, scoped, tag = 'input window, operand 5, single buffered']
    #allocation7 [shape = 's32[1]{0}', space=sflag, size = 0x4, scoped, tag = 'scoped memory for recurrent_actor_forward.1']
    #allocation8 [shape = 'u8[65536]{0}', space=vmem, size = 0x10000, scoped, tag = 'input window, operand 9, single buffered']
    #allocation9 [shape = 'u8[65536]{0}', space=vmem, size = 0x10000, scoped, tag = 'output window, operand 0']
    %18 = vsyncpa [#allocation5], 0
    %19 = vsyncpa [#allocation7], 0
    loop: start=0, step=1, limit=4
    $region2: #{recurrent_actor_forward.1} parent=1 // loop_pre_header
      _
    $region3: #{recurrent_actor_forward.1} parent=1 // loop_header
      %s21 = sphi 0, %s25
      %p22 = scmp.ge.s32.totalorder %s21, 4
      %s31 = sphi 0, %s33
      %s34 = sphi 0, %s31
      %s35 = sphi 0, %s34
      %s51 = sphi 0, %s35
      %s57 = sphi 0, %s59
      %s60 = sphi 0, %s57
      %s61 = sphi 0, %s60
      %s77 = sphi 0, %s61
      %s81 = sphi 0, %s81
      %s83 = sphi 0, %s81
      %s84 = sphi 0, %s83
      %s98 = sphi 0, %s84
      %s102 = sphi 0, %s102
      %s104 = sphi 0, %s102
      %s105 = sphi 0, %s104
      %s119 = sphi 0, %s105
      %s123 = sphi 0, %s123
      %s125 = sphi 0, %s123
      %s126 = sphi 0, %s125
      %s140 = sphi 0, %s126
      %s144 = sphi 0, %s144
      %s146 = sphi 0, %s144
      %s147 = sphi 0, %s146
      %s161 = sphi 0, %s147
      %s165 = sphi 0, %s165
      %s167 = sphi 0, %s165
      %s168 = sphi 0, %s167
      %s182 = sphi 0, %s168
      %s186 = sphi 0, %s186
      %s188 = sphi 0, %s186
      %s189 = sphi 0, %s188
      %s203 = sphi 0, %s189
      %s207 = sphi 0, %s207
      %s209 = sphi 0, %s207
      %s210 = sphi 0, %s209
      %s224 = sphi 0, %s210
      %s228 = sphi 0, %s228
      %s230 = sphi 0, %s228
      %s231 = sphi 0, %s230
      %s245 = sphi 0, %s231
      %s249 = sphi 0, %s249
      %s251 = sphi 0, %s249
      %s252 = sphi 0, %s251
      %s266 = sphi 0, %s252
      %s272 = sphi 0, %s274
      %s275 = sphi 0, %s272
      %s276 = sphi 0, %s275
      %s292 = sphi 0, %s276
      %s298 = sphi 0, %s300
      %s301 = sphi 0, %s298
      %s302 = sphi 0, %s301
      %s318 = sphi 0, %s302
    $region4: #{recurrent_actor_forward.1} parent=1 // loop_header_branch
      %24 = sbr.rel (%p22) target = $region8
    $region5: #{recurrent_actor_forward.1} parent=1 // loop_body
      %s26 = ssub.s32 %s21, 1
      %s27 = ssub.s32 %s21, 2
      %s28 = sadd.s32 %s21, 1
      %s29 = ssub.s32 %s21, %s28
      %p30 = scmp.eq.s32.totalorder %s29, 0
      %s32 = sadd.s32 %s31, 1
      %s33 = scalar_select %p30, %s31, %s32
      %p36 = pneg %p30
      %p37 = scmp.eq.s32.totalorder %s21, 1
      %p38 = por %p36, %p37
      %p39 = scmp.ne.s32.totalorder %s31, %s34
      %p40 = scmp.eq.s32.totalorder %s21, 0
      %p41 = por %p39, %p40
      %p42 = scmp.ne.s32.totalorder %s31, %s34
      %p43 = scmp.eq.s32.totalorder %s26, 1
      %p44 = por %p42, %p43
      %p45 = scmp.ne.s32.totalorder %s34, %s35
      %p46 = scmp.eq.s32.totalorder %s26, 0
      %p47 = por %p45, %p46
      %p48 = scmp.ne.s32.totalorder %s34, %s35
      %p49 = scmp.eq.s32.totalorder %s27, 1
      %p50 = por %p48, %p49
      %p52 = scmp.ne.s32.totalorder %s35, %s51
      %p53 = scmp.eq.s32.totalorder %s27, 0
      %p54 = por %p52, %p53
      %s55 = ssub.s32 %s21, %s28
      %p56 = scmp.eq.s32.totalorder %s55, 0
      %s58 = sadd.s32 %s57, 1
      %s59 = scalar_select %p56, %s57, %s58
      %p62 = pneg %p56
      %p63 = scmp.eq.s32.totalorder %s21, 1
      %p64 = por %p62, %p63
      %p65 = scmp.ne.s32.totalorder %s57, %s60
      %p66 = scmp.eq.s32.totalorder %s21, 0
      %p67 = por %p65, %p66
      %p68 = scmp.ne.s32.totalorder %s57, %s60
      %p69 = scmp.eq.s32.totalorder %s26, 1
      %p70 = por %p68, %p69
      %p71 = scmp.ne.s32.totalorder %s60, %s61
      %p72 = scmp.eq.s32.totalorder %s26, 0
      %p73 = por %p71, %p72
      %p74 = scmp.ne.s32.totalorder %s60, %s61
      %p75 = scmp.eq.s32.totalorder %s27, 1
      %p76 = por %p74, %p75
      %p78 = scmp.ne.s32.totalorder %s61, %s77
      %p79 = scmp.eq.s32.totalorder %s27, 0
      %p80 = por %p78, %p79
      %s82 = sadd.s32 %s81, 1
      %p85 = scmp.eq.s32.totalorder %s21, 1
      %p86 = scmp.ne.s32.totalorder %s81, %s83
      %p87 = scmp.eq.s32.totalorder %s21, 0
      %p88 = por %p86, %p87
      %p89 = scmp.ne.s32.totalorder %s81, %s83
      %p90 = scmp.eq.s32.totalorder %s26, 1
      %p91 = por %p89, %p90
      %p92 = scmp.ne.s32.totalorder %s83, %s84
      %p93 = scmp.eq.s32.totalorder %s26, 0
      %p94 = por %p92, %p93
      %p95 = scmp.ne.s32.totalorder %s83, %s84
      %p96 = scmp.eq.s32.totalorder %s27, 1
      %p97 = por %p95, %p96
      %p99 = scmp.ne.s32.totalorder %s84, %s98
      %p100 = scmp.eq.s32.totalorder %s27, 0
      %p101 = por %p99, %p100
      %s103 = sadd.s32 %s102, 1
      %p106 = scmp.eq.s32.totalorder %s21, 1
      %p107 = scmp.ne.s32.totalorder %s102, %s104
      %p108 = scmp.eq.s32.totalorder %s21, 0
      %p109 = por %p107, %p108
      %p110 = scmp.ne.s32.totalorder %s102, %s104
      %p111 = scmp.eq.s32.totalorder %s26, 1
      %p112 = por %p110, %p111
      %p113 = scmp.ne.s32.totalorder %s104, %s105
      %p114 = scmp.eq.s32.totalorder %s26, 0
      %p115 = por %p113, %p114
      %p116 = scmp.ne.s32.totalorder %s104, %s105
      %p117 = scmp.eq.s32.totalorder %s27, 1
      %p118 = por %p116, %p117
      %p120 = scmp.ne.s32.totalorder %s105, %s119
      %p121 = scmp.eq.s32.totalorder %s27, 0
      %p122 = por %p120, %p121
      %s124 = sadd.s32 %s123, 1
      %p127 = scmp.eq.s32.totalorder %s21, 1
      %p128 = scmp.ne.s32.totalorder %s123, %s125
      %p129 = scmp.eq.s32.totalorder %s21, 0
      %p130 = por %p128, %p129
      %p131 = scmp.ne.s32.totalorder %s123, %s125
      %p132 = scmp.eq.s32.totalorder %s26, 1
      %p133 = por %p131, %p132
      %p134 = scmp.ne.s32.totalorder %s125, %s126
      %p135 = scmp.eq.s32.totalorder %s26, 0
      %p136 = por %p134, %p135
      %p137 = scmp.ne.s32.totalorder %s125, %s126
      %p138 = scmp.eq.s32.totalorder %s27, 1
      %p139 = por %p137, %p138
      %p141 = scmp.ne.s32.totalorder %s126, %s140
      %p142 = scmp.eq.s32.totalorder %s27, 0
      %p143 = por %p141, %p142
      %s145 = sadd.s32 %s144, 1
      %p148 = scmp.eq.s32.totalorder %s21, 1
      %p149 = scmp.ne.s32.totalorder %s144, %s146
      %p150 = scmp.eq.s32.totalorder %s21, 0
      %p151 = por %p149, %p150
      %p152 = scmp.ne.s32.totalorder %s144, %s146
      %p153 = scmp.eq.s32.totalorder %s26, 1
      %p154 = por %p152, %p153
      %p155 = scmp.ne.s32.totalorder %s146, %s147
      %p156 = scmp.eq.s32.totalorder %s26, 0
      %p157 = por %p155, %p156
      %p158 = scmp.ne.s32.totalorder %s146, %s147
      %p159 = scmp.eq.s32.totalorder %s27, 1
      %p160 = por %p158, %p159
      %p162 = scmp.ne.s32.totalorder %s147, %s161
      %p163 = scmp.eq.s32.totalorder %s27, 0
      %p164 = por %p162, %p163
      %s166 = sadd.s32 %s165, 1
      %p169 = scmp.eq.s32.totalorder %s21, 1
      %p170 = scmp.ne.s32.totalorder %s165, %s167
      %p171 = scmp.eq.s32.totalorder %s21, 0
      %p172 = por %p170, %p171
      %p173 = scmp.ne.s32.totalorder %s165, %s167
      %p174 = scmp.eq.s32.totalorder %s26, 1
      %p175 = por %p173, %p174
      %p176 = scmp.ne.s32.totalorder %s167, %s168
      %p177 = scmp.eq.s32.totalorder %s26, 0
      %p178 = por %p176, %p177
      %p179 = scmp.ne.s32.totalorder %s167, %s168
      %p180 = scmp.eq.s32.totalorder %s27, 1
      %p181 = por %p179, %p180
      %p183 = scmp.ne.s32.totalorder %s168, %s182
      %p184 = scmp.eq.s32.totalorder %s27, 0
      %p185 = por %p183, %p184
      %s187 = sadd.s32 %s186, 1
      %p190 = scmp.eq.s32.totalorder %s21, 1
      %p191 = scmp.ne.s32.totalorder %s186, %s188
      %p192 = scmp.eq.s32.totalorder %s21, 0
      %p193 = por %p191, %p192
      %p194 = scmp.ne.s32.totalorder %s186, %s188
      %p195 = scmp.eq.s32.totalorder %s26, 1
      %p196 = por %p194, %p195
      %p197 = scmp.ne.s32.totalorder %s188, %s189
      %p198 = scmp.eq.s32.totalorder %s26, 0
      %p199 = por %p197, %p198
      %p200 = scmp.ne.s32.totalorder %s188, %s189
      %p201 = scmp.eq.s32.totalorder %s27, 1
      %p202 = por %p200, %p201
      %p204 = scmp.ne.s32.totalorder %s189, %s203
      %p205 = scmp.eq.s32.totalorder %s27, 0
      %p206 = por %p204, %p205
      %s208 = sadd.s32 %s207, 1
      %p211 = scmp.eq.s32.totalorder %s21, 1
      %p212 = scmp.ne.s32.totalorder %s207, %s209
      %p213 = scmp.eq.s32.totalorder %s21, 0
      %p214 = por %p212, %p213
      %p215 = scmp.ne.s32.totalorder %s207, %s209
      %p216 = scmp.eq.s32.totalorder %s26, 1
      %p217 = por %p215, %p216
      %p218 = scmp.ne.s32.totalorder %s209, %s210
      %p219 = scmp.eq.s32.totalorder %s26, 0
      %p220 = por %p218, %p219
      %p221 = scmp.ne.s32.totalorder %s209, %s210
      %p222 = scmp.eq.s32.totalorder %s27, 1
      %p223 = por %p221, %p222
      %p225 = scmp.ne.s32.totalorder %s210, %s224
      %p226 = scmp.eq.s32.totalorder %s27, 0
      %p227 = por %p225, %p226
      %s229 = sadd.s32 %s228, 1
      %p232 = scmp.eq.s32.totalorder %s21, 1
      %p233 = scmp.ne.s32.totalorder %s228, %s230
      %p234 = scmp.eq.s32.totalorder %s21, 0
      %p235 = por %p233, %p234
      %p236 = scmp.ne.s32.totalorder %s228, %s230
      %p237 = scmp.eq.s32.totalorder %s26, 1
      %p238 = por %p236, %p237
      %p239 = scmp.ne.s32.totalorder %s230, %s231
      %p240 = scmp.eq.s32.totalorder %s26, 0
      %p241 = por %p239, %p240
      %p242 = scmp.ne.s32.totalorder %s230, %s231
      %p243 = scmp.eq.s32.totalorder %s27, 1
      %p244 = por %p242, %p243
      %p246 = scmp.ne.s32.totalorder %s231, %s245
      %p247 = scmp.eq.s32.totalorder %s27, 0
      %p248 = por %p246, %p247
      %s250 = sadd.s32 %s249, 1
      %p253 = scmp.eq.s32.totalorder %s21, 1
      %p254 = scmp.ne.s32.totalorder %s249, %s251
      %p255 = scmp.eq.s32.totalorder %s21, 0
      %p256 = por %p254, %p255
      %p257 = scmp.ne.s32.totalorder %s249, %s251
      %p258 = scmp.eq.s32.totalorder %s26, 1
      %p259 = por %p257, %p258
      %p260 = scmp.ne.s32.totalorder %s251, %s252
      %p261 = scmp.eq.s32.totalorder %s26, 0
      %p262 = por %p260, %p261
      %p263 = scmp.ne.s32.totalorder %s251, %s252
      %p264 = scmp.eq.s32.totalorder %s27, 1
      %p265 = por %p263, %p264
      %p267 = scmp.ne.s32.totalorder %s252, %s266
      %p268 = scmp.eq.s32.totalorder %s27, 0
      %p269 = por %p267, %p268
      %s270 = ssub.s32 %s21, %s28
      %p271 = scmp.eq.s32.totalorder %s270, 0
      %s273 = sadd.s32 %s272, 1
      %s274 = scalar_select %p271, %s272, %s273
      %p277 = pneg %p271
      %p278 = scmp.eq.s32.totalorder %s21, 1
      %p279 = por %p277, %p278
      %p280 = scmp.ne.s32.totalorder %s272, %s275
      %p281 = scmp.eq.s32.totalorder %s21, 0
      %p282 = por %p280, %p281
      %p283 = scmp.ne.s32.totalorder %s272, %s275
      %p284 = scmp.eq.s32.totalorder %s26, 1
      %p285 = por %p283, %p284
      %p286 = scmp.ne.s32.totalorder %s275, %s276
      %p287 = scmp.eq.s32.totalorder %s26, 0
      %p288 = por %p286, %p287
      %p289 = scmp.ne.s32.totalorder %s275, %s276
      %p290 = scmp.eq.s32.totalorder %s27, 1
      %p291 = por %p289, %p290
      %p293 = scmp.ne.s32.totalorder %s276, %s292
      %p294 = scmp.eq.s32.totalorder %s27, 0
      %p295 = por %p293, %p294
      %s296 = ssub.s32 %s21, %s28
      %p297 = scmp.eq.s32.totalorder %s296, 0
      %s299 = sadd.s32 %s298, 1
      %s300 = scalar_select %p297, %s298, %s299
      %p303 = pneg %p297
      %p304 = scmp.eq.s32.totalorder %s21, 1
      %p305 = por %p303, %p304
      %p306 = scmp.ne.s32.totalorder %s298, %s301
      %p307 = scmp.eq.s32.totalorder %s21, 0
      %p308 = por %p306, %p307
      %p309 = scmp.ne.s32.totalorder %s298, %s301
      %p310 = scmp.eq.s32.totalorder %s26, 1
      %p311 = por %p309, %p310
      %p312 = scmp.ne.s32.totalorder %s301, %s302
      %p313 = scmp.eq.s32.totalorder %s26, 0
      %p314 = por %p312, %p313
      %p315 = scmp.ne.s32.totalorder %s301, %s302
      %p316 = scmp.eq.s32.totalorder %s27, 1
      %p317 = por %p315, %p316
      %p319 = scmp.ne.s32.totalorder %s302, %s318
      %p320 = scmp.eq.s32.totalorder %s27, 0
      %p321 = por %p319, %p320
      %p322 = scmp.le.s32.totalorder 1, %s21
      %p323 = scmp.lt.s32.totalorder %s21, 3
      %p324 = pnand %p322, %p323
      %p325 = pneg %p324
      // Predicated region
      $region9: #{recurrent_actor_forward.1} parent=5 // pred_check
        _
      $region10: #{recurrent_actor_forward.1} parent=5 // pred_check_branch
        %327 = sbr.rel (%p324) target = $region12
      $region11: #{recurrent_actor_forward.1} parent=5 // pred_region
        %s328 = ssub.s32 %s21, 1
        // Predicated region
        $region13: #{recurrent_actor_forward.1} parent=11 // pred_check
          %p329 = pneg %p94
        $region14: #{recurrent_actor_forward.1} parent=11 // pred_check_branch
          %331 = sbr.rel (%p329) target = $region16
        $region15: #{recurrent_actor_forward.1} parent=11 // pred_region
          _
        $region16: #{recurrent_actor_forward.1} parent=11 // pred_fallthru
          _
        // Predicated region
        $region17: #{recurrent_actor_forward.1} parent=11 // pred_check
          %p332 = pneg %p115
        $region18: #{recurrent_actor_forward.1} parent=11 // pred_check_branch
          %334 = sbr.rel (%p332) target = $region20
        $region19: #{recurrent_actor_forward.1} parent=11 // pred_region
          _
        $region20: #{recurrent_actor_forward.1} parent=11 // pred_fallthru
          _
        // Predicated region
        $region21: #{recurrent_actor_forward.1} parent=11 // pred_check
          %p335 = pneg %p136
        $region22: #{recurrent_actor_forward.1} parent=11 // pred_check_branch
          %337 = sbr.rel (%p335) target = $region24
        $region23: #{recurrent_actor_forward.1} parent=11 // pred_region
          %s339 = ssub.s32 2048, 2048
          %340 = vsyncadd [#allocation5], %s339
          %s341 = sshll.u32 [#allocation4], 4
          %s342 = int_to_ptr.vmem [resolvable:$true] %s341
          %347 = dma.hbm_to_vmem [thread:$0]  %s4, 2048, %s342, [#allocation5], 256, 256, 16
        $region24: #{recurrent_actor_forward.1} parent=11 // pred_fallthru
          _
        // Predicated region
        $region25: #{recurrent_actor_forward.1} parent=11 // pred_check
          %p348 = pneg %p157
        $region26: #{recurrent_actor_forward.1} parent=11 // pred_check_branch
          %350 = sbr.rel (%p348) target = $region28
        $region27: #{recurrent_actor_forward.1} parent=11 // pred_region
          %s352 = ssub.s32 1024, 1024
          %353 = vsyncadd [#allocation7], %s352
          %s354 = sshll.u32 [#allocation6], 4
          %s355 = int_to_ptr.vmem [resolvable:$true] %s354
          %360 = dma.hbm_to_vmem [thread:$0]  %s5, 1024, %s355, [#allocation7], 128, 128, 8
        $region28: #{recurrent_actor_forward.1} parent=11 // pred_fallthru
          _
        // Predicated region
        $region29: #{recurrent_actor_forward.1} parent=11 // pred_check
          %p361 = pneg %p178
        $region30: #{recurrent_actor_forward.1} parent=11 // pred_check_branch
          %363 = sbr.rel (%p361) target = $region32
        $region31: #{recurrent_actor_forward.1} parent=11 // pred_region
          _
        $region32: #{recurrent_actor_forward.1} parent=11 // pred_fallthru
          _
        // Predicated region
        $region33: #{recurrent_actor_forward.1} parent=11 // pred_check
          %p364 = pneg %p199
        $region34: #{recurrent_actor_forward.1} parent=11 // pred_check_branch
          %366 = sbr.rel (%p364) target = $region36
        $region35: #{recurrent_actor_forward.1} parent=11 // pred_region
          _
        $region36: #{recurrent_actor_forward.1} parent=11 // pred_fallthru
          _
        // Predicated region
        $region37: #{recurrent_actor_forward.1} parent=11 // pred_check
          %p367 = pneg %p220
        $region38: #{recurrent_actor_forward.1} parent=11 // pred_check_branch
          %369 = sbr.rel (%p367) target = $region40
        $region39: #{recurrent_actor_forward.1} parent=11 // pred_region
          _
        $region40: #{recurrent_actor_forward.1} parent=11 // pred_fallthru
          _
        // Predicated region
        $region41: #{recurrent_actor_forward.1} parent=11 // pred_check
          %p370 = pneg %p241
        $region42: #{recurrent_actor_forward.1} parent=11 // pred_check_branch
          %372 = sbr.rel (%p370) target = $region44
        $region43: #{recurrent_actor_forward.1} parent=11 // pred_region
          %s374 = ssub.s32 2048, 2048
          %375 = vsyncadd [#allocation7], %s374
          %s376 = sshll.u32 [#allocation8], 4
          %s377 = int_to_ptr.vmem [resolvable:$true] %s376
          %382 = dma.hbm_to_vmem [thread:$0]  %s9, 2048, %s377, [#allocation7], 64, 64, 4
        $region44: #{recurrent_actor_forward.1} parent=11 // pred_fallthru
          _
        // Predicated region
        $region45: #{recurrent_actor_forward.1} parent=11 // pred_check
          %p383 = pneg %p262
        $region46: #{recurrent_actor_forward.1} parent=11 // pred_check_branch
          %385 = sbr.rel (%p383) target = $region48
        $region47: #{recurrent_actor_forward.1} parent=11 // pred_region
          _
        $region48: #{recurrent_actor_forward.1} parent=11 // pred_fallthru
          _
      $region12: #{recurrent_actor_forward.1} parent=5 // pred_fallthru
        _
      %p386 = scmp.lt.s32.totalorder %s21, 2
      // Predicated region
      $region49: #{recurrent_actor_forward.1} parent=5 // pred_check
        %p387 = pneg %p386
      $region50: #{recurrent_actor_forward.1} parent=5 // pred_check_branch
        %389 = sbr.rel (%p387) target = $region52
      $region51: #{recurrent_actor_forward.1} parent=5 // pred_region
        // Predicated region
        $region53: #{recurrent_actor_forward.1} parent=51 // pred_check
          %p390 = pneg %p41
        $region54: #{recurrent_actor_forward.1} parent=51 // pred_check_branch
          %392 = sbr.rel (%p390) target = $region56
        $region55: #{recurrent_actor_forward.1} parent=51 // pred_region
          %s393 = sand.u32 %s31, 1
          %s394 = sand.u32 %s31, 1
          %s395 = smul.addr %s394, 64
          %s396 = scalar_lea.vmem [#allocation3], %s395
          %s397 = smul.addr %s21, 8
          %s398 = scalar_lea.vmem %s0, %s397
          // Predicated region
          $region57: #{recurrent_actor_forward.1} parent=55 // pred_check
            _
          $region58: #{recurrent_actor_forward.1} parent=55 // pred_check_branch
            %400 = sbr.rel (0) target = $region60
          $region59: #{recurrent_actor_forward.1} parent=55 // pred_region
            // Predicated region
            $region61: #{recurrent_actor_forward.1} parent=59 // pred_check
              _
            $region62: #{recurrent_actor_forward.1} parent=59 // pred_check_branch
              %402 = sbr.rel (0) target = $region64
            $region63: #{recurrent_actor_forward.1} parent=59 // pred_region
              // Predicated region
              $region76: #{recurrent_actor_forward.1} parent=63 // pred_check
                _
              $region77: #{recurrent_actor_forward.1} parent=63 // pred_check_branch
                %431 = sbr.rel (0) target = $region79
              $region78: #{recurrent_actor_forward.1} parent=63 // pred_region
                loop: start=0, step=1, limit=1
                $region80: #{recurrent_actor_forward.1} parent=78 // loop_pre_header
                  _
                $region81: #{recurrent_actor_forward.1} parent=78 // loop_header
                  %s433 = sphi 0, %s437
                  %p434 = scmp.ge.s32.totalorder %s433, 1
                  %s438 = sphi %s398, %s398
                  %s439 = sphi %s396, %s396
                $region82: #{recurrent_actor_forward.1} parent=78 // loop_header_branch
                  %436 = sbr.rel (%p434) target = $region86
                $region83: #{recurrent_actor_forward.1} parent=78 // loop_body
                  %v440 = vld [vmem:[%s438] sm:$0xff]
                  %441 = vst [vmem:[%s439] sm:$0xff] %v440
                  %v442 = vld [vmem:[%s438 + $0x10] sm:$0xff]
                  %443 = vst [vmem:[%s439 + $0x8] sm:$0xff] %v442
                  %v444 = vld [vmem:[%s438 + $0x20] sm:$0xff]
                  %445 = vst [vmem:[%s439 + $0x10] sm:$0xff] %v444
                  %v446 = vld [vmem:[%s438 + $0x30] sm:$0xff]
                  %447 = vst [vmem:[%s439 + $0x18] sm:$0xff] %v446
                  %v448 = vld [vmem:[%s438 + $0x40] sm:$0xff]
                  %449 = vst [vmem:[%s439 + $0x20] sm:$0xff] %v448
                  %v450 = vld [vmem:[%s438 + $0x50] sm:$0xff]
                  %451 = vst [vmem:[%s439 + $0x28] sm:$0xff] %v450
                  %v452 = vld [vmem:[%s438 + $0x60] sm:$0xff]
                  %453 = vst [vmem:[%s439 + $0x30] sm:$0xff] %v452
                  %v454 = vld [vmem:[%s438 + $0x70] sm:$0xff]
                  %455 = vst [vmem:[%s439 + $0x38] sm:$0xff] %v454
                $region84: #{recurrent_actor_forward.1} parent=78 // loop_footer
                  %s437 = sadd.s32 1, %s433
                $region85: #{recurrent_actor_forward.1} parent=78 // loop_footer_branch
                  %432 = sbr.rel target = $region81
                $region86: #{recurrent_actor_forward.1} parent=78 // loop_exit
                  _
              $region79: #{recurrent_actor_forward.1} parent=63 // pred_fallthru
                _
              // Predicated region
              $region87: #{recurrent_actor_forward.1} parent=63 // pred_check
                _
              $region88: #{recurrent_actor_forward.1} parent=63 // pred_check_branch
                %457 = sbr.rel target = $region90
              $region89: #{recurrent_actor_forward.1} parent=63 // pred_region
                _
              $region90: #{recurrent_actor_forward.1} parent=63 // pred_fallthru
                _
            $region64: #{recurrent_actor_forward.1} parent=59 // pred_fallthru
              _
            // Predicated region
            $region65: #{recurrent_actor_forward.1} parent=59 // pred_check
              _
            $region66: #{recurrent_actor_forward.1} parent=59 // pred_check_branch
              %404 = sbr.rel target = $region68
            $region67: #{recurrent_actor_forward.1} parent=59 // pred_region
              loop: start=0, step=1, limit=1
              $region69: #{recurrent_actor_forward.1} parent=67 // loop_pre_header
                _
              $region70: #{recurrent_actor_forward.1} parent=67 // loop_header
                %s407 = sphi 0, %s411
                %p408 = scmp.ge.s32.totalorder %s407, 1
                %s412 = sphi %s398, %s398
                %s413 = sphi %s396, %s396
              $region71: #{recurrent_actor_forward.1} parent=67 // loop_header_branch
                %410 = sbr.rel (%p408) target = $region75
              $region72: #{recurrent_actor_forward.1} parent=67 // loop_body
                %v414 = vld [vmem:[%s412] sm:$0xff]
                %415 = vst [vmem:[%s413] sm:$0xff] %v414
                %v416 = vld [vmem:[%s412 + $0x10] sm:$0xff]
                %417 = vst [vmem:[%s413 + $0x8] sm:$0xff] %v416
                %v418 = vld [vmem:[%s412 + $0x20] sm:$0xff]
                %419 = vst [vmem:[%s413 + $0x10] sm:$0xff] %v418
                %v420 = vld [vmem:[%s412 + $0x30] sm:$0xff]
                %421 = vst [vmem:[%s413 + $0x18] sm:$0xff] %v420
                %v422 = vld [vmem:[%s412 + $0x40] sm:$0xff]
                %423 = vst [vmem:[%s413 + $0x20] sm:$0xff] %v422
                %v424 = vld [vmem:[%s412 + $0x50] sm:$0xff]
                %425 = vst [vmem:[%s413 + $0x28] sm:$0xff] %v424
                %v426 = vld [vmem:[%s412 + $0x60] sm:$0xff]
                %427 = vst [vmem:[%s413 + $0x30] sm:$0xff] %v426
                %v428 = vld [vmem:[%s412 + $0x70] sm:$0xff]
                %429 = vst [vmem:[%s413 + $0x38] sm:$0xff] %v428
              $region73: #{recurrent_actor_forward.1} parent=67 // loop_footer
                %s411 = sadd.s32 1, %s407
              $region74: #{recurrent_actor_forward.1} parent=67 // loop_footer_branch
                %406 = sbr.rel target = $region70
              $region75: #{recurrent_actor_forward.1} parent=67 // loop_exit
                _
            $region68: #{recurrent_actor_forward.1} parent=59 // pred_fallthru
              _
          $region60: #{recurrent_actor_forward.1} parent=55 // pred_fallthru
            _
          %458 = vnop
        $region56: #{recurrent_actor_forward.1} parent=51 // pred_fallthru
          _
        // Predicated region
        $region91: #{recurrent_actor_forward.1} parent=51 // pred_check
          %p459 = pneg %p67
        $region92: #{recurrent_actor_forward.1} parent=51 // pred_check_branch
          %461 = sbr.rel (%p459) target = $region94
        $region93: #{recurrent_actor_forward.1} parent=51 // pred_region
          %p462 = scmp.lt.s32.totalorder %s21, 1
          %s463 = scalar_select %p462, %s21, 1
          %s464 = smul.addr %s463, 8
          %s465 = scalar_lea.vmem %s1, %s464
        $region94: #{recurrent_actor_forward.1} parent=51 // pred_fallthru
          _
      $region52: #{recurrent_actor_forward.1} parent=5 // pred_fallthru
        _
      %p466 = scmp.le.s32.totalorder 1, %s21
      %p467 = scmp.lt.s32.totalorder %s21, 3
      %p468 = pnand %p466, %p467
      %p469 = pneg %p468
      // Predicated region
      $region95: #{recurrent_actor_forward.1} parent=5 // pred_check
        _
      $region96: #{recurrent_actor_forward.1} parent=5 // pred_check_branch
        %471 = sbr.rel (%p468) target = $region98
      $region97: #{recurrent_actor_forward.1} parent=5 // pred_region
        %s472 = ssub.s32 %s21, 1
        %s473 = sand.u32 %s34, 1
        %s474 = sand.u32 %s34, 1
        %s475 = smul.addr %s474, 64
        %s476 = scalar_lea.vmem [#allocation3], %s475
        // Predicated region
        $region99: #{recurrent_actor_forward.1} parent=97 // pred_check
          %p477 = pneg %p47
        $region100: #{recurrent_actor_forward.1} parent=97 // pred_check_branch
          %479 = sbr.rel (%p477) target = $region102
        $region101: #{recurrent_actor_forward.1} parent=97 // pred_region
          _
        $region102: #{recurrent_actor_forward.1} parent=97 // pred_fallthru
          _
        // Predicated region
        $region103: #{recurrent_actor_forward.1} parent=97 // pred_check
          %p480 = pneg %p136
        $region104: #{recurrent_actor_forward.1} parent=97 // pred_check_branch
          %482 = sbr.rel (%p480) target = $region106
        $region105: #{recurrent_actor_forward.1} parent=97 // pred_region
          %483 = dma.done [#allocation5], 2048
        $region106: #{recurrent_actor_forward.1} parent=97 // pred_fallthru
          _
        // Predicated region
        $region107: #{recurrent_actor_forward.1} parent=97 // pred_check
          %p484 = pneg %p157
        $region108: #{recurrent_actor_forward.1} parent=97 // pred_check_branch
          %486 = sbr.rel (%p484) target = $region110
        $region109: #{recurrent_actor_forward.1} parent=97 // pred_region
          %487 = dma.done [#allocation7], 1024
        $region110: #{recurrent_actor_forward.1} parent=97 // pred_fallthru
          _
        // Predicated region
        $region111: #{recurrent_actor_forward.1} parent=97 // pred_check
          %p488 = pneg %p241
        $region112: #{recurrent_actor_forward.1} parent=97 // pred_check_branch
          %490 = sbr.rel (%p488) target = $region114
        $region113: #{recurrent_actor_forward.1} parent=97 // pred_region
          %491 = dma.done [#allocation7], 2048
        $region114: #{recurrent_actor_forward.1} parent=97 // pred_fallthru
          _
        %s492 = sand.u32 %s34, 1
        %s493 = sand.u32 %s34, 1
        %s494 = smul.addr %s493, 64
        %s495 = scalar_lea.vmem [#allocation3], %s494
        %p496 = pneg %p47
        %p497 = pneg %p44
        %p498 = scmp.lt.s32.totalorder %s26, 1
        %s499 = scalar_select %p498, %s26, 1
        %s500 = smul.addr %s499, 8
        %s501 = scalar_lea.vmem %s1, %s500
        %p502 = pneg %p73
        %p503 = pneg %p70
        %p504 = pneg %p94
        %p505 = pneg %p91
        %p506 = pneg %p115
        %p507 = pneg %p112
        %p508 = pneg %p136
        %p509 = pneg %p133
        %p510 = pneg %p157
        %p511 = pneg %p154
        %p512 = pneg %p178
        %p513 = pneg %p175
        %p514 = pneg %p199
        %p515 = pneg %p196
        %p516 = pneg %p220
        %p517 = pneg %p217
        %p518 = pneg %p241
        %p519 = pneg %p238
        %p520 = pneg %p262
        %p521 = pneg %p259
        %p522 = pneg %p288
        %p523 = pneg %p285
        %s524 = sand.u32 %s275, 1
        %s525 = sand.u32 %s275, 1
        %s526 = smul.addr %s525, 64
        %s527 = scalar_lea.vmem [#allocation9], %s526
        %p528 = pneg %p314
        %p529 = pneg %p311
        %p530 = scmp.lt.s32.totalorder %s26, 1
        %s531 = scalar_select %p530, %s26, 1
        %s532 = smul.addr %s531, 8
        %s533 = scalar_lea.vmem %s12, %s532
        %p534 = scmp.lt.s32.totalorder %s26, 1
        %s535 = scalar_select %p534, %s26, 1
        %s536 = smul.addr %s535, 8
        %s537 = scalar_lea.vmem %s1, %s536
        %p538 = scmp.lt.s32.totalorder %s26, 1
        %s539 = scalar_select %p538, %s26, 1
        %s540 = smul.addr %s539, 8
        %s541 = scalar_lea.vmem %s12, %s540
        %v543 = vld [vmem:[%s476] sm:$0xff]
        %v544 = vld [vmem:[%s476 + $0x8] sm:$0xff]
        %v545 = vld [vmem:[%s476 + $0x10] sm:$0xff]
        %v546 = vld [vmem:[%s476 + $0x18] sm:$0xff]
        %v547 = vld [vmem:[%s476 + $0x20] sm:$0xff]
        %v548 = vld [vmem:[%s476 + $0x28] sm:$0xff]
        %v549 = vld [vmem:[%s476 + $0x30] sm:$0xff]
        %v550 = vld [vmem:[%s476 + $0x38] sm:$0xff]
        %v551 = vpack.c.bf16 %v544, %v543
        %v552 = vpack.c.bf16 %v546, %v545
        %v553 = vpack.c.bf16 %v548, %v547
        %v554 = vpack.c.bf16 %v550, %v549
        %v555 = vld [vmem:[%s2] sm:$0xff]
        %v556 = vld [vmem:[%s2 + $0x8] sm:$0xff]
        %v557 = vld [vmem:[%s2 + $0x10] sm:$0xff]
        %v558 = vld [vmem:[%s2 + $0x18] sm:$0xff]
        %v559 = vld [vmem:[%s2 + $0x20] sm:$0xff]
        %v560 = vld [vmem:[%s2 + $0x28] sm:$0xff]
        %v561 = vld [vmem:[%s2 + $0x30] sm:$0xff]
        %v562 = vld [vmem:[%s2 + $0x38] sm:$0xff]
        %v563 = vld [vmem:[%s3] sm:$0xf]
        %v565 = vlaneseq
        %v566 = vshrl.u32 %v565, 7
        %v567 = vsub.s32 0, %v566
        %v568 = vrot.slane %v563, %v567
        %v569 = vlaneseq
        %v570 = vshrl.u32 %v569, 7
        %v571 = vsub.s32 1, %v570
        %v572 = vrot.slane %v563, %v571
        %v573 = vlaneseq
        %v574 = vshrl.u32 %v573, 7
        %v575 = vsub.s32 2, %v574
        %v576 = vrot.slane %v563, %v575
        %v577 = vlaneseq
        %v578 = vshrl.u32 %v577, 7
        %v579 = vsub.s32 3, %v578
        %v580 = vrot.slane %v563, %v579
        %v593 = vunpack.c.l.b16 %v555
        %v594 = vunpack.c.h.b16 %v555
        %v595 = vunpack.c.l.b16 %v556
        %v596 = vunpack.c.h.b16 %v556
        %v597 = vunpack.c.l.b16 %v557
        %v598 = vunpack.c.h.b16 %v557
        %v599 = vunpack.c.l.b16 %v558
        %v600 = vunpack.c.h.b16 %v558
        %v601 = vunpack.c.l.b16 %v559
        %v602 = vunpack.c.h.b16 %v559
        %v603 = vunpack.c.l.b16 %v560
        %v604 = vunpack.c.h.b16 %v560
        %v605 = vunpack.c.l.b16 %v561
        %v606 = vunpack.c.h.b16 %v561
        %v607 = vunpack.c.l.b16 %v562
        %v608 = vunpack.c.h.b16 %v562
        %v609 = vpack.c.b16 %v597, %v593
        %v610 = vpack.c.b16 %v598, %v594
        %v611 = vpack.c.b16 %v599, %v595
        %v612 = vpack.c.b16 %v600, %v596
        %v613 = vpack.c.b16 %v605, %v601
        %v614 = vpack.c.b16 %v606, %v602
        %v615 = vpack.c.b16 %v607, %v603
        %v616 = vpack.c.b16 %v608, %v604
        %vm625 = vcmask 261120
        %v627 = vsel %vm625, %v551, 0
        %v630 = vsel %vm625, %v552, 0
        %v633 = vsel %vm625, %v553, 0
        %v636 = vsel %vm625, %v554, 0
        %638 = vmatprep.subr.bf16.mxu0 %v610
        %639 = vmatpush1.bf16.msra.mxu0 %v609
        %640 = vmatprep.subr.bf16.mxu0 %v614
        %641 = vmatpush1.bf16.msra.mxu0 %v613
        %642 = vmatprep.subr.bf16.mxu0 0
        %643 = vmatpush1.bf16.msra.mxu0 0
        %644 = vmatprep.subr.bf16.mxu0 0
        %645 = vmatpush1.bf16.msra.mxu0 0
        %646 = vmatprep.subr.bf16.mxu0 0
        %647 = vmatpush1.bf16.msra.mxu0 0
        %648 = vmatprep.subr.bf16.mxu0 0
        %649 = vmatpush1.bf16.msra.mxu0 0
        %650 = vmatprep.subr.bf16.mxu0 0
        %651 = vmatpush1.bf16.msra.mxu0 0
        %652 = vmatprep.subr.bf16.mxu0 0
        %653 = vmatpush1.bf16.msra.mxu0 0
        %654 = vmatprep.subr.bf16.mxu0 0
        %655 = vmatpush1.bf16.msra.mxu0 0
        %656 = vmatprep.subr.bf16.mxu0 0
        %657 = vmatpush1.bf16.msra.mxu0 0
        %658 = vmatprep.subr.bf16.mxu0 0
        %659 = vmatpush1.bf16.msra.mxu0 0
        %660 = vmatprep.subr.bf16.mxu0 0
        %661 = vmatpush1.bf16.msra.mxu0 0
        %662 = vmatprep.subr.bf16.mxu0 0
        %663 = vmatpush1.bf16.msra.mxu0 0
        %664 = vmatprep.subr.bf16.mxu0 0
        %665 = vmatpush1.bf16.msra.mxu0 0
        %666 = vmatprep.subr.bf16.mxu0 0
        %667 = vmatpush1.bf16.msra.mxu0 0
        %668 = vmatprep.subr.bf16.mxu0 0
        %669 = vmatpush1.bf16.msra.mxu0 0
        %670 = vmatprep.mubr.bf16.mxu0 0
        %671 = vmatmul.mubr.bf16.gmra.mrb[0].mxu0 %v627
        %v672 = vpop.f32.mrb[0].mxu0
        %v673 = vadd.f32 %v568, %v672
        %v674 = vpop.f32.mrb[0].mxu0
        %v675 = vadd.f32 %v572, %v674
        %v676 = vpop.f32.mrb[0].mxu0
        %v677 = vadd.f32 %v568, %v676
        %v678 = vpop.f32.mrb[0].mxu0
        %v679 = vadd.f32 %v572, %v678
        %680 = vmatprep.mubr.bf16.mxu0 0
        %681 = vmatmul.mubr.bf16.gmra.mrb[0].mxu0 %v630
        %v682 = vpop.f32.mrb[0].mxu0
        %v683 = vadd.f32 %v568, %v682
        %v684 = vpop.f32.mrb[0].mxu0
        %v685 = vadd.f32 %v572, %v684
        %v686 = vpop.f32.mrb[0].mxu0
        %v687 = vadd.f32 %v568, %v686
        %v688 = vpop.f32.mrb[0].mxu0
        %v689 = vadd.f32 %v572, %v688
        %690 = vmatprep.mubr.bf16.mxu0 0
        %691 = vmatmul.mubr.bf16.gmra.mrb[0].mxu0 %v633
        %v692 = vpop.f32.mrb[0].mxu0
        %v693 = vadd.f32 %v568, %v692
        %v694 = vpop.f32.mrb[0].mxu0
        %v695 = vadd.f32 %v572, %v694
        %v696 = vpop.f32.mrb[0].mxu0
        %v697 = vadd.f32 %v568, %v696
        %v698 = vpop.f32.mrb[0].mxu0
        %v699 = vadd.f32 %v572, %v698
        %700 = vmatprep.mubr.bf16.mxu0 0
        %701 = vmatmul.mubr.bf16.gmra.mrb[0].mxu0 %v636
        %v702 = vpop.f32.mrb[0].mxu0
        %v703 = vadd.f32 %v568, %v702
        %v704 = vpop.f32.mrb[0].mxu0
        %v705 = vadd.f32 %v572, %v704
        %v706 = vpop.f32.mrb[0].mxu0
        %v707 = vadd.f32 %v568, %v706
        %v708 = vpop.f32.mrb[0].mxu0
        %v709 = vadd.f32 %v572, %v708
        %710 = vdwg.mxu0
        %711 = vmatprep.subr.bf16.mxu0 %v612
        %712 = vmatpush1.bf16.msra.mxu0 %v611
        %713 = vmatprep.subr.bf16.mxu0 %v616
        %714 = vmatpush1.bf16.msra.mxu0 %v615
        %715 = vmatprep.subr.bf16.mxu0 0
        %716 = vmatpush1.bf16.msra.mxu0 0
        %717 = vmatprep.subr.bf16.mxu0 0
        %718 = vmatpush1.bf16.msra.mxu0 0
        %719 = vmatprep.subr.bf16.mxu0 0
        %720 = vmatpush1.bf16.msra.mxu0 0
        %721 = vmatprep.subr.bf16.mxu0 0
        %722 = vmatpush1.bf16.msra.mxu0 0
        %723 = vmatprep.subr.bf16.mxu0 0
        %724 = vmatpush1.bf16.msra.mxu0 0
        %725 = vmatprep.subr.bf16.mxu0 0
        %726 = vmatpush1.bf16.msra.mxu0 0
        %727 = vmatprep.subr.bf16.mxu0 0
        %728 = vmatpush1.bf16.msra.mxu0 0
        %729 = vmatprep.subr.bf16.mxu0 0
        %730 = vmatpush1.bf16.msra.mxu0 0
        %731 = vmatprep.subr.bf16.mxu0 0
        %732 = vmatpush1.bf16.msra.mxu0 0
        %733 = vmatprep.subr.bf16.mxu0 0
        %734 = vmatpush1.bf16.msra.mxu0 0
        %735 = vmatprep.subr.bf16.mxu0 0
        %736 = vmatpush1.bf16.msra.mxu0 0
        %737 = vmatprep.subr.bf16.mxu0 0
        %738 = vmatpush1.bf16.msra.mxu0 0
        %739 = vmatprep.subr.bf16.mxu0 0
        %740 = vmatpush1.bf16.msra.mxu0 0
        %741 = vmatprep.subr.bf16.mxu0 0
        %742 = vmatpush1.bf16.msra.mxu0 0
        %743 = vmatprep.mubr.bf16.mxu0 0
        %744 = vmatmul.mubr.bf16.gmra.mrb[0].mxu0 %v627
        %v745 = vpop.f32.mrb[0].mxu0
        %v746 = vadd.f32 %v576, %v745
        %v747 = vpop.f32.mrb[0].mxu0
        %v748 = vadd.f32 %v580, %v747
        %v749 = vpop.f32.mrb[0].mxu0
        %v750 = vadd.f32 %v576, %v749
        %v751 = vpop.f32.mrb[0].mxu0
        %v752 = vadd.f32 %v580, %v751
        %753 = vmatprep.mubr.bf16.mxu0 0
        %754 = vmatmul.mubr.bf16.gmra.mrb[0].mxu0 %v630
        %v755 = vpop.f32.mrb[0].mxu0
        %v756 = vadd.f32 %v576, %v755
        %v757 = vpop.f32.mrb[0].mxu0
        %v758 = vadd.f32 %v580, %v757
        %v759 = vpop.f32.mrb[0].mxu0
        %v760 = vadd.f32 %v576, %v759
        %v761 = vpop.f32.mrb[0].mxu0
        %v762 = vadd.f32 %v580, %v761
        %763 = vmatprep.mubr.bf16.mxu0 0
        %764 = vmatmul.mubr.bf16.gmra.mrb[0].mxu0 %v633
        %v765 = vpop.f32.mrb[0].mxu0
        %v766 = vadd.f32 %v576, %v765
        %v767 = vpop.f32.mrb[0].mxu0
        %v768 = vadd.f32 %v580, %v767
        %v769 = vpop.f32.mrb[0].mxu0
        %v770 = vadd.f32 %v576, %v769
        %v771 = vpop.f32.mrb[0].mxu0
        %v772 = vadd.f32 %v580, %v771
        %773 = vmatprep.mubr.bf16.mxu0 0
        %774 = vmatmul.mubr.bf16.gmra.mrb[0].mxu0 %v636
        %v775 = vpop.f32.mrb[0].mxu0
        %v776 = vadd.f32 %v576, %v775
        %v777 = vpop.f32.mrb[0].mxu0
        %v778 = vadd.f32 %v580, %v777
        %v779 = vpop.f32.mrb[0].mxu0
        %v780 = vadd.f32 %v576, %v779
        %v781 = vpop.f32.mrb[0].mxu0
        %v782 = vadd.f32 %v580, %v781
        %783 = vdwg.mxu0
        %v784 = vld [vmem:[#allocation4] sm:$0xff]
        %v785 = vld [vmem:[#allocation4 + $0x8] sm:$0xff]
        %v786 = vld [vmem:[#allocation4 + $0x10] sm:$0xff]
        %v787 = vld [vmem:[#allocation4 + $0x18] sm:$0xff]
        %v788 = vld [vmem:[#allocation4 + $0x20] sm:$0xff]
        %v789 = vld [vmem:[#allocation4 + $0x28] sm:$0xff]
        %v790 = vld [vmem:[#allocation4 + $0x30] sm:$0xff]
        %v791 = vld [vmem:[#allocation4 + $0x38] sm:$0xff]
        %v792 = vld [vmem:[#allocation4 + $0x40] sm:$0xff]
        %v793 = vld [vmem:[#allocation4 + $0x48] sm:$0xff]
        %v794 = vld [vmem:[#allocation4 + $0x50] sm:$0xff]
        %v795 = vld [vmem:[#allocation4 + $0x58] sm:$0xff]
        %v796 = vld [vmem:[#allocation4 + $0x60] sm:$0xff]
        %v797 = vld [vmem:[#allocation4 + $0x68] sm:$0xff]
        %v798 = vld [vmem:[#allocation4 + $0x70] sm:$0xff]
        %v799 = vld [vmem:[#allocation4 + $0x78] sm:$0xff]
        %v800 = vld [vmem:[%s537] sm:$0xff]
        %v801 = vlaneseq
        %v802 = vand.u32 %v801, 127
        %vm803 = vcmp.lt.s32.totalorder %v802, 32
        %v804 = vpack.c.bf16 %v800, %v800
        %v821 = vunpack.c.l.b16 %v784
        %v822 = vunpack.c.h.b16 %v784
        %v823 = vunpack.c.l.b16 %v785
        %v824 = vunpack.c.h.b16 %v785
        %v825 = vunpack.c.l.b16 %v786
        %v826 = vunpack.c.h.b16 %v786
        %v827 = vunpack.c.l.b16 %v787
        %v828 = vunpack.c.h.b16 %v787
        %v829 = vunpack.c.l.b16 %v788
        %v830 = vunpack.c.h.b16 %v788
        %v831 = vunpack.c.l.b16 %v789
        %v832 = vunpack.c.h.b16 %v789
        %v833 = vunpack.c.l.b16 %v790
        %v834 = vunpack.c.h.b16 %v790
        %v835 = vunpack.c.l.b16 %v791
        %v836 = vunpack.c.h.b16 %v791
        %v837 = vunpack.c.l.b16 %v792
        %v838 = vunpack.c.h.b16 %v792
        %v839 = vunpack.c.l.b16 %v793
        %v840 = vunpack.c.h.b16 %v793
        %v841 = vunpack.c.l.b16 %v794
        %v842 = vunpack.c.h.b16 %v794
        %v843 = vunpack.c.l.b16 %v795
        %v844 = vunpack.c.h.b16 %v795
        %v845 = vunpack.c.l.b16 %v796
        %v846 = vunpack.c.h.b16 %v796
        %v847 = vunpack.c.l.b16 %v797
        %v848 = vunpack.c.h.b16 %v797
        %v849 = vunpack.c.l.b16 %v798
        %v850 = vunpack.c.h.b16 %v798
        %v851 = vunpack.c.l.b16 %v799
        %v852 = vunpack.c.h.b16 %v799
        %v853 = vpack.c.b16 %v825, %v821
        %v854 = vpack.c.b16 %v826, %v822
        %v855 = vpack.c.b16 %v827, %v823
        %v856 = vpack.c.b16 %v828, %v824
        %v857 = vpack.c.b16 %v833, %v829
        %v858 = vpack.c.b16 %v834, %v830
        %v859 = vpack.c.b16 %v835, %v831
        %v860 = vpack.c.b16 %v836, %v832
        %v861 = vpack.c.b16 %v841, %v837
        %v862 = vpack.c.b16 %v842, %v838
        %v863 = vpack.c.b16 %v843, %v839
        %v864 = vpack.c.b16 %v844, %v840
        %v865 = vpack.c.b16 %v849, %v845
        %v866 = vpack.c.b16 %v850, %v846
        %v867 = vpack.c.b16 %v851, %v847
        %v868 = vpack.c.b16 %v852, %v848
        %vm885 = vcmask 523264
        %v887 = vsel %vm885, %v804, 0
        %889 = vmatprep.subr.bf16.mxu0 %v854
        %890 = vmatpush1.bf16.msra.mxu0 %v853
        %891 = vmatprep.subr.bf16.mxu0 %v858
        %892 = vmatpush1.bf16.msra.mxu0 %v857
        %893 = vmatprep.subr.bf16.mxu0 %v862
        %894 = vmatpush1.bf16.msra.mxu0 %v861
        %895 = vmatprep.subr.bf16.mxu0 %v866
        %896 = vmatpush1.bf16.msra.mxu0 %v865
        %897 = vmatprep.subr.bf16.mxu0 0
        %898 = vmatpush1.bf16.msra.mxu0 0
        %899 = vmatprep.subr.bf16.mxu0 0
        %900 = vmatpush1.bf16.msra.mxu0 0
        %901 = vmatprep.subr.bf16.mxu0 0
        %902 = vmatpush1.bf16.msra.mxu0 0
        %903 = vmatprep.subr.bf16.mxu0 0
        %904 = vmatpush1.bf16.msra.mxu0 0
        %905 = vmatprep.subr.bf16.mxu0 0
        %906 = vmatpush1.bf16.msra.mxu0 0
        %907 = vmatprep.subr.bf16.mxu0 0
        %908 = vmatpush1.bf16.msra.mxu0 0
        %909 = vmatprep.subr.bf16.mxu0 0
        %910 = vmatpush1.bf16.msra.mxu0 0
        %911 = vmatprep.subr.bf16.mxu0 0
        %912 = vmatpush1.bf16.msra.mxu0 0
        %913 = vmatprep.subr.bf16.mxu0 0
        %914 = vmatpush1.bf16.msra.mxu0 0
        %915 = vmatprep.subr.bf16.mxu0 0
        %916 = vmatpush1.bf16.msra.mxu0 0
        %917 = vmatprep.subr.bf16.mxu0 0
        %918 = vmatpush1.bf16.msra.mxu0 0
        %919 = vmatprep.subr.bf16.mxu0 0
        %920 = vmatpush1.bf16.msra.mxu0 0
        %921 = vmatprep.mubr.bf16.mxu0 0
        %922 = vmatmul.mubr.bf16.gmra.mrb[0].mxu0 %v887
        %v923 = vpop.f32.mrb[0].mxu0
        %v924 = vadd.f32 %v673, %v923
        %v925 = vpop.f32.mrb[0].mxu0
        %v926 = vadd.f32 %v675, %v925
        %v927 = vpop.f32.mrb[0].mxu0
        %v928 = vpop.f32.mrb[0].mxu0
        %929 = vdwg.mxu0
        %930 = vmatprep.subr.bf16.mxu0 %v856
        %931 = vmatpush1.bf16.msra.mxu0 %v855
        %932 = vmatprep.subr.bf16.mxu0 %v860
        %933 = vmatpush1.bf16.msra.mxu0 %v859
        %934 = vmatprep.subr.bf16.mxu0 %v864
        %935 = vmatpush1.bf16.msra.mxu0 %v863
        %936 = vmatprep.subr.bf16.mxu0 %v868
        %937 = vmatpush1.bf16.msra.mxu0 %v867
        %938 = vmatprep.subr.bf16.mxu0 0
        %939 = vmatpush1.bf16.msra.mxu0 0
        %940 = vmatprep.subr.bf16.mxu0 0
        %941 = vmatpush1.bf16.msra.mxu0 0
        %942 = vmatprep.subr.bf16.mxu0 0
        %943 = vmatpush1.bf16.msra.mxu0 0
        %944 = vmatprep.subr.bf16.mxu0 0
        %945 = vmatpush1.bf16.msra.mxu0 0
        %946 = vmatprep.subr.bf16.mxu0 0
        %947 = vmatpush1.bf16.msra.mxu0 0
        %948 = vmatprep.subr.bf16.mxu0 0
        %949 = vmatpush1.bf16.msra.mxu0 0
        %950 = vmatprep.subr.bf16.mxu0 0
        %951 = vmatpush1.bf16.msra.mxu0 0
        %952 = vmatprep.subr.bf16.mxu0 0
        %953 = vmatpush1.bf16.msra.mxu0 0
        %954 = vmatprep.subr.bf16.mxu0 0
        %955 = vmatpush1.bf16.msra.mxu0 0
        %956 = vmatprep.subr.bf16.mxu0 0
        %957 = vmatpush1.bf16.msra.mxu0 0
        %958 = vmatprep.subr.bf16.mxu0 0
        %959 = vmatpush1.bf16.msra.mxu0 0
        %960 = vmatprep.subr.bf16.mxu0 0
        %961 = vmatpush1.bf16.msra.mxu0 0
        %962 = vmatprep.mubr.bf16.mxu0 0
        %963 = vmatmul.mubr.bf16.gmra.mrb[0].mxu0 %v887
        %v964 = vpop.f32.mrb[0].mxu0
        %v965 = vadd.f32 %v746, %v964
        %v966 = vpop.f32.mrb[0].mxu0
        %v967 = vadd.f32 %v748, %v966
        %v968 = vpop.f32.mrb[0].mxu0
        %v969 = vpop.f32.mrb[0].mxu0
        %970 = vdwg.mxu0
        %v971 = vxor.u32 %v924, 2147483648
        %v972 = vmul.f32 %v971, 1.442695
        %v973 = vpow.pop %v972
        %v974 = vadd.f32 %v973, 1.0
        %v975 = vrcp.pop %v974
        %v976 = vmul.f32 1.0, %v975
        %v977 = vxor.u32 %v926, 2147483648
        %v978 = vmul.f32 %v977, 1.442695
        %v979 = vpow.pop %v978
        %v980 = vadd.f32 %v979, 1.0
        %v981 = vrcp.pop %v980
        %v982 = vmul.f32 1.0, %v981
        %v983 = vmul.f32 %v976, %v965
        %v984 = vadd.f32 %v967, %v983
        %v985 = vtanh.pop %v984
        %v986 = vsub.f32 %v800, %v985
        %v987 = vmul.f32 %v982, %v986
        %v988 = vadd.f32 %v985, %v987
        %v989 = vsel %vm803, %v988, %v800
        %v990 = vpack.c.bf16 %v989, %v989
        %v992 = vsel %vm885, %v990, 0
        %994 = vmatprep.subr.bf16.mxu0 %v854
        %995 = vmatpush1.bf16.msra.mxu0 %v853
        %996 = vmatprep.subr.bf16.mxu0 %v858
        %997 = vmatpush1.bf16.msra.mxu0 %v857
        %998 = vmatprep.subr.bf16.mxu0 %v862
        %999 = vmatpush1.bf16.msra.mxu0 %v861
        %1000 = vmatprep.subr.bf16.mxu0 %v866
        %1001 = vmatpush1.bf16.msra.mxu0 %v865
        %1002 = vmatprep.subr.bf16.mxu0 0
        %1003 = vmatpush1.bf16.msra.mxu0 0
        %1004 = vmatprep.subr.bf16.mxu0 0
        %1005 = vmatpush1.bf16.msra.mxu0 0
        %1006 = vmatprep.subr.bf16.mxu0 0
        %1007 = vmatpush1.bf16.msra.mxu0 0
        %1008 = vmatprep.subr.bf16.mxu0 0
        %1009 = vmatpush1.bf16.msra.mxu0 0
        %1010 = vmatprep.subr.bf16.mxu0 0
        %1011 = vmatpush1.bf16.msra.mxu0 0
        %1012 = vmatprep.subr.bf16.mxu0 0
        %1013 = vmatpush1.bf16.msra.mxu0 0
        %1014 = vmatprep.subr.bf16.mxu0 0
        %1015 = vmatpush1.bf16.msra.mxu0 0
        %1016 = vmatprep.subr.bf16.mxu0 0
        %1017 = vmatpush1.bf16.msra.mxu0 0
        %1018 = vmatprep.subr.bf16.mxu0 0
        %1019 = vmatpush1.bf16.msra.mxu0 0
        %1020 = vmatprep.subr.bf16.mxu0 0
        %1021 = vmatpush1.bf16.msra.mxu0 0
        %1022 = vmatprep.subr.bf16.mxu0 0
        %1023 = vmatpush1.bf16.msra.mxu0 0
        %1024 = vmatprep.subr.bf16.mxu0 0
        %1025 = vmatpush1.bf16.msra.mxu0 0
        %1026 = vmatprep.mubr.bf16.mxu0 0
        %1027 = vmatmul.mubr.bf16.gmra.mrb[0].mxu0 %v992
        %v1028 = vpop.f32.mrb[0].mxu0
        %v1029 = vadd.f32 %v677, %v1028
        %v1030 = vpop.f32.mrb[0].mxu0
        %v1031 = vadd.f32 %v679, %v1030
        %v1032 = vpop.f32.mrb[0].mxu0
        %v1033 = vpop.f32.mrb[0].mxu0
        %1034 = vdwg.mxu0
        %1035 = vmatprep.subr.bf16.mxu0 %v856
        %1036 = vmatpush1.bf16.msra.mxu0 %v855
        %1037 = vmatprep.subr.bf16.mxu0 %v860
        %1038 = vmatpush1.bf16.msra.mxu0 %v859
        %1039 = vmatprep.subr.bf16.mxu0 %v864
        %1040 = vmatpush1.bf16.msra.mxu0 %v863
        %1041 = vmatprep.subr.bf16.mxu0 %v868
        %1042 = vmatpush1.bf16.msra.mxu0 %v867
        %1043 = vmatprep.subr.bf16.mxu0 0
        %1044 = vmatpush1.bf16.msra.mxu0 0
        %1045 = vmatprep.subr.bf16.mxu0 0
        %1046 = vmatpush1.bf16.msra.mxu0 0
        %1047 = vmatprep.subr.bf16.mxu0 0
        %1048 = vmatpush1.bf16.msra.mxu0 0
        %1049 = vmatprep.subr.bf16.mxu0 0
        %1050 = vmatpush1.bf16.msra.mxu0 0
        %1051 = vmatprep.subr.bf16.mxu0 0
        %1052 = vmatpush1.bf16.msra.mxu0 0
        %1053 = vmatprep.subr.bf16.mxu0 0
        %1054 = vmatpush1.bf16.msra.mxu0 0
        %1055 = vmatprep.subr.bf16.mxu0 0
        %1056 = vmatpush1.bf16.msra.mxu0 0
        %1057 = vmatprep.subr.bf16.mxu0 0
        %1058 = vmatpush1.bf16.msra.mxu0 0
        %1059 = vmatprep.subr.bf16.mxu0 0
        %1060 = vmatpush1.bf16.msra.mxu0 0
        %1061 = vmatprep.subr.bf16.mxu0 0
        %1062 = vmatpush1.bf16.msra.mxu0 0
        %1063 = vmatprep.subr.bf16.mxu0 0
        %1064 = vmatpush1.bf16.msra.mxu0 0
        %1065 = vmatprep.subr.bf16.mxu0 0
        %1066 = vmatpush1.bf16.msra.mxu0 0
        %1067 = vmatprep.mubr.bf16.mxu0 0
        %1068 = vmatmul.mubr.bf16.gmra.mrb[0].mxu0 %v992
        %v1069 = vpop.f32.mrb[0].mxu0
        %v1070 = vadd.f32 %v750, %v1069
        %v1071 = vpop.f32.mrb[0].mxu0
        %v1072 = vadd.f32 %v752, %v1071
        %v1073 = vpop.f32.mrb[0].mxu0
        %v1074 = vpop.f32.mrb[0].mxu0
        %1075 = vdwg.mxu0
        %v1076 = vxor.u32 %v1029, 2147483648
        %v1077 = vmul.f32 %v1076, 1.442695
        %v1078 = vpow.pop %v1077
        %v1079 = vadd.f32 %v1078, 1.0
        %v1080 = vrcp.pop %v1079
        %v1081 = vmul.f32 1.0, %v1080
        %v1082 = vxor.u32 %v1031, 2147483648
        %v1083 = vmul.f32 %v1082, 1.442695
        %v1084 = vpow.pop %v1083
        %v1085 = vadd.f32 %v1084, 1.0
        %v1086 = vrcp.pop %v1085
        %v1087 = vmul.f32 1.0, %v1086
        %v1088 = vmul.f32 %v1081, %v1070
        %v1089 = vadd.f32 %v1072, %v1088
        %v1090 = vtanh.pop %v1089
        %v1091 = vsub.f32 %v989, %v1090
        %v1092 = vmul.f32 %v1087, %v1091
        %v1093 = vadd.f32 %v1090, %v1092
        %1094 = vst.msk [vmem:[#allocation2] sm:$0xff] %vm885, %v1093
        %v1095 = vpack.c.bf16 %v1093, %v1093
        %v1097 = vsel %vm885, %v1095, 0
        %1099 = vmatprep.subr.bf16.mxu0 %v854
        %1100 = vmatpush1.bf16.msra.mxu0 %v853
        %1101 = vmatprep.subr.bf16.mxu0 %v858
        %1102 = vmatpush1.bf16.msra.mxu0 %v857
        %1103 = vmatprep.subr.bf16.mxu0 %v862
        %1104 = vmatpush1.bf16.msra.mxu0 %v861
        %1105 = vmatprep.subr.bf16.mxu0 %v866
        %1106 = vmatpush1.bf16.msra.mxu0 %v865
        %1107 = vmatprep.subr.bf16.mxu0 0
        %1108 = vmatpush1.bf16.msra.mxu0 0
        %1109 = vmatprep.subr.bf16.mxu0 0
        %1110 = vmatpush1.bf16.msra.mxu0 0
        %1111 = vmatprep.subr.bf16.mxu0 0
        %1112 = vmatpush1.bf16.msra.mxu0 0
        %1113 = vmatprep.subr.bf16.mxu0 0
        %1114 = vmatpush1.bf16.msra.mxu0 0
        %1115 = vmatprep.subr.bf16.mxu0 0
        %1116 = vmatpush1.bf16.msra.mxu0 0
        %1117 = vmatprep.subr.bf16.mxu0 0
        %1118 = vmatpush1.bf16.msra.mxu0 0
        %1119 = vmatprep.subr.bf16.mxu0 0
        %1120 = vmatpush1.bf16.msra.mxu0 0
        %1121 = vmatprep.subr.bf16.mxu0 0
        %1122 = vmatpush1.bf16.msra.mxu0 0
        %1123 = vmatprep.subr.bf16.mxu0 0
        %1124 = vmatpush1.bf16.msra.mxu0 0
        %1125 = vmatprep.subr.bf16.mxu0 0
        %1126 = vmatpush1.bf16.msra.mxu0 0
        %1127 = vmatprep.subr.bf16.mxu0 0
        %1128 = vmatpush1.bf16.msra.mxu0 0
        %1129 = vmatprep.subr.bf16.mxu0 0
        %1130 = vmatpush1.bf16.msra.mxu0 0
        %1131 = vmatprep.mubr.bf16.mxu0 0
        %1132 = vmatmul.mubr.bf16.gmra.mrb[0].mxu0 %v1097
        %v1133 = vpop.f32.mrb[0].mxu0
        %v1134 = vadd.f32 %v683, %v1133
        %v1135 = vpop.f32.mrb[0].mxu0
        %v1136 = vadd.f32 %v685, %v1135
        %v1137 = vpop.f32.mrb[0].mxu0
        %v1138 = vpop.f32.mrb[0].mxu0
        %1139 = vdwg.mxu0
        %1140 = vmatprep.subr.bf16.mxu0 %v856
        %1141 = vmatpush1.bf16.msra.mxu0 %v855
        %1142 = vmatprep.subr.bf16.mxu0 %v860
        %1143 = vmatpush1.bf16.msra.mxu0 %v859
        %1144 = vmatprep.subr.bf16.mxu0 %v864
        %1145 = vmatpush1.bf16.msra.mxu0 %v863
        %1146 = vmatprep.subr.bf16.mxu0 %v868
        %1147 = vmatpush1.bf16.msra.mxu0 %v867
        %1148 = vmatprep.subr.bf16.mxu0 0
        %1149 = vmatpush1.bf16.msra.mxu0 0
        %1150 = vmatprep.subr.bf16.mxu0 0
        %1151 = vmatpush1.bf16.msra.mxu0 0
        %1152 = vmatprep.subr.bf16.mxu0 0
        %1153 = vmatpush1.bf16.msra.mxu0 0
        %1154 = vmatprep.subr.bf16.mxu0 0
        %1155 = vmatpush1.bf16.msra.mxu0 0
        %1156 = vmatprep.subr.bf16.mxu0 0
        %1157 = vmatpush1.bf16.msra.mxu0 0
        %1158 = vmatprep.subr.bf16.mxu0 0
        %1159 = vmatpush1.bf16.msra.mxu0 0
        %1160 = vmatprep.subr.bf16.mxu0 0
        %1161 = vmatpush1.bf16.msra.mxu0 0
        %1162 = vmatprep.subr.bf16.mxu0 0
        %1163 = vmatpush1.bf16.msra.mxu0 0
        %1164 = vmatprep.subr.bf16.mxu0 0
        %1165 = vmatpush1.bf16.msra.mxu0 0
        %1166 = vmatprep.subr.bf16.mxu0 0
        %1167 = vmatpush1.bf16.msra.mxu0 0
        %1168 = vmatprep.subr.bf16.mxu0 0
        %1169 = vmatpush1.bf16.msra.mxu0 0
        %1170 = vmatprep.subr.bf16.mxu0 0
        %1171 = vmatpush1.bf16.msra.mxu0 0
        %1172 = vmatprep.mubr.bf16.mxu0 0
        %1173 = vmatmul.mubr.bf16.gmra.mrb[0].mxu0 %v1097
        %v1174 = vpop.f32.mrb[0].mxu0
        %v1175 = vadd.f32 %v756, %v1174
        %v1176 = vpop.f32.mrb[0].mxu0
        %v1177 = vadd.f32 %v758, %v1176
        %v1178 = vpop.f32.mrb[0].mxu0
        %v1179 = vpop.f32.mrb[0].mxu0
        %1180 = vdwg.mxu0
        %v1181 = vxor.u32 %v1134, 2147483648
        %v1182 = vmul.f32 %v1181, 1.442695
        %v1183 = vpow.pop %v1182
        %v1184 = vadd.f32 %v1183, 1.0
        %v1185 = vrcp.pop %v1184
        %v1186 = vmul.f32 1.0, %v1185
        %v1187 = vxor.u32 %v1136, 2147483648
        %v1188 = vmul.f32 %v1187, 1.442695
        %v1189 = vpow.pop %v1188
        %v1190 = vadd.f32 %v1189, 1.0
        %v1191 = vrcp.pop %v1190
        %v1192 = vmul.f32 1.0, %v1191
        %v1193 = vmul.f32 %v1186, %v1175
        %v1194 = vadd.f32 %v1177, %v1193
        %v1195 = vtanh.pop %v1194
        %v1196 = vsub.f32 %v1093, %v1195
        %v1197 = vmul.f32 %v1192, %v1196
        %v1198 = vadd.f32 %v1195, %v1197
        %s1199 = scalar_lea.vmem [#allocation2], 8
        %1200 = vst.msk [vmem:[%s1199] sm:$0xff] %vm885, %v1198
        %v1201 = vpack.c.bf16 %v1198, %v1198
        %v1203 = vsel %vm885, %v1201, 0
        %1205 = vmatprep.subr.bf16.mxu0 %v854
        %1206 = vmatpush1.bf16.msra.mxu0 %v853
        %1207 = vmatprep.subr.bf16.mxu0 %v858
        %1208 = vmatpush1.bf16.msra.mxu0 %v857
        %1209 = vmatprep.subr.bf16.mxu0 %v862
        %1210 = vmatpush1.bf16.msra.mxu0 %v861
        %1211 = vmatprep.subr.bf16.mxu0 %v866
        %1212 = vmatpush1.bf16.msra.mxu0 %v865
        %1213 = vmatprep.subr.bf16.mxu0 0
        %1214 = vmatpush1.bf16.msra.mxu0 0
        %1215 = vmatprep.subr.bf16.mxu0 0
        %1216 = vmatpush1.bf16.msra.mxu0 0
        %1217 = vmatprep.subr.bf16.mxu0 0
        %1218 = vmatpush1.bf16.msra.mxu0 0
        %1219 = vmatprep.subr.bf16.mxu0 0
        %1220 = vmatpush1.bf16.msra.mxu0 0
        %1221 = vmatprep.subr.bf16.mxu0 0
        %1222 = vmatpush1.bf16.msra.mxu0 0
        %1223 = vmatprep.subr.bf16.mxu0 0
        %1224 = vmatpush1.bf16.msra.mxu0 0
        %1225 = vmatprep.subr.bf16.mxu0 0
        %1226 = vmatpush1.bf16.msra.mxu0 0
        %1227 = vmatprep.subr.bf16.mxu0 0
        %1228 = vmatpush1.bf16.msra.mxu0 0
        %1229 = vmatprep.subr.bf16.mxu0 0
        %1230 = vmatpush1.bf16.msra.mxu0 0
        %1231 = vmatprep.subr.bf16.mxu0 0
        %1232 = vmatpush1.bf16.msra.mxu0 0
        %1233 = vmatprep.subr.bf16.mxu0 0
        %1234 = vmatpush1.bf16.msra.mxu0 0
        %1235 = vmatprep.subr.bf16.mxu0 0
        %1236 = vmatpush1.bf16.msra.mxu0 0
        %1237 = vmatprep.mubr.bf16.mxu0 0
        %1238 = vmatmul.mubr.bf16.gmra.mrb[0].mxu0 %v1203
        %v1239 = vpop.f32.mrb[0].mxu0
        %v1240 = vadd.f32 %v687, %v1239
        %v1241 = vpop.f32.mrb[0].mxu0
        %v1242 = vadd.f32 %v689, %v1241
        %v1243 = vpop.f32.mrb[0].mxu0
        %v1244 = vpop.f32.mrb[0].mxu0
        %1245 = vdwg.mxu0
        %1246 = vmatprep.subr.bf16.mxu0 %v856
        %1247 = vmatpush1.bf16.msra.mxu0 %v855
        %1248 = vmatprep.subr.bf16.mxu0 %v860
        %1249 = vmatpush1.bf16.msra.mxu0 %v859
        %1250 = vmatprep.subr.bf16.mxu0 %v864
        %1251 = vmatpush1.bf16.msra.mxu0 %v863
        %1252 = vmatprep.subr.bf16.mxu0 %v868
        %1253 = vmatpush1.bf16.msra.mxu0 %v867
        %1254 = vmatprep.subr.bf16.mxu0 0
        %1255 = vmatpush1.bf16.msra.mxu0 0
        %1256 = vmatprep.subr.bf16.mxu0 0
        %1257 = vmatpush1.bf16.msra.mxu0 0
        %1258 = vmatprep.subr.bf16.mxu0 0
        %1259 = vmatpush1.bf16.msra.mxu0 0
        %1260 = vmatprep.subr.bf16.mxu0 0
        %1261 = vmatpush1.bf16.msra.mxu0 0
        %1262 = vmatprep.subr.bf16.mxu0 0
        %1263 = vmatpush1.bf16.msra.mxu0 0
        %1264 = vmatprep.subr.bf16.mxu0 0
        %1265 = vmatpush1.bf16.msra.mxu0 0
        %1266 = vmatprep.subr.bf16.mxu0 0
        %1267 = vmatpush1.bf16.msra.mxu0 0
        %1268 = vmatprep.subr.bf16.mxu0 0
        %1269 = vmatpush1.bf16.msra.mxu0 0
        %1270 = vmatprep.subr.bf16.mxu0 0
        %1271 = vmatpush1.bf16.msra.mxu0 0
        %1272 = vmatprep.subr.bf16.mxu0 0
        %1273 = vmatpush1.bf16.msra.mxu0 0
        %1274 = vmatprep.subr.bf16.mxu0 0
        %1275 = vmatpush1.bf16.msra.mxu0 0
        %1276 = vmatprep.subr.bf16.mxu0 0
        %1277 = vmatpush1.bf16.msra.mxu0 0
        %1278 = vmatprep.mubr.bf16.mxu0 0
        %1279 = vmatmul.mubr.bf16.gmra.mrb[0].mxu0 %v1203
        %v1280 = vpop.f32.mrb[0].mxu0
        %v1281 = vadd.f32 %v760, %v1280
        %v1282 = vpop.f32.mrb[0].mxu0
        %v1283 = vadd.f32 %v762, %v1282
        %v1284 = vpop.f32.mrb[0].mxu0
        %v1285 = vpop.f32.mrb[0].mxu0
        %1286 = vdwg.mxu0
        %v1287 = vxor.u32 %v1240, 2147483648
        %v1288 = vmul.f32 %v1287, 1.442695
        %v1289 = vpow.pop %v1288
        %v1290 = vadd.f32 %v1289, 1.0
        %v1291 = vrcp.pop %v1290
        %v1292 = vmul.f32 1.0, %v1291
        %v1293 = vxor.u32 %v1242, 2147483648
        %v1294 = vmul.f32 %v1293, 1.442695
        %v1295 = vpow.pop %v1294
        %v1296 = vadd.f32 %v1295, 1.0
        %v1297 = vrcp.pop %v1296
        %v1298 = vmul.f32 1.0, %v1297
        %v1299 = vmul.f32 %v1292, %v1281
        %v1300 = vadd.f32 %v1283, %v1299
        %v1301 = vtanh.pop %v1300
        %v1302 = vsub.f32 %v1198, %v1301
        %v1303 = vmul.f32 %v1298, %v1302
        %v1304 = vadd.f32 %v1301, %v1303
        %s1305 = scalar_lea.vmem [#allocation2], 16
        %1306 = vst.msk [vmem:[%s1305] sm:$0xff] %vm885, %v1304
        %v1307 = vpack.c.bf16 %v1304, %v1304
        %v1309 = vsel %vm885, %v1307, 0
        %1311 = vmatprep.subr.bf16.mxu0 %v854
        %1312 = vmatpush1.bf16.msra.mxu0 %v853
        %1313 = vmatprep.subr.bf16.mxu0 %v858
        %1314 = vmatpush1.bf16.msra.mxu0 %v857
        %1315 = vmatprep.subr.bf16.mxu0 %v862
        %1316 = vmatpush1.bf16.msra.mxu0 %v861
        %1317 = vmatprep.subr.bf16.mxu0 %v866
        %1318 = vmatpush1.bf16.msra.mxu0 %v865
        %1319 = vmatprep.subr.bf16.mxu0 0
        %1320 = vmatpush1.bf16.msra.mxu0 0
        %1321 = vmatprep.subr.bf16.mxu0 0
        %1322 = vmatpush1.bf16.msra.mxu0 0
        %1323 = vmatprep.subr.bf16.mxu0 0
        %1324 = vmatpush1.bf16.msra.mxu0 0
        %1325 = vmatprep.subr.bf16.mxu0 0
        %1326 = vmatpush1.bf16.msra.mxu0 0
        %1327 = vmatprep.subr.bf16.mxu0 0
        %1328 = vmatpush1.bf16.msra.mxu0 0
        %1329 = vmatprep.subr.bf16.mxu0 0
        %1330 = vmatpush1.bf16.msra.mxu0 0
        %1331 = vmatprep.subr.bf16.mxu0 0
        %1332 = vmatpush1.bf16.msra.mxu0 0
        %1333 = vmatprep.subr.bf16.mxu0 0
        %1334 = vmatpush1.bf16.msra.mxu0 0
        %1335 = vmatprep.subr.bf16.mxu0 0
        %1336 = vmatpush1.bf16.msra.mxu0 0
        %1337 = vmatprep.subr.bf16.mxu0 0
        %1338 = vmatpush1.bf16.msra.mxu0 0
        %1339 = vmatprep.subr.bf16.mxu0 0
        %1340 = vmatpush1.bf16.msra.mxu0 0
        %1341 = vmatprep.subr.bf16.mxu0 0
        %1342 = vmatpush1.bf16.msra.mxu0 0
        %1343 = vmatprep.mubr.bf16.mxu0 0
        %1344 = vmatmul.mubr.bf16.gmra.mrb[0].mxu0 %v1309
        %v1345 = vpop.f32.mrb[0].mxu0
        %v1346 = vadd.f32 %v693, %v1345
        %v1347 = vpop.f32.mrb[0].mxu0
        %v1348 = vadd.f32 %v695, %v1347
        %v1349 = vpop.f32.mrb[0].mxu0
        %v1350 = vpop.f32.mrb[0].mxu0
        %1351 = vdwg.mxu0
        %1352 = vmatprep.subr.bf16.mxu0 %v856
        %1353 = vmatpush1.bf16.msra.mxu0 %v855
        %1354 = vmatprep.subr.bf16.mxu0 %v860
        %1355 = vmatpush1.bf16.msra.mxu0 %v859
        %1356 = vmatprep.subr.bf16.mxu0 %v864
        %1357 = vmatpush1.bf16.msra.mxu0 %v863
        %1358 = vmatprep.subr.bf16.mxu0 %v868
        %1359 = vmatpush1.bf16.msra.mxu0 %v867
        %1360 = vmatprep.subr.bf16.mxu0 0
        %1361 = vmatpush1.bf16.msra.mxu0 0
        %1362 = vmatprep.subr.bf16.mxu0 0
        %1363 = vmatpush1.bf16.msra.mxu0 0
        %1364 = vmatprep.subr.bf16.mxu0 0
        %1365 = vmatpush1.bf16.msra.mxu0 0
        %1366 = vmatprep.subr.bf16.mxu0 0
        %1367 = vmatpush1.bf16.msra.mxu0 0
        %1368 = vmatprep.subr.bf16.mxu0 0
        %1369 = vmatpush1.bf16.msra.mxu0 0
        %1370 = vmatprep.subr.bf16.mxu0 0
        %1371 = vmatpush1.bf16.msra.mxu0 0
        %1372 = vmatprep.subr.bf16.mxu0 0
        %1373 = vmatpush1.bf16.msra.mxu0 0
        %1374 = vmatprep.subr.bf16.mxu0 0
        %1375 = vmatpush1.bf16.msra.mxu0 0
        %1376 = vmatprep.subr.bf16.mxu0 0
        %1377 = vmatpush1.bf16.msra.mxu0 0
        %1378 = vmatprep.subr.bf16.mxu0 0
        %1379 = vmatpush1.bf16.msra.mxu0 0
        %1380 = vmatprep.subr.bf16.mxu0 0
        %1381 = vmatpush1.bf16.msra.mxu0 0
        %1382 = vmatprep.subr.bf16.mxu0 0
        %1383 = vmatpush1.bf16.msra.mxu0 0
        %1384 = vmatprep.mubr.bf16.mxu0 0
        %1385 = vmatmul.mubr.bf16.gmra.mrb[0].mxu0 %v1309
        %v1386 = vpop.f32.mrb[0].mxu0
        %v1387 = vadd.f32 %v766, %v1386
        %v1388 = vpop.f32.mrb[0].mxu0
        %v1389 = vadd.f32 %v768, %v1388
        %v1390 = vpop.f32.mrb[0].mxu0
        %v1391 = vpop.f32.mrb[0].mxu0
        %1392 = vdwg.mxu0
        %v1393 = vxor.u32 %v1346, 2147483648
        %v1394 = vmul.f32 %v1393, 1.442695
        %v1395 = vpow.pop %v1394
        %v1396 = vadd.f32 %v1395, 1.0
        %v1397 = vrcp.pop %v1396
        %v1398 = vmul.f32 1.0, %v1397
        %v1399 = vxor.u32 %v1348, 2147483648
        %v1400 = vmul.f32 %v1399, 1.442695
        %v1401 = vpow.pop %v1400
        %v1402 = vadd.f32 %v1401, 1.0
        %v1403 = vrcp.pop %v1402
        %v1404 = vmul.f32 1.0, %v1403
        %v1405 = vmul.f32 %v1398, %v1387
        %v1406 = vadd.f32 %v1389, %v1405
        %v1407 = vtanh.pop %v1406
        %v1408 = vsub.f32 %v1304, %v1407
        %v1409 = vmul.f32 %v1404, %v1408
        %v1410 = vadd.f32 %v1407, %v1409
        %s1411 = scalar_lea.vmem [#allocation2], 24
        %1412 = vst.msk [vmem:[%s1411] sm:$0xff] %vm885, %v1410
        %v1413 = vpack.c.bf16 %v1410, %v1410
        %v1415 = vsel %vm885, %v1413, 0
        %1417 = vmatprep.subr.bf16.mxu0 %v854
        %1418 = vmatpush1.bf16.msra.mxu0 %v853
        %1419 = vmatprep.subr.bf16.mxu0 %v858
        %1420 = vmatpush1.bf16.msra.mxu0 %v857
        %1421 = vmatprep.subr.bf16.mxu0 %v862
        %1422 = vmatpush1.bf16.msra.mxu0 %v861
        %1423 = vmatprep.subr.bf16.mxu0 %v866
        %1424 = vmatpush1.bf16.msra.mxu0 %v865
        %1425 = vmatprep.subr.bf16.mxu0 0
        %1426 = vmatpush1.bf16.msra.mxu0 0
        %1427 = vmatprep.subr.bf16.mxu0 0
        %1428 = vmatpush1.bf16.msra.mxu0 0
        %1429 = vmatprep.subr.bf16.mxu0 0
        %1430 = vmatpush1.bf16.msra.mxu0 0
        %1431 = vmatprep.subr.bf16.mxu0 0
        %1432 = vmatpush1.bf16.msra.mxu0 0
        %1433 = vmatprep.subr.bf16.mxu0 0
        %1434 = vmatpush1.bf16.msra.mxu0 0
        %1435 = vmatprep.subr.bf16.mxu0 0
        %1436 = vmatpush1.bf16.msra.mxu0 0
        %1437 = vmatprep.subr.bf16.mxu0 0
        %1438 = vmatpush1.bf16.msra.mxu0 0
        %1439 = vmatprep.subr.bf16.mxu0 0
        %1440 = vmatpush1.bf16.msra.mxu0 0
        %1441 = vmatprep.subr.bf16.mxu0 0
        %1442 = vmatpush1.bf16.msra.mxu0 0
        %1443 = vmatprep.subr.bf16.mxu0 0
        %1444 = vmatpush1.bf16.msra.mxu0 0
        %1445 = vmatprep.subr.bf16.mxu0 0
        %1446 = vmatpush1.bf16.msra.mxu0 0
        %1447 = vmatprep.subr.bf16.mxu0 0
        %1448 = vmatpush1.bf16.msra.mxu0 0
        %1449 = vmatprep.mubr.bf16.mxu0 0
        %1450 = vmatmul.mubr.bf16.gmra.mrb[0].mxu0 %v1415
        %v1451 = vpop.f32.mrb[0].mxu0
        %v1452 = vadd.f32 %v697, %v1451
        %v1453 = vpop.f32.mrb[0].mxu0
        %v1454 = vadd.f32 %v699, %v1453
        %v1455 = vpop.f32.mrb[0].mxu0
        %v1456 = vpop.f32.mrb[0].mxu0
        %1457 = vdwg.mxu0
        %1458 = vmatprep.subr.bf16.mxu0 %v856
        %1459 = vmatpush1.bf16.msra.mxu0 %v855
        %1460 = vmatprep.subr.bf16.mxu0 %v860
        %1461 = vmatpush1.bf16.msra.mxu0 %v859
        %1462 = vmatprep.subr.bf16.mxu0 %v864
        %1463 = vmatpush1.bf16.msra.mxu0 %v863
        %1464 = vmatprep.subr.bf16.mxu0 %v868
        %1465 = vmatpush1.bf16.msra.mxu0 %v867
        %1466 = vmatprep.subr.bf16.mxu0 0
        %1467 = vmatpush1.bf16.msra.mxu0 0
        %1468 = vmatprep.subr.bf16.mxu0 0
        %1469 = vmatpush1.bf16.msra.mxu0 0
        %1470 = vmatprep.subr.bf16.mxu0 0
        %1471 = vmatpush1.bf16.msra.mxu0 0
        %1472 = vmatprep.subr.bf16.mxu0 0
        %1473 = vmatpush1.bf16.msra.mxu0 0
        %1474 = vmatprep.subr.bf16.mxu0 0
        %1475 = vmatpush1.bf16.msra.mxu0 0
        %1476 = vmatprep.subr.bf16.mxu0 0
        %1477 = vmatpush1.bf16.msra.mxu0 0
        %1478 = vmatprep.subr.bf16.mxu0 0
        %1479 = vmatpush1.bf16.msra.mxu0 0
        %1480 = vmatprep.subr.bf16.mxu0 0
        %1481 = vmatpush1.bf16.msra.mxu0 0
        %1482 = vmatprep.subr.bf16.mxu0 0
        %1483 = vmatpush1.bf16.msra.mxu0 0
        %1484 = vmatprep.subr.bf16.mxu0 0
        %1485 = vmatpush1.bf16.msra.mxu0 0
        %1486 = vmatprep.subr.bf16.mxu0 0
        %1487 = vmatpush1.bf16.msra.mxu0 0
        %1488 = vmatprep.subr.bf16.mxu0 0
        %1489 = vmatpush1.bf16.msra.mxu0 0
        %1490 = vmatprep.mubr.bf16.mxu0 0
        %1491 = vmatmul.mubr.bf16.gmra.mrb[0].mxu0 %v1415
        %v1492 = vpop.f32.mrb[0].mxu0
        %v1493 = vadd.f32 %v770, %v1492
        %v1494 = vpop.f32.mrb[0].mxu0
        %v1495 = vadd.f32 %v772, %v1494
        %v1496 = vpop.f32.mrb[0].mxu0
        %v1497 = vpop.f32.mrb[0].mxu0
        %1498 = vdwg.mxu0
        %v1499 = vxor.u32 %v1452, 2147483648
        %v1500 = vmul.f32 %v1499, 1.442695
        %v1501 = vpow.pop %v1500
        %v1502 = vadd.f32 %v1501, 1.0
        %v1503 = vrcp.pop %v1502
        %v1504 = vmul.f32 1.0, %v1503
        %v1505 = vxor.u32 %v1454, 2147483648
        %v1506 = vmul.f32 %v1505, 1.442695
        %v1507 = vpow.pop %v1506
        %v1508 = vadd.f32 %v1507, 1.0
        %v1509 = vrcp.pop %v1508
        %v1510 = vmul.f32 1.0, %v1509
        %v1511 = vmul.f32 %v1504, %v1493
        %v1512 = vadd.f32 %v1495, %v1511
        %v1513 = vtanh.pop %v1512
        %v1514 = vsub.f32 %v1410, %v1513
        %v1515 = vmul.f32 %v1510, %v1514
        %v1516 = vadd.f32 %v1513, %v1515
        %s1517 = scalar_lea.vmem [#allocation2], 32
        %1518 = vst.msk [vmem:[%s1517] sm:$0xff] %vm885, %v1516
        %v1519 = vpack.c.bf16 %v1516, %v1516
        %v1521 = vsel %vm885, %v1519, 0
        %1523 = vmatprep.subr.bf16.mxu0 %v854
        %1524 = vmatpush1.bf16.msra.mxu0 %v853
        %1525 = vmatprep.subr.bf16.mxu0 %v858
        %1526 = vmatpush1.bf16.msra.mxu0 %v857
        %1527 = vmatprep.subr.bf16.mxu0 %v862
        %1528 = vmatpush1.bf16.msra.mxu0 %v861
        %1529 = vmatprep.subr.bf16.mxu0 %v866
        %1530 = vmatpush1.bf16.msra.mxu0 %v865
        %1531 = vmatprep.subr.bf16.mxu0 0
        %1532 = vmatpush1.bf16.msra.mxu0 0
        %1533 = vmatprep.subr.bf16.mxu0 0
        %1534 = vmatpush1.bf16.msra.mxu0 0
        %1535 = vmatprep.subr.bf16.mxu0 0
        %1536 = vmatpush1.bf16.msra.mxu0 0
        %1537 = vmatprep.subr.bf16.mxu0 0
        %1538 = vmatpush1.bf16.msra.mxu0 0
        %1539 = vmatprep.subr.bf16.mxu0 0
        %1540 = vmatpush1.bf16.msra.mxu0 0
        %1541 = vmatprep.subr.bf16.mxu0 0
        %1542 = vmatpush1.bf16.msra.mxu0 0
        %1543 = vmatprep.subr.bf16.mxu0 0
        %1544 = vmatpush1.bf16.msra.mxu0 0
        %1545 = vmatprep.subr.bf16.mxu0 0
        %1546 = vmatpush1.bf16.msra.mxu0 0
        %1547 = vmatprep.subr.bf16.mxu0 0
        %1548 = vmatpush1.bf16.msra.mxu0 0
        %1549 = vmatprep.subr.bf16.mxu0 0
        %1550 = vmatpush1.bf16.msra.mxu0 0
        %1551 = vmatprep.subr.bf16.mxu0 0
        %1552 = vmatpush1.bf16.msra.mxu0 0
        %1553 = vmatprep.subr.bf16.mxu0 0
        %1554 = vmatpush1.bf16.msra.mxu0 0
        %1555 = vmatprep.mubr.bf16.mxu0 0
        %1556 = vmatmul.mubr.bf16.gmra.mrb[0].mxu0 %v1521
        %v1557 = vpop.f32.mrb[0].mxu0
        %v1558 = vadd.f32 %v703, %v1557
        %v1559 = vpop.f32.mrb[0].mxu0
        %v1560 = vadd.f32 %v705, %v1559
        %v1561 = vpop.f32.mrb[0].mxu0
        %v1562 = vpop.f32.mrb[0].mxu0
        %1563 = vdwg.mxu0
        %1564 = vmatprep.subr.bf16.mxu0 %v856
        %1565 = vmatpush1.bf16.msra.mxu0 %v855
        %1566 = vmatprep.subr.bf16.mxu0 %v860
        %1567 = vmatpush1.bf16.msra.mxu0 %v859
        %1568 = vmatprep.subr.bf16.mxu0 %v864
        %1569 = vmatpush1.bf16.msra.mxu0 %v863
        %1570 = vmatprep.subr.bf16.mxu0 %v868
        %1571 = vmatpush1.bf16.msra.mxu0 %v867
        %1572 = vmatprep.subr.bf16.mxu0 0
        %1573 = vmatpush1.bf16.msra.mxu0 0
        %1574 = vmatprep.subr.bf16.mxu0 0
        %1575 = vmatpush1.bf16.msra.mxu0 0
        %1576 = vmatprep.subr.bf16.mxu0 0
        %1577 = vmatpush1.bf16.msra.mxu0 0
        %1578 = vmatprep.subr.bf16.mxu0 0
        %1579 = vmatpush1.bf16.msra.mxu0 0
        %1580 = vmatprep.subr.bf16.mxu0 0
        %1581 = vmatpush1.bf16.msra.mxu0 0
        %1582 = vmatprep.subr.bf16.mxu0 0
        %1583 = vmatpush1.bf16.msra.mxu0 0
        %1584 = vmatprep.subr.bf16.mxu0 0
        %1585 = vmatpush1.bf16.msra.mxu0 0
        %1586 = vmatprep.subr.bf16.mxu0 0
        %1587 = vmatpush1.bf16.msra.mxu0 0
        %1588 = vmatprep.subr.bf16.mxu0 0
        %1589 = vmatpush1.bf16.msra.mxu0 0
        %1590 = vmatprep.subr.bf16.mxu0 0
        %1591 = vmatpush1.bf16.msra.mxu0 0
        %1592 = vmatprep.subr.bf16.mxu0 0
        %1593 = vmatpush1.bf16.msra.mxu0 0
        %1594 = vmatprep.subr.bf16.mxu0 0
        %1595 = vmatpush1.bf16.msra.mxu0 0
        %1596 = vmatprep.mubr.bf16.mxu0 0
        %1597 = vmatmul.mubr.bf16.gmra.mrb[0].mxu0 %v1521
        %v1598 = vpop.f32.mrb[0].mxu0
        %v1599 = vadd.f32 %v776, %v1598
        %v1600 = vpop.f32.mrb[0].mxu0
        %v1601 = vadd.f32 %v778, %v1600
        %v1602 = vpop.f32.mrb[0].mxu0
        %v1603 = vpop.f32.mrb[0].mxu0
        %1604 = vdwg.mxu0
        %v1605 = vxor.u32 %v1558, 2147483648
        %v1606 = vmul.f32 %v1605, 1.442695
        %v1607 = vpow.pop %v1606
        %v1608 = vadd.f32 %v1607, 1.0
        %v1609 = vrcp.pop %v1608
        %v1610 = vmul.f32 1.0, %v1609
        %v1611 = vxor.u32 %v1560, 2147483648
        %v1612 = vmul.f32 %v1611, 1.442695
        %v1613 = vpow.pop %v1612
        %v1614 = vadd.f32 %v1613, 1.0
        %v1615 = vrcp.pop %v1614
        %v1616 = vmul.f32 1.0, %v1615
        %v1617 = vmul.f32 %v1610, %v1599
        %v1618 = vadd.f32 %v1601, %v1617
        %v1619 = vtanh.pop %v1618
        %v1620 = vsub.f32 %v1516, %v1619
        %v1621 = vmul.f32 %v1616, %v1620
        %v1622 = vadd.f32 %v1619, %v1621
        %s1623 = scalar_lea.vmem [#allocation2], 40
        %1624 = vst.msk [vmem:[%s1623] sm:$0xff] %vm885, %v1622
        %v1625 = vpack.c.bf16 %v1622, %v1622
        %v1627 = vsel %vm885, %v1625, 0
        %1629 = vmatprep.subr.bf16.mxu0 %v854
        %1630 = vmatpush1.bf16.msra.mxu0 %v853
        %1631 = vmatprep.subr.bf16.mxu0 %v858
        %1632 = vmatpush1.bf16.msra.mxu0 %v857
        %1633 = vmatprep.subr.bf16.mxu0 %v862
        %1634 = vmatpush1.bf16.msra.mxu0 %v861
        %1635 = vmatprep.subr.bf16.mxu0 %v866
        %1636 = vmatpush1.bf16.msra.mxu0 %v865
        %1637 = vmatprep.subr.bf16.mxu0 0
        %1638 = vmatpush1.bf16.msra.mxu0 0
        %1639 = vmatprep.subr.bf16.mxu0 0
        %1640 = vmatpush1.bf16.msra.mxu0 0
        %1641 = vmatprep.subr.bf16.mxu0 0
        %1642 = vmatpush1.bf16.msra.mxu0 0
        %1643 = vmatprep.subr.bf16.mxu0 0
        %1644 = vmatpush1.bf16.msra.mxu0 0
        %1645 = vmatprep.subr.bf16.mxu0 0
        %1646 = vmatpush1.bf16.msra.mxu0 0
        %1647 = vmatprep.subr.bf16.mxu0 0
        %1648 = vmatpush1.bf16.msra.mxu0 0
        %1649 = vmatprep.subr.bf16.mxu0 0
        %1650 = vmatpush1.bf16.msra.mxu0 0
        %1651 = vmatprep.subr.bf16.mxu0 0
        %1652 = vmatpush1.bf16.msra.mxu0 0
        %1653 = vmatprep.subr.bf16.mxu0 0
        %1654 = vmatpush1.bf16.msra.mxu0 0
        %1655 = vmatprep.subr.bf16.mxu0 0
        %1656 = vmatpush1.bf16.msra.mxu0 0
        %1657 = vmatprep.subr.bf16.mxu0 0
        %1658 = vmatpush1.bf16.msra.mxu0 0
        %1659 = vmatprep.subr.bf16.mxu0 0
        %1660 = vmatpush1.bf16.msra.mxu0 0
        %1661 = vmatprep.mubr.bf16.mxu0 0
        %1662 = vmatmul.mubr.bf16.gmra.mrb[0].mxu0 %v1627
        %v1663 = vpop.f32.mrb[0].mxu0
        %v1664 = vadd.f32 %v707, %v1663
        %v1665 = vpop.f32.mrb[0].mxu0
        %v1666 = vadd.f32 %v709, %v1665
        %v1667 = vpop.f32.mrb[0].mxu0
        %v1668 = vpop.f32.mrb[0].mxu0
        %1669 = vdwg.mxu0
        %1670 = vmatprep.subr.bf16.mxu0 %v856
        %1671 = vmatpush1.bf16.msra.mxu0 %v855
        %1672 = vmatprep.subr.bf16.mxu0 %v860
        %1673 = vmatpush1.bf16.msra.mxu0 %v859
        %1674 = vmatprep.subr.bf16.mxu0 %v864
        %1675 = vmatpush1.bf16.msra.mxu0 %v863
        %1676 = vmatprep.subr.bf16.mxu0 %v868
        %1677 = vmatpush1.bf16.msra.mxu0 %v867
        %1678 = vmatprep.subr.bf16.mxu0 0
        %1679 = vmatpush1.bf16.msra.mxu0 0
        %1680 = vmatprep.subr.bf16.mxu0 0
        %1681 = vmatpush1.bf16.msra.mxu0 0
        %1682 = vmatprep.subr.bf16.mxu0 0
        %1683 = vmatpush1.bf16.msra.mxu0 0
        %1684 = vmatprep.subr.bf16.mxu0 0
        %1685 = vmatpush1.bf16.msra.mxu0 0
        %1686 = vmatprep.subr.bf16.mxu0 0
        %1687 = vmatpush1.bf16.msra.mxu0 0
        %1688 = vmatprep.subr.bf16.mxu0 0
        %1689 = vmatpush1.bf16.msra.mxu0 0
        %1690 = vmatprep.subr.bf16.mxu0 0
        %1691 = vmatpush1.bf16.msra.mxu0 0
        %1692 = vmatprep.subr.bf16.mxu0 0
        %1693 = vmatpush1.bf16.msra.mxu0 0
        %1694 = vmatprep.subr.bf16.mxu0 0
        %1695 = vmatpush1.bf16.msra.mxu0 0
        %1696 = vmatprep.subr.bf16.mxu0 0
        %1697 = vmatpush1.bf16.msra.mxu0 0
        %1698 = vmatprep.subr.bf16.mxu0 0
        %1699 = vmatpush1.bf16.msra.mxu0 0
        %1700 = vmatprep.subr.bf16.mxu0 0
        %1701 = vmatpush1.bf16.msra.mxu0 0
        %1702 = vmatprep.mubr.bf16.mxu0 0
        %1703 = vmatmul.mubr.bf16.gmra.mrb[0].mxu0 %v1627
        %v1704 = vpop.f32.mrb[0].mxu0
        %v1705 = vadd.f32 %v780, %v1704
        %v1706 = vpop.f32.mrb[0].mxu0
        %v1707 = vadd.f32 %v782, %v1706
        %v1708 = vpop.f32.mrb[0].mxu0
        %v1709 = vpop.f32.mrb[0].mxu0
        %1710 = vdwg.mxu0
        %v1711 = vxor.u32 %v1664, 2147483648
        %v1712 = vmul.f32 %v1711, 1.442695
        %v1713 = vpow.pop %v1712
        %v1714 = vadd.f32 %v1713, 1.0
        %v1715 = vrcp.pop %v1714
        %v1716 = vmul.f32 1.0, %v1715
        %v1717 = vxor.u32 %v1666, 2147483648
        %v1718 = vmul.f32 %v1717, 1.442695
        %v1719 = vpow.pop %v1718
        %v1720 = vadd.f32 %v1719, 1.0
        %v1721 = vrcp.pop %v1720
        %v1722 = vmul.f32 1.0, %v1721
        %v1723 = vmul.f32 %v1716, %v1705
        %v1724 = vadd.f32 %v1707, %v1723
        %v1725 = vtanh.pop %v1724
        %v1726 = vsub.f32 %v1622, %v1725
        %v1727 = vmul.f32 %v1722, %v1726
        %v1728 = vadd.f32 %v1725, %v1727
        %s1729 = scalar_lea.vmem [#allocation2], 48
        %1730 = vst.msk [vmem:[%s1729] sm:$0xff] %vm885, %v1728
        %v1731 = vpack.c.bf16 %v1728, %v1728
        %v1733 = vsel %vm885, %v1731, 0
        %1735 = vmatprep.subr.bf16.mxu0 %v854
        %1736 = vmatpush1.bf16.msra.mxu0 %v853
        %1737 = vmatprep.subr.bf16.mxu0 %v858
        %1738 = vmatpush1.bf16.msra.mxu0 %v857
        %1739 = vmatprep.subr.bf16.mxu0 %v862
        %1740 = vmatpush1.bf16.msra.mxu0 %v861
        %1741 = vmatprep.subr.bf16.mxu0 %v866
        %1742 = vmatpush1.bf16.msra.mxu0 %v865
        %1743 = vmatprep.subr.bf16.mxu0 0
        %1744 = vmatpush1.bf16.msra.mxu0 0
        %1745 = vmatprep.subr.bf16.mxu0 0
        %1746 = vmatpush1.bf16.msra.mxu0 0
        %1747 = vmatprep.subr.bf16.mxu0 0
        %1748 = vmatpush1.bf16.msra.mxu0 0
        %1749 = vmatprep.subr.bf16.mxu0 0
        %1750 = vmatpush1.bf16.msra.mxu0 0
        %1751 = vmatprep.subr.bf16.mxu0 0
        %1752 = vmatpush1.bf16.msra.mxu0 0
        %1753 = vmatprep.subr.bf16.mxu0 0
        %1754 = vmatpush1.bf16.msra.mxu0 0
        %1755 = vmatprep.subr.bf16.mxu0 0
        %1756 = vmatpush1.bf16.msra.mxu0 0
        %1757 = vmatprep.subr.bf16.mxu0 0
        %1758 = vmatpush1.bf16.msra.mxu0 0
        %1759 = vmatprep.subr.bf16.mxu0 0
        %1760 = vmatpush1.bf16.msra.mxu0 0
        %1761 = vmatprep.subr.bf16.mxu0 0
        %1762 = vmatpush1.bf16.msra.mxu0 0
        %1763 = vmatprep.subr.bf16.mxu0 0
        %1764 = vmatpush1.bf16.msra.mxu0 0
        %1765 = vmatprep.subr.bf16.mxu0 0
        %1766 = vmatpush1.bf16.msra.mxu0 0
        %1767 = vmatprep.mubr.bf16.mxu0 0
        %1768 = vmatmul.mubr.bf16.gmra.mrb[0].mxu0 %v1733
        %v1769 = vpop.f32.mrb[0].mxu0
        %v1770 = vadd.f32 %v707, %v1769
        %v1771 = vpop.f32.mrb[0].mxu0
        %v1772 = vadd.f32 %v709, %v1771
        %v1773 = vpop.f32.mrb[0].mxu0
        %v1774 = vpop.f32.mrb[0].mxu0
        %1775 = vdwg.mxu0
        %1776 = vmatprep.subr.bf16.mxu0 %v856
        %1777 = vmatpush1.bf16.msra.mxu0 %v855
        %1778 = vmatprep.subr.bf16.mxu0 %v860
        %1779 = vmatpush1.bf16.msra.mxu0 %v859
        %1780 = vmatprep.subr.bf16.mxu0 %v864
        %1781 = vmatpush1.bf16.msra.mxu0 %v863
        %1782 = vmatprep.subr.bf16.mxu0 %v868
        %1783 = vmatpush1.bf16.msra.mxu0 %v867
        %1784 = vmatprep.subr.bf16.mxu0 0
        %1785 = vmatpush1.bf16.msra.mxu0 0
        %1786 = vmatprep.subr.bf16.mxu0 0
        %1787 = vmatpush1.bf16.msra.mxu0 0
        %1788 = vmatprep.subr.bf16.mxu0 0
        %1789 = vmatpush1.bf16.msra.mxu0 0
        %1790 = vmatprep.subr.bf16.mxu0 0
        %1791 = vmatpush1.bf16.msra.mxu0 0
        %1792 = vmatprep.subr.bf16.mxu0 0
        %1793 = vmatpush1.bf16.msra.mxu0 0
        %1794 = vmatprep.subr.bf16.mxu0 0
        %1795 = vmatpush1.bf16.msra.mxu0 0
        %1796 = vmatprep.subr.bf16.mxu0 0
        %1797 = vmatpush1.bf16.msra.mxu0 0
        %1798 = vmatprep.subr.bf16.mxu0 0
        %1799 = vmatpush1.bf16.msra.mxu0 0
        %1800 = vmatprep.subr.bf16.mxu0 0
        %1801 = vmatpush1.bf16.msra.mxu0 0
        %1802 = vmatprep.subr.bf16.mxu0 0
        %1803 = vmatpush1.bf16.msra.mxu0 0
        %1804 = vmatprep.subr.bf16.mxu0 0
        %1805 = vmatpush1.bf16.msra.mxu0 0
        %1806 = vmatprep.subr.bf16.mxu0 0
        %1807 = vmatpush1.bf16.msra.mxu0 0
        %1808 = vmatprep.mubr.bf16.mxu0 0
        %1809 = vmatmul.mubr.bf16.gmra.mrb[0].mxu0 %v1733
        %v1810 = vpop.f32.mrb[0].mxu0
        %v1811 = vadd.f32 %v780, %v1810
        %v1812 = vpop.f32.mrb[0].mxu0
        %v1813 = vadd.f32 %v782, %v1812
        %v1814 = vpop.f32.mrb[0].mxu0
        %v1815 = vpop.f32.mrb[0].mxu0
        %1816 = vdwg.mxu0
        %v1817 = vxor.u32 %v1770, 2147483648
        %v1818 = vmul.f32 %v1817, 1.442695
        %v1819 = vpow.pop %v1818
        %v1820 = vadd.f32 %v1819, 1.0
        %v1821 = vrcp.pop %v1820
        %v1822 = vmul.f32 1.0, %v1821
        %v1823 = vxor.u32 %v1772, 2147483648
        %v1824 = vmul.f32 %v1823, 1.442695
        %v1825 = vpow.pop %v1824
        %v1826 = vadd.f32 %v1825, 1.0
        %v1827 = vrcp.pop %v1826
        %v1828 = vmul.f32 1.0, %v1827
        %v1829 = vmul.f32 %v1822, %v1811
        %v1830 = vadd.f32 %v1813, %v1829
        %v1831 = vtanh.pop %v1830
        %v1832 = vsub.f32 %v1728, %v1831
        %v1833 = vmul.f32 %v1828, %v1832
        %v1834 = vadd.f32 %v1831, %v1833
        %v1835 = vsel %vm803, %v1728, %v1834
        %s1836 = scalar_lea.vmem [#allocation2], 56
        %1837 = vst.msk [vmem:[%s1836] sm:$0xff] %vm885, %v1835
        %1838 = vst.msk [vmem:[%s541] sm:$0xff] %vm885, %v1835
        %v1839 = vld [vmem:[#allocation2] sm:$0xff]
        %v1840 = vld [vmem:[#allocation2 + $0x8] sm:$0xff]
        %v1841 = vld [vmem:[#allocation2 + $0x10] sm:$0xff]
        %v1842 = vld [vmem:[#allocation2 + $0x18] sm:$0xff]
        %v1843 = vld [vmem:[#allocation2 + $0x20] sm:$0xff]
        %v1844 = vld [vmem:[#allocation2 + $0x28] sm:$0xff]
        %v1845 = vld [vmem:[#allocation2 + $0x30] sm:$0xff]
        %v1846 = vld [vmem:[#allocation2 + $0x38] sm:$0xff]
        %v1847 = vpack.c.bf16 %v1840, %v1839
        %v1848 = vpack.c.bf16 %v1842, %v1841
        %v1849 = vpack.c.bf16 %v1844, %v1843
        %v1850 = vpack.c.bf16 %v1846, %v1845
        %v1851 = vld [vmem:[#allocation6] sm:$0xff]
        %v1852 = vld [vmem:[#allocation6 + $0x8] sm:$0xff]
        %v1853 = vld [vmem:[#allocation6 + $0x10] sm:$0xff]
        %v1854 = vld [vmem:[#allocation6 + $0x18] sm:$0xff]
        %v1855 = vld [vmem:[#allocation6 + $0x20] sm:$0xff]
        %v1856 = vld [vmem:[#allocation6 + $0x28] sm:$0xff]
        %v1857 = vld [vmem:[#allocation6 + $0x30] sm:$0xff]
        %v1858 = vld [vmem:[#allocation6 + $0x38] sm:$0xff]
        %v1859 = vld [vmem:[%s6] sm:$0x3]
        %v1861 = vlaneseq
        %v1862 = vshrl.u32 %v1861, 7
        %v1863 = vsub.s32 0, %v1862
        %v1864 = vrot.slane %v1859, %v1863
        %v1865 = vlaneseq
        %v1866 = vshrl.u32 %v1865, 7
        %v1867 = vsub.s32 1, %v1866
        %v1868 = vrot.slane %v1859, %v1867
        %v1879 = vunpack.c.l.b16 %v1851
        %v1880 = vunpack.c.h.b16 %v1851
        %v1881 = vunpack.c.l.b16 %v1852
        %v1882 = vunpack.c.h.b16 %v1852
        %v1883 = vunpack.c.l.b16 %v1853
        %v1884 = vunpack.c.h.b16 %v1853
        %v1885 = vunpack.c.l.b16 %v1854
        %v1886 = vunpack.c.h.b16 %v1854
        %v1887 = vunpack.c.l.b16 %v1855
        %v1888 = vunpack.c.h.b16 %v1855
        %v1889 = vunpack.c.l.b16 %v1856
        %v1890 = vunpack.c.h.b16 %v1856
        %v1891 = vunpack.c.l.b16 %v1857
        %v1892 = vunpack.c.h.b16 %v1857
        %v1893 = vunpack.c.l.b16 %v1858
        %v1894 = vunpack.c.h.b16 %v1858
        %v1895 = vpack.c.b16 %v1881, %v1879
        %v1896 = vpack.c.b16 %v1882, %v1880
        %v1897 = vpack.c.b16 %v1885, %v1883
        %v1898 = vpack.c.b16 %v1886, %v1884
        %v1899 = vpack.c.b16 %v1889, %v1887
        %v1900 = vpack.c.b16 %v1890, %v1888
        %v1901 = vpack.c.b16 %v1893, %v1891
        %v1902 = vpack.c.b16 %v1894, %v1892
        %v1912 = vsel %vm885, %v1847, 0
        %v1915 = vsel %vm885, %v1848, 0
        %v1918 = vsel %vm885, %v1849, 0
        %v1921 = vsel %vm885, %v1850, 0
        %1923 = vmatprep.subr.bf16.mxu0 %v1896
        %1924 = vmatpush1.bf16.msra.mxu0 %v1895
        %1925 = vmatprep.subr.bf16.mxu0 %v1898
        %1926 = vmatpush1.bf16.msra.mxu0 %v1897
        %1927 = vmatprep.subr.bf16.mxu0 %v1900
        %1928 = vmatpush1.bf16.msra.mxu0 %v1899
        %1929 = vmatprep.subr.bf16.mxu0 %v1902
        %1930 = vmatpush1.bf16.msra.mxu0 %v1901
        %1931 = vmatprep.subr.bf16.mxu0 0
        %1932 = vmatpush1.bf16.msra.mxu0 0
        %1933 = vmatprep.subr.bf16.mxu0 0
        %1934 = vmatpush1.bf16.msra.mxu0 0
        %1935 = vmatprep.subr.bf16.mxu0 0
        %1936 = vmatpush1.bf16.msra.mxu0 0
        %1937 = vmatprep.subr.bf16.mxu0 0
        %1938 = vmatpush1.bf16.msra.mxu0 0
        %1939 = vmatprep.subr.bf16.mxu0 0
        %1940 = vmatpush1.bf16.msra.mxu0 0
        %1941 = vmatprep.subr.bf16.mxu0 0
        %1942 = vmatpush1.bf16.msra.mxu0 0
        %1943 = vmatprep.subr.bf16.mxu0 0
        %1944 = vmatpush1.bf16.msra.mxu0 0
        %1945 = vmatprep.subr.bf16.mxu0 0
        %1946 = vmatpush1.bf16.msra.mxu0 0
        %1947 = vmatprep.subr.bf16.mxu0 0
        %1948 = vmatpush1.bf16.msra.mxu0 0
        %1949 = vmatprep.subr.bf16.mxu0 0
        %1950 = vmatpush1.bf16.msra.mxu0 0
        %1951 = vmatprep.subr.bf16.mxu0 0
        %1952 = vmatpush1.bf16.msra.mxu0 0
        %1953 = vmatprep.subr.bf16.mxu0 0
        %1954 = vmatpush1.bf16.msra.mxu0 0
        %1955 = vmatprep.mubr.bf16.mxu0 0
        %1956 = vmatmul.mubr.bf16.gmra.mrb[0].mxu0 %v1912
        %v1957 = vpop.f32.mrb[0].mxu0
        %v1958 = vadd.f32 %v1864, %v1957
        %v1959 = vpop.f32.mrb[0].mxu0
        %v1960 = vadd.f32 %v1868, %v1959
        %v1961 = vpop.f32.mrb[0].mxu0
        %v1962 = vadd.f32 %v1864, %v1961
        %v1963 = vpop.f32.mrb[0].mxu0
        %v1964 = vadd.f32 %v1868, %v1963
        %1965 = vmatprep.mubr.bf16.mxu0 0
        %1966 = vmatmul.mubr.bf16.gmra.mrb[0].mxu0 %v1915
        %v1967 = vpop.f32.mrb[0].mxu0
        %v1968 = vadd.f32 %v1864, %v1967
        %v1969 = vpop.f32.mrb[0].mxu0
        %v1970 = vadd.f32 %v1868, %v1969
        %v1971 = vpop.f32.mrb[0].mxu0
        %v1972 = vadd.f32 %v1864, %v1971
        %v1973 = vpop.f32.mrb[0].mxu0
        %v1974 = vadd.f32 %v1868, %v1973
        %1975 = vmatprep.mubr.bf16.mxu0 0
        %1976 = vmatmul.mubr.bf16.gmra.mrb[0].mxu0 %v1918
        %v1977 = vpop.f32.mrb[0].mxu0
        %v1978 = vadd.f32 %v1864, %v1977
        %v1979 = vpop.f32.mrb[0].mxu0
        %v1980 = vadd.f32 %v1868, %v1979
        %v1981 = vpop.f32.mrb[0].mxu0
        %v1982 = vadd.f32 %v1864, %v1981
        %v1983 = vpop.f32.mrb[0].mxu0
        %v1984 = vadd.f32 %v1868, %v1983
        %1985 = vmatprep.mubr.bf16.mxu0 0
        %1986 = vmatmul.mubr.bf16.gmra.mrb[0].mxu0 %v1921
        %v1987 = vpop.f32.mrb[0].mxu0
        %v1988 = vadd.f32 %v1864, %v1987
        %v1989 = vpop.f32.mrb[0].mxu0
        %v1990 = vadd.f32 %v1868, %v1989
        %v1991 = vpop.f32.mrb[0].mxu0
        %v1992 = vadd.f32 %v1864, %v1991
        %v1993 = vpop.f32.mrb[0].mxu0
        %v1994 = vadd.f32 %v1868, %v1993
        %1995 = vdwg.mxu0
        %vm1996 = vcmp.gt.f32.partialorder %v1958, 0.0
        %vm1997 = vcmp.gt.f32.partialorder %v1960, 0.0
        %vm1998 = vcmp.gt.f32.partialorder %v1962, 0.0
        %vm1999 = vcmp.gt.f32.partialorder %v1964, 0.0
        %vm2000 = vcmp.gt.f32.partialorder %v1968, 0.0
        %vm2001 = vcmp.gt.f32.partialorder %v1970, 0.0
        %vm2002 = vcmp.gt.f32.partialorder %v1972, 0.0
        %vm2003 = vcmp.gt.f32.partialorder %v1974, 0.0
        %vm2004 = vcmp.gt.f32.partialorder %v1978, 0.0
        %vm2005 = vcmp.gt.f32.partialorder %v1980, 0.0
        %vm2006 = vcmp.gt.f32.partialorder %v1982, 0.0
        %vm2007 = vcmp.gt.f32.partialorder %v1984, 0.0
        %vm2008 = vcmp.gt.f32.partialorder %v1988, 0.0
        %vm2009 = vcmp.gt.f32.partialorder %v1990, 0.0
        %vm2010 = vcmp.gt.f32.partialorder %v1992, 0.0
        %vm2011 = vcmp.gt.f32.partialorder %v1994, 0.0
        %v2012 = vmin.f32 %v1958, 0.0
        %v2013 = vmin.f32 %v1960, 0.0
        %v2014 = vmin.f32 %v1962, 0.0
        %v2015 = vmin.f32 %v1964, 0.0
        %v2016 = vmin.f32 %v1968, 0.0
        %v2017 = vmin.f32 %v1970, 0.0
        %v2018 = vmin.f32 %v1972, 0.0
        %v2019 = vmin.f32 %v1974, 0.0
        %v2020 = vmin.f32 %v1978, 0.0
        %v2021 = vmin.f32 %v1980, 0.0
        %v2022 = vmin.f32 %v1982, 0.0
        %v2023 = vmin.f32 %v1984, 0.0
        %v2024 = vmin.f32 %v1988, 0.0
        %v2025 = vmin.f32 %v1990, 0.0
        %v2026 = vmin.f32 %v1992, 0.0
        %v2027 = vmin.f32 %v1994, 0.0
        %v2028 = vmul.f32 %v2012, 1.442695
        %v2029 = vpow.pop %v2028
        %v2030 = vmul.f32 %v2013, 1.442695
        %v2031 = vpow.pop %v2030
        %v2032 = vmul.f32 %v2014, 1.442695
        %v2033 = vpow.pop %v2032
        %v2034 = vmul.f32 %v2015, 1.442695
        %v2035 = vpow.pop %v2034
        %v2036 = vmul.f32 %v2016, 1.442695
        %v2037 = vpow.pop %v2036
        %v2038 = vmul.f32 %v2017, 1.442695
        %v2039 = vpow.pop %v2038
        %v2040 = vmul.f32 %v2018, 1.442695
        %v2041 = vpow.pop %v2040
        %v2042 = vmul.f32 %v2019, 1.442695
        %v2043 = vpow.pop %v2042
        %v2044 = vmul.f32 %v2020, 1.442695
        %v2045 = vpow.pop %v2044
        %v2046 = vmul.f32 %v2021, 1.442695
        %v2047 = vpow.pop %v2046
        %v2048 = vmul.f32 %v2022, 1.442695
        %v2049 = vpow.pop %v2048
        %v2050 = vmul.f32 %v2023, 1.442695
        %v2051 = vpow.pop %v2050
        %v2052 = vmul.f32 %v2024, 1.442695
        %v2053 = vpow.pop %v2052
        %v2054 = vmul.f32 %v2025, 1.442695
        %v2055 = vpow.pop %v2054
        %v2056 = vmul.f32 %v2026, 1.442695
        %v2057 = vpow.pop %v2056
        %v2058 = vmul.f32 %v2027, 1.442695
        %v2059 = vpow.pop %v2058
        %v2060 = vsub.f32 %v2029, 1.0
        %v2061 = vsub.f32 %v2031, 1.0
        %v2062 = vsub.f32 %v2033, 1.0
        %v2063 = vsub.f32 %v2035, 1.0
        %v2064 = vsub.f32 %v2037, 1.0
        %v2065 = vsub.f32 %v2039, 1.0
        %v2066 = vsub.f32 %v2041, 1.0
        %v2067 = vsub.f32 %v2043, 1.0
        %v2068 = vsub.f32 %v2045, 1.0
        %v2069 = vsub.f32 %v2047, 1.0
        %v2070 = vsub.f32 %v2049, 1.0
        %v2071 = vsub.f32 %v2051, 1.0
        %v2072 = vsub.f32 %v2053, 1.0
        %v2073 = vsub.f32 %v2055, 1.0
        %v2074 = vsub.f32 %v2057, 1.0
        %v2075 = vsub.f32 %v2059, 1.0
        %v2076 = vsel %vm1996, %v1958, %v2060
        %v2077 = vsel %vm1997, %v1960, %v2061
        %v2078 = vsel %vm1998, %v1962, %v2062
        %v2079 = vsel %vm1999, %v1964, %v2063
        %v2080 = vsel %vm2000, %v1968, %v2064
        %v2081 = vsel %vm2001, %v1970, %v2065
        %v2082 = vsel %vm2002, %v1972, %v2066
        %v2083 = vsel %vm2003, %v1974, %v2067
        %v2084 = vsel %vm2004, %v1978, %v2068
        %v2085 = vsel %vm2005, %v1980, %v2069
        %v2086 = vsel %vm2006, %v1982, %v2070
        %v2087 = vsel %vm2007, %v1984, %v2071
        %v2088 = vsel %vm2008, %v1988, %v2072
        %v2089 = vsel %vm2009, %v1990, %v2073
        %v2090 = vsel %vm2010, %v1992, %v2074
        %v2091 = vsel %vm2011, %v1994, %v2075
        %v2092 = vpack.c.bf16 %v2078, %v2076
        %v2093 = vpack.c.bf16 %v2079, %v2077
        %v2094 = vpack.c.bf16 %v2082, %v2080
        %v2095 = vpack.c.bf16 %v2083, %v2081
        %v2096 = vpack.c.bf16 %v2086, %v2084
        %v2097 = vpack.c.bf16 %v2087, %v2085
        %v2098 = vpack.c.bf16 %v2090, %v2088
        %v2099 = vpack.c.bf16 %v2091, %v2089
        %v2100 = vld [vmem:[%s7] sm:$0xff]
        %v2101 = vld [vmem:[%s7 + $0x8] sm:$0xff]
        %v2102 = vld [vmem:[%s7 + $0x10] sm:$0xff]
        %v2103 = vld [vmem:[%s7 + $0x18] sm:$0xff]
        %v2104 = vld [vmem:[%s7 + $0x20] sm:$0xff]
        %v2105 = vld [vmem:[%s7 + $0x28] sm:$0xff]
        %v2106 = vld [vmem:[%s7 + $0x30] sm:$0xff]
        %v2107 = vld [vmem:[%s7 + $0x38] sm:$0xff]
        %v2108 = vld [vmem:[%s7 + $0x40] sm:$0xff]
        %v2109 = vld [vmem:[%s7 + $0x48] sm:$0xff]
        %v2110 = vld [vmem:[%s7 + $0x50] sm:$0xff]
        %v2111 = vld [vmem:[%s7 + $0x58] sm:$0xff]
        %v2112 = vld [vmem:[%s7 + $0x60] sm:$0xff]
        %v2113 = vld [vmem:[%s7 + $0x68] sm:$0xff]
        %v2114 = vld [vmem:[%s7 + $0x70] sm:$0xff]
        %v2115 = vld [vmem:[%s7 + $0x78] sm:$0xff]
        %v2116 = vld [vmem:[%s7 + $0x80] sm:$0xff]
        %v2117 = vld [vmem:[%s7 + $0x88] sm:$0xff]
        %v2118 = vld [vmem:[%s7 + $0x90] sm:$0xff]
        %v2119 = vld [vmem:[%s7 + $0x98] sm:$0xff]
        %v2120 = vld [vmem:[%s7 + $0xa0] sm:$0xff]
        %v2121 = vld [vmem:[%s7 + $0xa8] sm:$0xff]
        %v2122 = vld [vmem:[%s7 + $0xb0] sm:$0xff]
        %v2123 = vld [vmem:[%s7 + $0xb8] sm:$0xff]
        %v2124 = vld [vmem:[%s7 + $0xc0] sm:$0xff]
        %v2125 = vld [vmem:[%s7 + $0xc8] sm:$0xff]
        %v2126 = vld [vmem:[%s7 + $0xd0] sm:$0xff]
        %v2127 = vld [vmem:[%s7 + $0xd8] sm:$0xff]
        %v2128 = vld [vmem:[%s7 + $0xe0] sm:$0xff]
        %v2129 = vld [vmem:[%s7 + $0xe8] sm:$0xff]
        %v2130 = vld [vmem:[%s7 + $0xf0] sm:$0xff]
        %v2131 = vld [vmem:[%s7 + $0xf8] sm:$0xff]
        %v2132 = vld [vmem:[%s8] sm:$0x3]
        %v2134 = vlaneseq
        %v2135 = vshrl.u32 %v2134, 7
        %v2136 = vsub.s32 0, %v2135
        %v2137 = vrot.slane %v2132, %v2136
        %v2138 = vlaneseq
        %v2139 = vshrl.u32 %v2138, 7
        %v2140 = vsub.s32 1, %v2139
        %v2141 = vrot.slane %v2132, %v2140
        %v2176 = vunpack.c.l.b16 %v2100
        %v2177 = vunpack.c.h.b16 %v2100
        %v2178 = vunpack.c.l.b16 %v2101
        %v2179 = vunpack.c.h.b16 %v2101
        %v2180 = vunpack.c.l.b16 %v2102
        %v2181 = vunpack.c.h.b16 %v2102
        %v2182 = vunpack.c.l.b16 %v2103
        %v2183 = vunpack.c.h.b16 %v2103
        %v2184 = vunpack.c.l.b16 %v2104
        %v2185 = vunpack.c.h.b16 %v2104
        %v2186 = vunpack.c.l.b16 %v2105
        %v2187 = vunpack.c.h.b16 %v2105
        %v2188 = vunpack.c.l.b16 %v2106
        %v2189 = vunpack.c.h.b16 %v2106
        %v2190 = vunpack.c.l.b16 %v2107
        %v2191 = vunpack.c.h.b16 %v2107
        %v2192 = vunpack.c.l.b16 %v2108
        %v2193 = vunpack.c.h.b16 %v2108
        %v2194 = vunpack.c.l.b16 %v2109
        %v2195 = vunpack.c.h.b16 %v2109
        %v2196 = vunpack.c.l.b16 %v2110
        %v2197 = vunpack.c.h.b16 %v2110
        %v2198 = vunpack.c.l.b16 %v2111
        %v2199 = vunpack.c.h.b16 %v2111
        %v2200 = vunpack.c.l.b16 %v2112
        %v2201 = vunpack.c.h.b16 %v2112
        %v2202 = vunpack.c.l.b16 %v2113
        %v2203 = vunpack.c.h.b16 %v2113
        %v2204 = vunpack.c.l.b16 %v2114
        %v2205 = vunpack.c.h.b16 %v2114
        %v2206 = vunpack.c.l.b16 %v2115
        %v2207 = vunpack.c.h.b16 %v2115
        %v2208 = vunpack.c.l.b16 %v2116
        %v2209 = vunpack.c.h.b16 %v2116
        %v2210 = vunpack.c.l.b16 %v2117
        %v2211 = vunpack.c.h.b16 %v2117
        %v2212 = vunpack.c.l.b16 %v2118
        %v2213 = vunpack.c.h.b16 %v2118
        %v2214 = vunpack.c.l.b16 %v2119
        %v2215 = vunpack.c.h.b16 %v2119
        %v2216 = vunpack.c.l.b16 %v2120
        %v2217 = vunpack.c.h.b16 %v2120
        %v2218 = vunpack.c.l.b16 %v2121
        %v2219 = vunpack.c.h.b16 %v2121
        %v2220 = vunpack.c.l.b16 %v2122
        %v2221 = vunpack.c.h.b16 %v2122
        %v2222 = vunpack.c.l.b16 %v2123
        %v2223 = vunpack.c.h.b16 %v2123
        %v2224 = vunpack.c.l.b16 %v2124
        %v2225 = vunpack.c.h.b16 %v2124
        %v2226 = vunpack.c.l.b16 %v2125
        %v2227 = vunpack.c.h.b16 %v2125
        %v2228 = vunpack.c.l.b16 %v2126
        %v2229 = vunpack.c.h.b16 %v2126
        %v2230 = vunpack.c.l.b16 %v2127
        %v2231 = vunpack.c.h.b16 %v2127
        %v2232 = vunpack.c.l.b16 %v2128
        %v2233 = vunpack.c.h.b16 %v2128
        %v2234 = vunpack.c.l.b16 %v2129
        %v2235 = vunpack.c.h.b16 %v2129
        %v2236 = vunpack.c.l.b16 %v2130
        %v2237 = vunpack.c.h.b16 %v2130
        %v2238 = vunpack.c.l.b16 %v2131
        %v2239 = vunpack.c.h.b16 %v2131
        %v2240 = vpack.c.b16 %v2178, %v2176
        %v2241 = vpack.c.b16 %v2179, %v2177
        %v2242 = vpack.c.b16 %v2182, %v2180
        %v2243 = vpack.c.b16 %v2183, %v2181
        %v2244 = vpack.c.b16 %v2186, %v2184
        %v2245 = vpack.c.b16 %v2187, %v2185
        %v2246 = vpack.c.b16 %v2190, %v2188
        %v2247 = vpack.c.b16 %v2191, %v2189
        %v2248 = vpack.c.b16 %v2194, %v2192
        %v2249 = vpack.c.b16 %v2195, %v2193
        %v2250 = vpack.c.b16 %v2198, %v2196
        %v2251 = vpack.c.b16 %v2199, %v2197
        %v2252 = vpack.c.b16 %v2202, %v2200
        %v2253 = vpack.c.b16 %v2203, %v2201
        %v2254 = vpack.c.b16 %v2206, %v2204
        %v2255 = vpack.c.b16 %v2207, %v2205
        %v2256 = vpack.c.b16 %v2210, %v2208
        %v2257 = vpack.c.b16 %v2211, %v2209
        %v2258 = vpack.c.b16 %v2214, %v2212
        %v2259 = vpack.c.b16 %v2215, %v2213
        %v2260 = vpack.c.b16 %v2218, %v2216
        %v2261 = vpack.c.b16 %v2219, %v2217
        %v2262 = vpack.c.b16 %v2222, %v2220
        %v2263 = vpack.c.b16 %v2223, %v2221
        %v2264 = vpack.c.b16 %v2226, %v2224
        %v2265 = vpack.c.b16 %v2227, %v2225
        %v2266 = vpack.c.b16 %v2230, %v2228
        %v2267 = vpack.c.b16 %v2231, %v2229
        %v2268 = vpack.c.b16 %v2234, %v2232
        %v2269 = vpack.c.b16 %v2235, %v2233
        %v2270 = vpack.c.b16 %v2238, %v2236
        %v2271 = vpack.c.b16 %v2239, %v2237
        %2304 = vmatprep.subr.bf16.mxu0 %v2241
        %2305 = vmatpush1.bf16.msra.mxu0 %v2240
        %2306 = vmatprep.subr.bf16.mxu0 %v2243
        %2307 = vmatpush1.bf16.msra.mxu0 %v2242
        %2308 = vmatprep.subr.bf16.mxu0 %v2245
        %2309 = vmatpush1.bf16.msra.mxu0 %v2244
        %2310 = vmatprep.subr.bf16.mxu0 %v2247
        %2311 = vmatpush1.bf16.msra.mxu0 %v2246
        %2312 = vmatprep.subr.bf16.mxu0 %v2249
        %2313 = vmatpush1.bf16.msra.mxu0 %v2248
        %2314 = vmatprep.subr.bf16.mxu0 %v2251
        %2315 = vmatpush1.bf16.msra.mxu0 %v2250
        %2316 = vmatprep.subr.bf16.mxu0 %v2253
        %2317 = vmatpush1.bf16.msra.mxu0 %v2252
        %2318 = vmatprep.subr.bf16.mxu0 %v2255
        %2319 = vmatpush1.bf16.msra.mxu0 %v2254
        %2320 = vmatprep.subr.bf16.mxu0 %v2257
        %2321 = vmatpush1.bf16.msra.mxu0 %v2256
        %2322 = vmatprep.subr.bf16.mxu0 %v2259
        %2323 = vmatpush1.bf16.msra.mxu0 %v2258
        %2324 = vmatprep.subr.bf16.mxu0 %v2261
        %2325 = vmatpush1.bf16.msra.mxu0 %v2260
        %2326 = vmatprep.subr.bf16.mxu0 %v2263
        %2327 = vmatpush1.bf16.msra.mxu0 %v2262
        %2328 = vmatprep.subr.bf16.mxu0 %v2265
        %2329 = vmatpush1.bf16.msra.mxu0 %v2264
        %2330 = vmatprep.subr.bf16.mxu0 %v2267
        %2331 = vmatpush1.bf16.msra.mxu0 %v2266
        %2332 = vmatprep.subr.bf16.mxu0 %v2269
        %2333 = vmatpush1.bf16.msra.mxu0 %v2268
        %2334 = vmatprep.subr.bf16.mxu0 %v2271
        %2335 = vmatpush1.bf16.msra.mxu0 %v2270
        %2336 = vmatprep.mubr.bf16.mxu0 %v2093
        %2337 = vmatmul.mubr.bf16.gmra.mrb[0].mxu0 %v2092
        %v2338 = vpop.f32.mrb[0].mxu0
        %v2339 = vadd.f32 %v2137, %v2338
        %v2340 = vpop.f32.mrb[0].mxu0
        %v2341 = vadd.f32 %v2141, %v2340
        %v2342 = vpop.f32.mrb[0].mxu0
        %v2343 = vadd.f32 %v2137, %v2342
        %v2344 = vpop.f32.mrb[0].mxu0
        %v2345 = vadd.f32 %v2141, %v2344
        %2346 = vmatprep.mubr.bf16.mxu0 %v2095
        %2347 = vmatmul.mubr.bf16.gmra.mrb[0].mxu0 %v2094
        %v2348 = vpop.f32.mrb[0].mxu0
        %v2349 = vadd.f32 %v2137, %v2348
        %v2350 = vpop.f32.mrb[0].mxu0
        %v2351 = vadd.f32 %v2141, %v2350
        %v2352 = vpop.f32.mrb[0].mxu0
        %v2353 = vadd.f32 %v2137, %v2352
        %v2354 = vpop.f32.mrb[0].mxu0
        %v2355 = vadd.f32 %v2141, %v2354
        %2356 = vmatprep.mubr.bf16.mxu0 %v2097
        %2357 = vmatmul.mubr.bf16.gmra.mrb[0].mxu0 %v2096
        %v2358 = vpop.f32.mrb[0].mxu0
        %v2359 = vadd.f32 %v2137, %v2358
        %v2360 = vpop.f32.mrb[0].mxu0
        %v2361 = vadd.f32 %v2141, %v2360
        %v2362 = vpop.f32.mrb[0].mxu0
        %v2363 = vadd.f32 %v2137, %v2362
        %v2364 = vpop.f32.mrb[0].mxu0
        %v2365 = vadd.f32 %v2141, %v2364
        %2366 = vmatprep.mubr.bf16.mxu0 %v2099
        %2367 = vmatmul.mubr.bf16.gmra.mrb[0].mxu0 %v2098
        %v2368 = vpop.f32.mrb[0].mxu0
        %v2369 = vadd.f32 %v2137, %v2368
        %v2370 = vpop.f32.mrb[0].mxu0
        %v2371 = vadd.f32 %v2141, %v2370
        %v2372 = vpop.f32.mrb[0].mxu0
        %v2373 = vadd.f32 %v2137, %v2372
        %v2374 = vpop.f32.mrb[0].mxu0
        %v2375 = vadd.f32 %v2141, %v2374
        %2376 = vdwg.mxu0
        %vm2377 = vcmp.gt.f32.partialorder %v2339, 0.0
        %vm2378 = vcmp.gt.f32.partialorder %v2341, 0.0
        %vm2379 = vcmp.gt.f32.partialorder %v2343, 0.0
        %vm2380 = vcmp.gt.f32.partialorder %v2345, 0.0
        %vm2381 = vcmp.gt.f32.partialorder %v2349, 0.0
        %vm2382 = vcmp.gt.f32.partialorder %v2351, 0.0
        %vm2383 = vcmp.gt.f32.partialorder %v2353, 0.0
        %vm2384 = vcmp.gt.f32.partialorder %v2355, 0.0
        %vm2385 = vcmp.gt.f32.partialorder %v2359, 0.0
        %vm2386 = vcmp.gt.f32.partialorder %v2361, 0.0
        %vm2387 = vcmp.gt.f32.partialorder %v2363, 0.0
        %vm2388 = vcmp.gt.f32.partialorder %v2365, 0.0
        %vm2389 = vcmp.gt.f32.partialorder %v2369, 0.0
        %vm2390 = vcmp.gt.f32.partialorder %v2371, 0.0
        %vm2391 = vcmp.gt.f32.partialorder %v2373, 0.0
        %vm2392 = vcmp.gt.f32.partialorder %v2375, 0.0
        %v2393 = vmin.f32 %v2339, 0.0
        %v2394 = vmin.f32 %v2341, 0.0
        %v2395 = vmin.f32 %v2343, 0.0
        %v2396 = vmin.f32 %v2345, 0.0
        %v2397 = vmin.f32 %v2349, 0.0
        %v2398 = vmin.f32 %v2351, 0.0
        %v2399 = vmin.f32 %v2353, 0.0
        %v2400 = vmin.f32 %v2355, 0.0
        %v2401 = vmin.f32 %v2359, 0.0
        %v2402 = vmin.f32 %v2361, 0.0
        %v2403 = vmin.f32 %v2363, 0.0
        %v2404 = vmin.f32 %v2365, 0.0
        %v2405 = vmin.f32 %v2369, 0.0
        %v2406 = vmin.f32 %v2371, 0.0
        %v2407 = vmin.f32 %v2373, 0.0
        %v2408 = vmin.f32 %v2375, 0.0
        %v2409 = vmul.f32 %v2393, 1.442695
        %v2410 = vpow.pop %v2409
        %v2411 = vmul.f32 %v2394, 1.442695
        %v2412 = vpow.pop %v2411
        %v2413 = vmul.f32 %v2395, 1.442695
        %v2414 = vpow.pop %v2413
        %v2415 = vmul.f32 %v2396, 1.442695
        %v2416 = vpow.pop %v2415
        %v2417 = vmul.f32 %v2397, 1.442695
        %v2418 = vpow.pop %v2417
        %v2419 = vmul.f32 %v2398, 1.442695
        %v2420 = vpow.pop %v2419
        %v2421 = vmul.f32 %v2399, 1.442695
        %v2422 = vpow.pop %v2421
        %v2423 = vmul.f32 %v2400, 1.442695
        %v2424 = vpow.pop %v2423
        %v2425 = vmul.f32 %v2401, 1.442695
        %v2426 = vpow.pop %v2425
        %v2427 = vmul.f32 %v2402, 1.442695
        %v2428 = vpow.pop %v2427
        %v2429 = vmul.f32 %v2403, 1.442695
        %v2430 = vpow.pop %v2429
        %v2431 = vmul.f32 %v2404, 1.442695
        %v2432 = vpow.pop %v2431
        %v2433 = vmul.f32 %v2405, 1.442695
        %v2434 = vpow.pop %v2433
        %v2435 = vmul.f32 %v2406, 1.442695
        %v2436 = vpow.pop %v2435
        %v2437 = vmul.f32 %v2407, 1.442695
        %v2438 = vpow.pop %v2437
        %v2439 = vmul.f32 %v2408, 1.442695
        %v2440 = vpow.pop %v2439
        %v2441 = vsub.f32 %v2410, 1.0
        %v2442 = vsub.f32 %v2412, 1.0
        %v2443 = vsub.f32 %v2414, 1.0
        %v2444 = vsub.f32 %v2416, 1.0
        %v2445 = vsub.f32 %v2418, 1.0
        %v2446 = vsub.f32 %v2420, 1.0
        %v2447 = vsub.f32 %v2422, 1.0
        %v2448 = vsub.f32 %v2424, 1.0
        %v2449 = vsub.f32 %v2426, 1.0
        %v2450 = vsub.f32 %v2428, 1.0
        %v2451 = vsub.f32 %v2430, 1.0
        %v2452 = vsub.f32 %v2432, 1.0
        %v2453 = vsub.f32 %v2434, 1.0
        %v2454 = vsub.f32 %v2436, 1.0
        %v2455 = vsub.f32 %v2438, 1.0
        %v2456 = vsub.f32 %v2440, 1.0
        %v2457 = vsel %vm2377, %v2339, %v2441
        %v2458 = vsel %vm2378, %v2341, %v2442
        %v2459 = vsel %vm2379, %v2343, %v2443
        %v2460 = vsel %vm2380, %v2345, %v2444
        %v2461 = vsel %vm2381, %v2349, %v2445
        %v2462 = vsel %vm2382, %v2351, %v2446
        %v2463 = vsel %vm2383, %v2353, %v2447
        %v2464 = vsel %vm2384, %v2355, %v2448
        %v2465 = vsel %vm2385, %v2359, %v2449
        %v2466 = vsel %vm2386, %v2361, %v2450
        %v2467 = vsel %vm2387, %v2363, %v2451
        %v2468 = vsel %vm2388, %v2365, %v2452
        %v2469 = vsel %vm2389, %v2369, %v2453
        %v2470 = vsel %vm2390, %v2371, %v2454
        %v2471 = vsel %vm2391, %v2373, %v2455
        %v2472 = vsel %vm2392, %v2375, %v2456
        %v2473 = vpack.c.bf16 %v2459, %v2457
        %v2474 = vpack.c.bf16 %v2460, %v2458
        %v2475 = vpack.c.bf16 %v2463, %v2461
        %v2476 = vpack.c.bf16 %v2464, %v2462
        %v2477 = vpack.c.bf16 %v2467, %v2465
        %v2478 = vpack.c.bf16 %v2468, %v2466
        %v2479 = vpack.c.bf16 %v2471, %v2469
        %v2480 = vpack.c.bf16 %v2472, %v2470
        %v2481 = vld [vmem:[#allocation8] sm:$0xf]
        %v2482 = vld [vmem:[#allocation8 + $0x4] sm:$0xf]
        %v2483 = vld [vmem:[#allocation8 + $0x8] sm:$0xf]
        %v2484 = vld [vmem:[#allocation8 + $0xc] sm:$0xf]
        %v2485 = vld [vmem:[#allocation8 + $0x10] sm:$0xf]
        %v2486 = vld [vmem:[#allocation8 + $0x14] sm:$0xf]
        %v2487 = vld [vmem:[#allocation8 + $0x18] sm:$0xf]
        %v2488 = vld [vmem:[#allocation8 + $0x1c] sm:$0xf]
        %v2489 = vld [vmem:[#allocation8 + $0x20] sm:$0xf]
        %v2490 = vld [vmem:[#allocation8 + $0x24] sm:$0xf]
        %v2491 = vld [vmem:[#allocation8 + $0x28] sm:$0xf]
        %v2492 = vld [vmem:[#allocation8 + $0x2c] sm:$0xf]
        %v2493 = vld [vmem:[#allocation8 + $0x30] sm:$0xf]
        %v2494 = vld [vmem:[#allocation8 + $0x34] sm:$0xf]
        %v2495 = vld [vmem:[#allocation8 + $0x38] sm:$0xf]
        %v2496 = vld [vmem:[#allocation8 + $0x3c] sm:$0xf]
        %v2497 = vld [vmem:[#allocation8 + $0x40] sm:$0xf]
        %v2498 = vld [vmem:[#allocation8 + $0x44] sm:$0xf]
        %v2499 = vld [vmem:[#allocation8 + $0x48] sm:$0xf]
        %v2500 = vld [vmem:[#allocation8 + $0x4c] sm:$0xf]
        %v2501 = vld [vmem:[#allocation8 + $0x50] sm:$0xf]
        %v2502 = vld [vmem:[#allocation8 + $0x54] sm:$0xf]
        %v2503 = vld [vmem:[#allocation8 + $0x58] sm:$0xf]
        %v2504 = vld [vmem:[#allocation8 + $0x5c] sm:$0xf]
        %v2505 = vld [vmem:[#allocation8 + $0x60] sm:$0xf]
        %v2506 = vld [vmem:[#allocation8 + $0x64] sm:$0xf]
        %v2507 = vld [vmem:[#allocation8 + $0x68] sm:$0xf]
        %v2508 = vld [vmem:[#allocation8 + $0x6c] sm:$0xf]
        %v2509 = vld [vmem:[#allocation8 + $0x70] sm:$0xf]
        %v2510 = vld [vmem:[#allocation8 + $0x74] sm:$0xf]
        %v2511 = vld [vmem:[#allocation8 + $0x78] sm:$0xf]
        %v2512 = vld [vmem:[#allocation8 + $0x7c] sm:$0xf]
        %v2513 = vld [vmem:[%s10] sm:$0x1]
        %v2515 = vlaneseq
        %v2516 = vshrl.u32 %v2515, 7
        %v2517 = vsub.s32 0, %v2516
        %v2518 = vrot.slane %v2513, %v2517
        %v2552 = vunpack.c.l.b16 %v2481
        %v2553 = vunpack.c.l.b16 %v2482
        %v2554 = vunpack.c.l.b16 %v2483
        %v2555 = vunpack.c.l.b16 %v2484
        %v2556 = vunpack.c.l.b16 %v2485
        %v2557 = vunpack.c.l.b16 %v2486
        %v2558 = vunpack.c.l.b16 %v2487
        %v2559 = vunpack.c.l.b16 %v2488
        %v2560 = vunpack.c.l.b16 %v2489
        %v2561 = vunpack.c.l.b16 %v2490
        %v2562 = vunpack.c.l.b16 %v2491
        %v2563 = vunpack.c.l.b16 %v2492
        %v2564 = vunpack.c.l.b16 %v2493
        %v2565 = vunpack.c.l.b16 %v2494
        %v2566 = vunpack.c.l.b16 %v2495
        %v2567 = vunpack.c.l.b16 %v2496
        %v2568 = vunpack.c.l.b16 %v2497
        %v2569 = vunpack.c.l.b16 %v2498
        %v2570 = vunpack.c.l.b16 %v2499
        %v2571 = vunpack.c.l.b16 %v2500
        %v2572 = vunpack.c.l.b16 %v2501
        %v2573 = vunpack.c.l.b16 %v2502
        %v2574 = vunpack.c.l.b16 %v2503
        %v2575 = vunpack.c.l.b16 %v2504
        %v2576 = vunpack.c.l.b16 %v2505
        %v2577 = vunpack.c.l.b16 %v2506
        %v2578 = vunpack.c.l.b16 %v2507
        %v2579 = vunpack.c.l.b16 %v2508
        %v2580 = vunpack.c.l.b16 %v2509
        %v2581 = vunpack.c.l.b16 %v2510
        %v2582 = vunpack.c.l.b16 %v2511
        %v2583 = vunpack.c.l.b16 %v2512
        %v2584 = vpack.c.b16 %v2553, %v2552
        %v2585 = vpack.c.b16 %v2555, %v2554
        %v2586 = vpack.c.b16 %v2557, %v2556
        %v2587 = vpack.c.b16 %v2559, %v2558
        %v2588 = vpack.c.b16 %v2561, %v2560
        %v2589 = vpack.c.b16 %v2563, %v2562
        %v2590 = vpack.c.b16 %v2565, %v2564
        %v2591 = vpack.c.b16 %v2567, %v2566
        %v2592 = vpack.c.b16 %v2569, %v2568
        %v2593 = vpack.c.b16 %v2571, %v2570
        %v2594 = vpack.c.b16 %v2573, %v2572
        %v2595 = vpack.c.b16 %v2575, %v2574
        %v2596 = vpack.c.b16 %v2577, %v2576
        %v2597 = vpack.c.b16 %v2579, %v2578
        %v2598 = vpack.c.b16 %v2581, %v2580
        %v2599 = vpack.c.b16 %v2583, %v2582
        %2616 = vmatprep.subr.bf16.mxu0 0
        %2617 = vmatpush1.bf16.msra.mxu0 %v2584
        %2618 = vmatprep.subr.bf16.mxu0 0
        %2619 = vmatpush1.bf16.msra.mxu0 %v2585
        %2620 = vmatprep.subr.bf16.mxu0 0
        %2621 = vmatpush1.bf16.msra.mxu0 %v2586
        %2622 = vmatprep.subr.bf16.mxu0 0
        %2623 = vmatpush1.bf16.msra.mxu0 %v2587
        %2624 = vmatprep.subr.bf16.mxu0 0
        %2625 = vmatpush1.bf16.msra.mxu0 %v2588
        %2626 = vmatprep.subr.bf16.mxu0 0
        %2627 = vmatpush1.bf16.msra.mxu0 %v2589
        %2628 = vmatprep.subr.bf16.mxu0 0
        %2629 = vmatpush1.bf16.msra.mxu0 %v2590
        %2630 = vmatprep.subr.bf16.mxu0 0
        %2631 = vmatpush1.bf16.msra.mxu0 %v2591
        %2632 = vmatprep.subr.bf16.mxu0 0
        %2633 = vmatpush1.bf16.msra.mxu0 %v2592
        %2634 = vmatprep.subr.bf16.mxu0 0
        %2635 = vmatpush1.bf16.msra.mxu0 %v2593
        %2636 = vmatprep.subr.bf16.mxu0 0
        %2637 = vmatpush1.bf16.msra.mxu0 %v2594
        %2638 = vmatprep.subr.bf16.mxu0 0
        %2639 = vmatpush1.bf16.msra.mxu0 %v2595
        %2640 = vmatprep.subr.bf16.mxu0 0
        %2641 = vmatpush1.bf16.msra.mxu0 %v2596
        %2642 = vmatprep.subr.bf16.mxu0 0
        %2643 = vmatpush1.bf16.msra.mxu0 %v2597
        %2644 = vmatprep.subr.bf16.mxu0 0
        %2645 = vmatpush1.bf16.msra.mxu0 %v2598
        %2646 = vmatprep.subr.bf16.mxu0 0
        %2647 = vmatpush1.bf16.msra.mxu0 %v2599
        %2648 = vmatprep.mubr.bf16.mxu0 %v2474
        %2649 = vmatmul.mubr.bf16.gmra.mrb[0].mxu0 %v2473
        %v2650 = vpop.f32.mrb[0].mxu0
        %v2651 = vadd.f32 %v2518, %v2650
        %v2652 = vpop.f32.mrb[0].mxu0
        %v2653 = vpop.f32.mrb[0].mxu0
        %v2654 = vadd.f32 %v2518, %v2653
        %v2655 = vpop.f32.mrb[0].mxu0
        %2656 = vmatprep.mubr.bf16.mxu0 %v2476
        %2657 = vmatmul.mubr.bf16.gmra.mrb[0].mxu0 %v2475
        %v2658 = vpop.f32.mrb[0].mxu0
        %v2659 = vadd.f32 %v2518, %v2658
        %v2660 = vpop.f32.mrb[0].mxu0
        %v2661 = vpop.f32.mrb[0].mxu0
        %v2662 = vadd.f32 %v2518, %v2661
        %v2663 = vpop.f32.mrb[0].mxu0
        %2664 = vmatprep.mubr.bf16.mxu0 %v2478
        %2665 = vmatmul.mubr.bf16.gmra.mrb[0].mxu0 %v2477
        %v2666 = vpop.f32.mrb[0].mxu0
        %v2667 = vadd.f32 %v2518, %v2666
        %v2668 = vpop.f32.mrb[0].mxu0
        %v2669 = vpop.f32.mrb[0].mxu0
        %v2670 = vadd.f32 %v2518, %v2669
        %v2671 = vpop.f32.mrb[0].mxu0
        %2672 = vmatprep.mubr.bf16.mxu0 %v2480
        %2673 = vmatmul.mubr.bf16.gmra.mrb[0].mxu0 %v2479
        %v2674 = vpop.f32.mrb[0].mxu0
        %v2675 = vadd.f32 %v2518, %v2674
        %v2676 = vpop.f32.mrb[0].mxu0
        %v2677 = vpop.f32.mrb[0].mxu0
        %v2678 = vadd.f32 %v2518, %v2677
        %v2679 = vpop.f32.mrb[0].mxu0
        %2680 = vdwg.mxu0
        %2681 = vmax.xlane.f32.xlu0 %v2651
        %v2682 = vpop.xlane.xlu0 %2681
        %2683 = vmax.xlane.f32.xlu0 %v2654
        %v2684 = vpop.xlane.xlu0 %2683
        %2685 = vmax.xlane.f32.xlu0 %v2659
        %v2686 = vpop.xlane.xlu0 %2685
        %2687 = vmax.xlane.f32.xlu0 %v2662
        %v2688 = vpop.xlane.xlu0 %2687
        %2689 = vmax.xlane.f32.xlu0 %v2667
        %v2690 = vpop.xlane.xlu0 %2689
        %2691 = vmax.xlane.f32.xlu0 %v2670
        %v2692 = vpop.xlane.xlu0 %2691
        %2693 = vmax.xlane.f32.xlu0 %v2675
        %v2694 = vpop.xlane.xlu0 %2693
        %2695 = vmax.xlane.f32.xlu0 %v2678
        %v2696 = vpop.xlane.xlu0 %2695
        %v2697 = vsub.f32 %v2651, %v2682
        %v2698 = vsub.f32 %v2654, %v2684
        %v2699 = vsub.f32 %v2659, %v2686
        %v2700 = vsub.f32 %v2662, %v2688
        %v2701 = vsub.f32 %v2667, %v2690
        %v2702 = vsub.f32 %v2670, %v2692
        %v2703 = vsub.f32 %v2675, %v2694
        %v2704 = vsub.f32 %v2678, %v2696
        %v2705 = vmul.f32 %v2697, 1.442695
        %v2706 = vpow.pop %v2705
        %v2707 = vmul.f32 %v2698, 1.442695
        %v2708 = vpow.pop %v2707
        %v2709 = vmul.f32 %v2699, 1.442695
        %v2710 = vpow.pop %v2709
        %v2711 = vmul.f32 %v2700, 1.442695
        %v2712 = vpow.pop %v2711
        %v2713 = vmul.f32 %v2701, 1.442695
        %v2714 = vpow.pop %v2713
        %v2715 = vmul.f32 %v2702, 1.442695
        %v2716 = vpow.pop %v2715
        %v2717 = vmul.f32 %v2703, 1.442695
        %v2718 = vpow.pop %v2717
        %v2719 = vmul.f32 %v2704, 1.442695
        %v2720 = vpow.pop %v2719
        %2721 = vadd.xlane.f32.xlu0 %v2706
        %v2722 = vpop.xlane.xlu0 %2721
        %2723 = vadd.xlane.f32.xlu0 %v2708
        %v2724 = vpop.xlane.xlu0 %2723
        %2725 = vadd.xlane.f32.xlu0 %v2710
        %v2726 = vpop.xlane.xlu0 %2725
        %2727 = vadd.xlane.f32.xlu0 %v2712
        %v2728 = vpop.xlane.xlu0 %2727
        %2729 = vadd.xlane.f32.xlu0 %v2714
        %v2730 = vpop.xlane.xlu0 %2729
        %2731 = vadd.xlane.f32.xlu0 %v2716
        %v2732 = vpop.xlane.xlu0 %2731
        %2733 = vadd.xlane.f32.xlu0 %v2718
        %v2734 = vpop.xlane.xlu0 %2733
        %2735 = vadd.xlane.f32.xlu0 %v2720
        %v2736 = vpop.xlane.xlu0 %2735
        %v2737 = vrcp.pop %v2722
        %v2738 = vmul.f32 %v2706, %v2737
        %v2739 = vrcp.pop %v2724
        %v2740 = vmul.f32 %v2708, %v2739
        %v2741 = vrcp.pop %v2726
        %v2742 = vmul.f32 %v2710, %v2741
        %v2743 = vrcp.pop %v2728
        %v2744 = vmul.f32 %v2712, %v2743
        %v2745 = vrcp.pop %v2730
        %v2746 = vmul.f32 %v2714, %v2745
        %v2747 = vrcp.pop %v2732
        %v2748 = vmul.f32 %v2716, %v2747
        %v2749 = vrcp.pop %v2734
        %v2750 = vmul.f32 %v2718, %v2749
        %v2751 = vrcp.pop %v2736
        %v2752 = vmul.f32 %v2720, %v2751
        %2753 = vst [vmem:[%s527] sm:$0xff] %v2738
        %2754 = vst [vmem:[%s527 + $0x8] sm:$0xff] %v2740
        %2755 = vst [vmem:[%s527 + $0x10] sm:$0xff] %v2742
        %2756 = vst [vmem:[%s527 + $0x18] sm:$0xff] %v2744
        %2757 = vst [vmem:[%s527 + $0x20] sm:$0xff] %v2746
        %2758 = vst [vmem:[%s527 + $0x28] sm:$0xff] %v2748
        %2759 = vst [vmem:[%s527 + $0x30] sm:$0xff] %v2750
        %2760 = vst [vmem:[%s527 + $0x38] sm:$0xff] %v2752
        %s2761 = sand.u32 %s275, 1
        %s2762 = sand.u32 %s275, 1
        %s2763 = smul.addr %s2762, 64
        %s2764 = scalar_lea.vmem [#allocation9], %s2763
        %p2765 = scmp.lt.s32.totalorder %s26, 1
        %s2766 = scalar_select %p2765, %s26, 1
        %s2767 = smul.addr %s2766, 8
        %s2768 = scalar_lea.vmem %s12, %s2767
        // Predicated region
        $region115: #{recurrent_actor_forward.1} parent=97 // pred_check
          %p2769 = pneg %p285
        $region116: #{recurrent_actor_forward.1} parent=97 // pred_check_branch
          %2771 = sbr.rel (%p2769) target = $region118
        $region117: #{recurrent_actor_forward.1} parent=97 // pred_region
          %s2772 = smul.addr %s26, 8
          %s2773 = scalar_lea.vmem %s11, %s2772
          // Predicated region
          $region119: #{recurrent_actor_forward.1} parent=117 // pred_check
            _
          $region120: #{recurrent_actor_forward.1} parent=117 // pred_check_branch
            %2775 = sbr.rel (0) target = $region122
          $region121: #{recurrent_actor_forward.1} parent=117 // pred_region
            // Predicated region
            $region123: #{recurrent_actor_forward.1} parent=121 // pred_check
              _
            $region124: #{recurrent_actor_forward.1} parent=121 // pred_check_branch
              %2777 = sbr.rel (0) target = $region126
            $region125: #{recurrent_actor_forward.1} parent=121 // pred_region
              // Predicated region
              $region138: #{recurrent_actor_forward.1} parent=125 // pred_check
                _
              $region139: #{recurrent_actor_forward.1} parent=125 // pred_check_branch
                %2806 = sbr.rel (0) target = $region141
              $region140: #{recurrent_actor_forward.1} parent=125 // pred_region
                loop: start=0, step=1, limit=1
                $region142: #{recurrent_actor_forward.1} parent=140 // loop_pre_header
                  _
                $region143: #{recurrent_actor_forward.1} parent=140 // loop_header
                  %s2808 = sphi 0, %s2812
                  %p2809 = scmp.ge.s32.totalorder %s2808, 1
                  %s2813 = sphi %s2764, %s2764
                  %s2814 = sphi %s2773, %s2773
                $region144: #{recurrent_actor_forward.1} parent=140 // loop_header_branch
                  %2811 = sbr.rel (%p2809) target = $region148
                $region145: #{recurrent_actor_forward.1} parent=140 // loop_body
                  %v2815 = vld [vmem:[%s2813] sm:$0xff]
                  %2816 = vst [vmem:[%s2814] sm:$0xff] %v2815
                  %v2817 = vld [vmem:[%s2813 + $0x8] sm:$0xff]
                  %2818 = vst [vmem:[%s2814 + $0x10] sm:$0xff] %v2817
                  %v2819 = vld [vmem:[%s2813 + $0x10] sm:$0xff]
                  %2820 = vst [vmem:[%s2814 + $0x20] sm:$0xff] %v2819
                  %v2821 = vld [vmem:[%s2813 + $0x18] sm:$0xff]
                  %2822 = vst [vmem:[%s2814 + $0x30] sm:$0xff] %v2821
                  %v2823 = vld [vmem:[%s2813 + $0x20] sm:$0xff]
                  %2824 = vst [vmem:[%s2814 + $0x40] sm:$0xff] %v2823
                  %v2825 = vld [vmem:[%s2813 + $0x28] sm:$0xff]
                  %2826 = vst [vmem:[%s2814 + $0x50] sm:$0xff] %v2825
                  %v2827 = vld [vmem:[%s2813 + $0x30] sm:$0xff]
                  %2828 = vst [vmem:[%s2814 + $0x60] sm:$0xff] %v2827
                  %v2829 = vld [vmem:[%s2813 + $0x38] sm:$0xff]
                  %2830 = vst [vmem:[%s2814 + $0x70] sm:$0xff] %v2829
                $region146: #{recurrent_actor_forward.1} parent=140 // loop_footer
                  %s2812 = sadd.s32 1, %s2808
                $region147: #{recurrent_actor_forward.1} parent=140 // loop_footer_branch
                  %2807 = sbr.rel target = $region143
                $region148: #{recurrent_actor_forward.1} parent=140 // loop_exit
                  _
              $region141: #{recurrent_actor_forward.1} parent=125 // pred_fallthru
                _
              // Predicated region
              $region149: #{recurrent_actor_forward.1} parent=125 // pred_check
                _
              $region150: #{recurrent_actor_forward.1} parent=125 // pred_check_branch
                %2832 = sbr.rel target = $region152
              $region151: #{recurrent_actor_forward.1} parent=125 // pred_region
                _
              $region152: #{recurrent_actor_forward.1} parent=125 // pred_fallthru
                _
            $region126: #{recurrent_actor_forward.1} parent=121 // pred_fallthru
              _
            // Predicated region
            $region127: #{recurrent_actor_forward.1} parent=121 // pred_check
              _
            $region128: #{recurrent_actor_forward.1} parent=121 // pred_check_branch
              %2779 = sbr.rel target = $region130
            $region129: #{recurrent_actor_forward.1} parent=121 // pred_region
              loop: start=0, step=1, limit=1
              $region131: #{recurrent_actor_forward.1} parent=129 // loop_pre_header
                _
              $region132: #{recurrent_actor_forward.1} parent=129 // loop_header
                %s2782 = sphi 0, %s2786
                %p2783 = scmp.ge.s32.totalorder %s2782, 1
                %s2787 = sphi %s2764, %s2764
                %s2788 = sphi %s2773, %s2773
              $region133: #{recurrent_actor_forward.1} parent=129 // loop_header_branch
                %2785 = sbr.rel (%p2783) target = $region137
              $region134: #{recurrent_actor_forward.1} parent=129 // loop_body
                %v2789 = vld [vmem:[%s2787] sm:$0xff]
                %2790 = vst [vmem:[%s2788] sm:$0xff] %v2789
                %v2791 = vld [vmem:[%s2787 + $0x8] sm:$0xff]
                %2792 = vst [vmem:[%s2788 + $0x10] sm:$0xff] %v2791
                %v2793 = vld [vmem:[%s2787 + $0x10] sm:$0xff]
                %2794 = vst [vmem:[%s2788 + $0x20] sm:$0xff] %v2793
                %v2795 = vld [vmem:[%s2787 + $0x18] sm:$0xff]
                %2796 = vst [vmem:[%s2788 + $0x30] sm:$0xff] %v2795
                %v2797 = vld [vmem:[%s2787 + $0x20] sm:$0xff]
                %2798 = vst [vmem:[%s2788 + $0x40] sm:$0xff] %v2797
                %v2799 = vld [vmem:[%s2787 + $0x28] sm:$0xff]
                %2800 = vst [vmem:[%s2788 + $0x50] sm:$0xff] %v2799
                %v2801 = vld [vmem:[%s2787 + $0x30] sm:$0xff]
                %2802 = vst [vmem:[%s2788 + $0x60] sm:$0xff] %v2801
                %v2803 = vld [vmem:[%s2787 + $0x38] sm:$0xff]
                %2804 = vst [vmem:[%s2788 + $0x70] sm:$0xff] %v2803
              $region135: #{recurrent_actor_forward.1} parent=129 // loop_footer
                %s2786 = sadd.s32 1, %s2782
              $region136: #{recurrent_actor_forward.1} parent=129 // loop_footer_branch
                %2781 = sbr.rel target = $region132
              $region137: #{recurrent_actor_forward.1} parent=129 // loop_exit
                _
            $region130: #{recurrent_actor_forward.1} parent=121 // pred_fallthru
              _
          $region122: #{recurrent_actor_forward.1} parent=117 // pred_fallthru
            _
          %2833 = vnop
        $region118: #{recurrent_actor_forward.1} parent=97 // pred_fallthru
          _
        // Predicated region
        $region153: #{recurrent_actor_forward.1} parent=97 // pred_check
          %p2834 = pneg %p311
        $region154: #{recurrent_actor_forward.1} parent=97 // pred_check_branch
          %2836 = sbr.rel (%p2834) target = $region156
        $region155: #{recurrent_actor_forward.1} parent=97 // pred_region
          _
        $region156: #{recurrent_actor_forward.1} parent=97 // pred_fallthru
          _
      $region98: #{recurrent_actor_forward.1} parent=5 // pred_fallthru
        _
      %p2837 = scmp.le.s32.totalorder 2, %s21
      // Predicated region
      $region157: #{recurrent_actor_forward.1} parent=5 // pred_check
        %p2838 = pneg %p2837
      $region158: #{recurrent_actor_forward.1} parent=5 // pred_check_branch
        %2840 = sbr.rel (%p2838) target = $region160
      $region159: #{recurrent_actor_forward.1} parent=5 // pred_region
        %s2841 = ssub.s32 %s21, 2
        // Predicated region
        $region161: #{recurrent_actor_forward.1} parent=159 // pred_check
          %p2842 = pneg %p291
        $region162: #{recurrent_actor_forward.1} parent=159 // pred_check_branch
          %2844 = sbr.rel (%p2842) target = $region164
        $region163: #{recurrent_actor_forward.1} parent=159 // pred_region
          %s2845 = sand.u32 %s276, 1
          %s2846 = sand.u32 %s276, 1
          %s2847 = smul.addr %s2846, 64
          %s2848 = scalar_lea.vmem [#allocation9], %s2847
        $region164: #{recurrent_actor_forward.1} parent=159 // pred_fallthru
          _
        // Predicated region
        $region165: #{recurrent_actor_forward.1} parent=159 // pred_check
          %p2849 = pneg %p317
        $region166: #{recurrent_actor_forward.1} parent=159 // pred_check_branch
          %2851 = sbr.rel (%p2849) target = $region168
        $region167: #{recurrent_actor_forward.1} parent=159 // pred_region
          %p2852 = scmp.lt.s32.totalorder %s27, 1
          %s2853 = scalar_select %p2852, %s27, 1
          %s2854 = smul.addr %s2853, 8
          %s2855 = scalar_lea.vmem %s12, %s2854
        $region168: #{recurrent_actor_forward.1} parent=159 // pred_fallthru
          _
      $region160: #{recurrent_actor_forward.1} parent=5 // pred_fallthru
        _
    $region6: #{recurrent_actor_forward.1} parent=1 // loop_footer
      %s25 = sadd.s32 1, %s21
    $region7: #{recurrent_actor_forward.1} parent=1 // loop_footer_branch
      %20 = sbr.rel target = $region3
    $region8: #{recurrent_actor_forward.1} parent=1 // loop_exit
      _
    %2856 = vsyncpa [#allocation5], 1
    %s2857 = scalar_lea.sflag [#allocation5], 1
    %2858 = vsyncpa %s2857, 1
    %2859 = vsyncpa [#allocation7], 1

</llo_original>
